<compile_context>
chip_gen: v7x
topology: tpu7x:2x2x1
jax: 0.10.0
libtpu: 0.0.40
codegen_flags: <defaults>
</compile_context>

<pallas_src>
import functools
import math

import jax
import jax.numpy as jnp
from jax import lax
from jax.experimental import pallas as pl
from jax.experimental.pallas import tpu as pltpu


def _layer_norm(h, gamma, beta, eps=1e-5):
    mu = jnp.mean(h, axis=-1, keepdims=True)
    var = jnp.mean((h - mu) ** 2, axis=-1, keepdims=True)
    return (h - mu) * lax.rsqrt(var + eps) * gamma + beta


def _gelu_erf(f):
    # PyTorch nn.GELU() default (erf form).
    return 0.5 * f * (1.0 + lax.erf(f * 0.7071067811865476))


def _decoder_block_kernel(
    x_ref,                        # (S, bb, D)  full-sequence input slab
    wqkv_ref, bqkv_ref,           # (D, 3D) bf16, (1, 3D) f32  (Q-scale pre-folded)
    wo_ref, bo_ref,               # (D, D)  bf16, (1, D)  f32
    ln1_g_ref, ln1_b_ref,         # (1, D) f32
    w1_ref, b1_ref,               # (D, Hf) bf16, (1, Hf) f32
    w2_ref, b2_ref,               # (Hf, D) bf16, (1, D)  f32
    ln2_g_ref, ln2_b_ref,         # (1, D) f32
    out_ref,                      # (Tq, bb, D)
    kv_vmem,                      # (bb, S_pad, 2D) bf16 scratch (K | V)
    ctx_vmem,                     # (bb*Tq, D) f32 scratch (attention context)
    ffn_acc,                      # (bb*Tq, D) f32 scratch (FFN accumulator)
    *, n_heads, tq, n_q_tiles, tk, n_kv, ffn_chunk, n_ffn_chunks, approx_recip,
):
    S, bb, D = x_ref.shape
    H = n_heads
    hd = D // H
    f32 = jnp.float32
    bf16 = jnp.bfloat16
    neg_inf = float("-inf")

    # Q-tile offset along the sequence axis (static 0 when there is one tile).
    if n_q_tiles == 1:
        q0 = 0
    else:
        q0 = pl.multiple_of(pl.program_id(1) * tq, tq)

    # ---- seq-major -> batch-major (single slab relayout; rows = b*S + s) ----
    xf = x_ref[...].astype(f32)                                  # (S, bb, D)
    x2 = jnp.transpose(xf, (1, 0, 2)).reshape(bb * S, D)         # (bb*S, D)
    if n_q_tiles == 1:
        xq2 = x2                                                 # Tq == S
    else:
        xq = x_ref[pl.ds(q0, tq)].astype(f32)                    # (Tq, bb, D)
        xq2 = jnp.transpose(xq, (1, 0, 2)).reshape(bb * tq, D)   # (bb*Tq, D)

    # ---- projections: bf16 MXU operands, f32 accumulation -------------------
    # K/V for the full sequence, stored once into bf16 scratch.
    kv = jnp.dot(x2.astype(bf16), wqkv_ref[:, D:],
                 preferred_element_type=f32) + bqkv_ref[:, D:]   # (bb*S, 2D)
    kv_vmem[:, 0:S, :] = kv.reshape(bb, S, 2 * D).astype(bf16)
    # Q only for this Q tile's rows; 1/sqrt(hd) already folded into wqkv/bqkv.
    q2 = (jnp.dot(xq2.astype(bf16), wqkv_ref[:, 0:D],
                  preferred_element_type=f32) + bqkv_ref[:, 0:D]).astype(bf16)

    # ---- flash-style causal attention: per (batch, head), KV tiled ----------
    if n_kv > 1:
        if n_q_tiles == 1:
            kv_hi = n_kv
        else:
            # Causal tile skip: KV tiles entirely above the diagonal never run.
            kv_hi = (q0 + tq + tk - 1) // tk

    for b in range(bb):
        for h in range(H):
            q_bh = q2[b * tq:(b + 1) * tq, h * hd:(h + 1) * hd]      # (Tq, hd)

            def kv_step(j, carry):
                m_i, l_i, acc = carry
                k0 = j * tk
                kt = kv_vmem[b, pl.ds(k0, tk), h * hd:(h + 1) * hd]          # (Tk, hd)
                vt = kv_vmem[b, pl.ds(k0, tk), D + h * hd:D + (h + 1) * hd]  # (Tk, hd)
                s = lax.dot_general(q_bh, kt, (((1,), (1,)), ((), ())),
                                    preferred_element_type=f32)              # (Tq, Tk)
                rows = q0 + lax.broadcasted_iota(jnp.int32, (tq, tk), 0)
                cols = k0 + lax.broadcasted_iota(jnp.int32, (tq, tk), 1)
                s = jnp.where(cols > rows, neg_inf, s)                       # causal
                m_new = jnp.maximum(m_i, jnp.max(s, axis=-1, keepdims=True))
                alpha = jnp.exp(m_i - m_new)
                p = jnp.exp(s - m_new)
                l_new = alpha * l_i + jnp.sum(p, axis=-1, keepdims=True)
                acc_new = alpha * acc + lax.dot_general(
                    p.astype(bf16), vt, (((1,), (0,)), ((), ())),
                    preferred_element_type=f32)                              # (Tq, hd)
                return m_new, l_new, acc_new

            init = (jnp.full((tq, 1), neg_inf, f32),
                    jnp.zeros((tq, 1), f32),
                    jnp.zeros((tq, hd), f32))
            if n_kv == 1:
                m_i, l_i, acc = kv_step(0, init)
            else:
                m_i, l_i, acc = lax.fori_loop(0, kv_hi, kv_step, init)

            # Fold the softmax normalization into the (Tq, hd) context instead
            # of rescaling the (Tq, Tk) probabilities.
            # NOTE: approx reciprocal adds ~1e-3 relative error; safe here since
            # the diagonal is always unmasked (row sums never zero).
            if approx_recip:
                inv_l = pl.reciprocal(l_i, approx=True)
            else:
                inv_l = 1.0 / l_i
            ctx_vmem[b * tq:(b + 1) * tq, h * hd:(h + 1) * hd] = acc * inv_l

    # ---- output projection, residual, LayerNorm 1 ---------------------------
    attn = jnp.dot(ctx_vmem[...].astype(bf16), wo_ref[...],
                   preferred_element_type=f32) + bo_ref[...]
    a1n = _layer_norm(xq2 + attn, ln1_g_ref[...], ln1_b_ref[...])
    a1b = a1n.astype(bf16)

    # ---- FFN: Linear -> GELU(erf) -> Linear, hidden axis in chunks ----------
    if n_ffn_chunks == 1:
        f = jnp.dot(a1b, w1_ref[...], preferred_element_type=f32) + b1_ref[...]
        f = _gelu_erf(f)
        ffn = jnp.dot(f.astype(bf16), w2_ref[...],
                      preferred_element_type=f32) + b2_ref[...]
    else:
        ffn_acc[...] = jnp.zeros_like(ffn_acc)

        def ffn_step(c, carry):
            c0 = c * ffn_chunk
            f = jnp.dot(a1b, w1_ref[:, pl.ds(c0, ffn_chunk)],
                        preferred_element_type=f32) + b1_ref[:, pl.ds(c0, ffn_chunk)]
            f = _gelu_erf(f)
            ffn_acc[...] += jnp.dot(f.astype(bf16), w2_ref[pl.ds(c0, ffn_chunk), :],
                                    preferred_element_type=f32)
            return carry

        lax.fori_loop(0, n_ffn_chunks, ffn_step, 0, unroll=n_ffn_chunks <= 4)
        ffn = ffn_acc[...] + b2_ref[...]

    # ---- residual + LayerNorm 2, batch-major -> seq-major store -------------
    out = _layer_norm(a1n + ffn, ln2_g_ref[...], ln2_b_ref[...])
    out_ref[...] = jnp.transpose(out.reshape(bb, tq, D), (1, 0, 2)).astype(out_ref.dtype)


def _largest_divisor_leq(n, cap):
    cap = max(1, min(n, cap))
    for t in range(cap, 0, -1):
        if n % t == 0:
            return t
    return n


def _vmem_capacity_bytes():
    # Narrow guard around the hardware query only (never hides kernel errors).
    try:
        return int(getattr(pltpu.get_tpu_info(), "vmem_capacity_bytes",
                           64 * 1024 * 1024))
    except Exception:
        return 64 * 1024 * 1024


def decoder_block(x, params, n_heads, *, batch_block=None, approx_recip=True):
    """x: [S, B, D] (seq-first, nn.MultiheadAttention default). Returns [S, B, D].

    `params` must come from prepare_params(): x @ W layout, fused QKV with the
    1/sqrt(head_dim) scale folded into the Q columns, bf16 matmul weights.
    """
    S, B, D = x.shape
    assert D % n_heads == 0
    (wqkv, bqkv, wo, bo, ln1_g, ln1_b, w1, b1, w2, b2, ln2_g, ln2_b) = params
    hidden = w1.shape[1]

    # Batch tile: multiples of 8 keep the (bb, D) minor block dims legal;
    # otherwise take the whole batch in one tile.
    if batch_block is None:
        batch_block = 8 if (B >= 8 and B % 8 == 0) else B
    assert B % batch_block == 0
    n_b_tiles = B // batch_block

    # Q tile: <= 256 rows; if the batch axis alone gives a single grid step,
    # split the sequence so v7x's second TensorCore gets work.  (Odd tiny S at
    # tiny B is left as a single step.)
    tq = _largest_divisor_leq(S, 256)
    if n_b_tiles == 1 and S // tq == 1 and S > 1 and S % 2 == 0:
        tq = S // 2
    n_q_tiles = S // tq

    # KV tile for the in-kernel flash loop.
    tk = min(S, 256)
    n_kv = pl.cdiv(S, tk)
    s_pad = n_kv * tk

    # FFN hidden chunk (single chunk for small models; <= 512 otherwise).
    ffn_chunk = _largest_divisor_leq(hidden, 512)
    n_ffn_chunks = hidden // ffn_chunk

    kernel = functools.partial(
        _decoder_block_kernel,
        n_heads=n_heads, tq=tq, n_q_tiles=n_q_tiles, tk=tk, n_kv=n_kv,
        ffn_chunk=ffn_chunk, n_ffn_chunks=n_ffn_chunks, approx_recip=approx_recip)

    def const_spec(shape):
        return pl.BlockSpec(shape, lambda b, q: (0,) * len(shape))

    in_specs = [
        pl.BlockSpec((S, batch_block, D), lambda b, q: (0, b, 0)),
        const_spec(wqkv.shape), const_spec(bqkv.shape),
        const_spec(wo.shape), const_spec(bo.shape),
        const_spec(ln1_g.shape), const_spec(ln1_b.shape),
        const_spec(w1.shape), const_spec(b1.shape),
        const_spec(w2.shape), const_spec(b2.shape),
        const_spec(ln2_g.shape), const_spec(ln2_b.shape),
    ]
    out_spec = pl.BlockSpec((tq, batch_block, D), lambda b, q: (q, b, 0))

    scratch_shapes = [
        pltpu.VMEM((batch_block, s_pad, 2 * D), jnp.bfloat16),   # K | V
        pltpu.VMEM((batch_block * tq, D), jnp.float32),          # attention ctx
        pltpu.VMEM((batch_block * tq, D), jnp.float32),          # FFN accumulator
    ]

    # Scoped-VMEM budget: weights + I/O blocks double-buffered by the pipeline,
    # plus in-kernel values (including the bf16 copies) and scratch, with 30%
    # slack.  Capped at 85% of physical VMEM (~54 MiB v7x, ~108 MiB v5e/v6e).
    Rf = batch_block * S
    Rq = batch_block * tq
    param_bytes = sum(int(p.size) * p.dtype.itemsize for p in params)
    io_bytes = (S + tq) * batch_block * D * x.dtype.itemsize
    scratch_bytes = batch_block * s_pad * 2 * D * 2 + 2 * Rq * D * 4
    act_bytes = (Rf * D * 6                 # x2 f32 + bf16
                 + Rq * D * 6               # xq2 f32 + bf16
                 + Rf * 2 * D * 4           # kv value before scratch store
                 + Rq * D * 6               # q2 f32 + bf16
                 + Rq * D * 4 * 5           # attn / h1 / a1n / ffn / out (f32)
                 + Rq * D * 2               # a1b
                 + Rq * ffn_chunk * 10)     # FFN chunk activations (f32 + bf16)
    est = 2 * (param_bytes + io_bytes) + scratch_bytes + int(1.3 * act_bytes)
    cap = int(0.85 * _vmem_capacity_bytes())
    vmem_limit = min(cap, max(32 * 1024 * 1024, est))

    return pl.pallas_call(
        kernel,
        out_shape=jax.ShapeDtypeStruct((S, B, D), x.dtype),
        grid=(n_b_tiles, n_q_tiles),
        in_specs=in_specs,
        out_specs=out_spec,
        scratch_shapes=scratch_shapes,
        compiler_params=pltpu.CompilerParams(
            dimension_semantics=("parallel", "parallel"),
            vmem_limit_bytes=vmem_limit),
    )(x, wqkv, bqkv, wo, bo, ln1_g, ln1_b, w1, b1, w2, b2, ln2_g, ln2_b)


def init_params(key, dim_model, *, dtype=jnp.float32):
    """Raw parameters in 'x @ W' layout with fused QKV (no scale fold, f32)."""
    D = dim_model
    ks = jax.random.split(key, 8)
    s = 0.05
    wqkv = s * jax.random.normal(ks[0], (D, 3 * D), dtype)
    bqkv = 0.01 * jax.random.normal(ks[1], (1, 3 * D), dtype)
    wo = s * jax.random.normal(ks[2], (D, D), dtype)
    bo = 0.01 * jax.random.normal(ks[3], (1, D), dtype)
    ln1_g = jnp.ones((1, D), dtype)
    ln1_b = jnp.zeros((1, D), dtype)
    w1 = s * jax.random.normal(ks[4], (D, 4 * D), dtype)
    b1 = 0.01 * jax.random.normal(ks[5], (1, 4 * D), dtype)
    w2 = s * jax.random.normal(ks[6], (4 * D, D), dtype)
    b2 = 0.01 * jax.random.normal(ks[7], (1, D), dtype)
    ln2_g = jnp.ones((1, D), dtype)
    ln2_b = jnp.zeros((1, D), dtype)
    return (wqkv, bqkv, wo, bo, ln1_g, ln1_b, w1, b1, w2, b2, ln2_g, ln2_b)


def prepare_params(params, n_heads, *, weight_dtype=jnp.bfloat16):
    """One-time parameter transform for the kernel: fold 1/sqrt(head_dim) into
    the Q columns of the fused QKV projection (weight AND bias) and cast the
    matmul weights to bf16 (MXU operands); biases / LN params stay f32."""
    (wqkv, bqkv, wo, bo, ln1_g, ln1_b, w1, b1, w2, b2, ln2_g, ln2_b) = params
    D = wqkv.shape[0]
    scale = 1.0 / math.sqrt(D // n_heads)
    col_scale = jnp.concatenate(
        [jnp.full((D,), scale, jnp.float32), jnp.ones((2 * D,), jnp.float32)])
    wqkv = (wqkv.astype(jnp.float32) * col_scale).astype(weight_dtype)
    bqkv = bqkv.astype(jnp.float32) * col_scale
    return (wqkv, bqkv,
            wo.astype(weight_dtype), bo.astype(jnp.float32),
            ln1_g.astype(jnp.float32), ln1_b.astype(jnp.float32),
            w1.astype(weight_dtype), b1.astype(jnp.float32),
            w2.astype(weight_dtype), b2.astype(jnp.float32),
            ln2_g.astype(jnp.float32), ln2_b.astype(jnp.float32))


def _reference(x, raw_params, n_heads):
    """Pure-JAX f32 reference (same math as the PyTorch DecoderBlock forward)."""
    S, B, D = x.shape
    (wqkv, bqkv, wo, bo, ln1_g, ln1_b, w1, b1, w2, b2, ln2_g, ln2_b) = raw_params
    H = n_heads
    hd = D // H

    qkv = jnp.einsum('sbd,de->sbe', x, wqkv) + bqkv[0]
    q, k, v = qkv[..., :D], qkv[..., D:2 * D], qkv[..., 2 * D:]
    q = q.reshape(S, B, H, hd) / math.sqrt(hd)
    k = k.reshape(S, B, H, hd)
    v = v.reshape(S, B, H, hd)
    s = jnp.einsum('qbhd,kbhd->bhqk', q, k)
    mask = jnp.triu(jnp.ones((S, S), bool), k=1)
    s = jnp.where(mask, -jnp.inf, s)
    p = jax.nn.softmax(s, axis=-1)
    ctx = jnp.einsum('bhqk,kbhd->qbhd', p, v).reshape(S, B, D)
    attn = jnp.einsum('sbd,de->sbe', ctx, wo) + bo[0]

    def ln(h, g, b_):
        mu = h.mean(-1, keepdims=True)
        var = ((h - mu) ** 2).mean(-1, keepdims=True)
        return (h - mu) * lax.rsqrt(var + 1e-5) * g[0] + b_[0]

    a1n = ln(x + attn, ln1_g, ln1_b)
    f = jnp.einsum('sbd,dh->sbh', a1n, w1) + b1[0]
    f = 0.5 * f * (1.0 + lax.erf(f * 0.7071067811865476))
    f = jnp.einsum('sbh,hd->sbd', f, w2) + b2[0]
    return ln(a1n + f, ln2_g, ln2_b)


if __name__ == "__main__":
    DIM_MODEL = 32
    N_HEADS = 4
    SEQ = 8
    BATCH = 2

    key = jax.random.PRNGKey(0)
    k_x, k_p = jax.random.split(key)
    x = jax.random.normal(k_x, (SEQ, BATCH, DIM_MODEL), jnp.float32)
    raw_params = init_params(k_p, DIM_MODEL)
    params = prepare_params(raw_params, N_HEADS)

    y = decoder_block(x, params, N_HEADS)
    jax.block_until_ready(y)

    assert y.shape == (SEQ, BATCH, DIM_MODEL)
    assert bool(jnp.all(jnp.isfinite(y)))
    ref = _reference(x, raw_params, N_HEADS)
    err = float(jnp.max(jnp.abs(y - ref)))
    assert err < 1e-1, f"max abs err {err}"  # bf16 MXU operands -> loose tolerance
    print("KERNEL_OK")
</pallas_src>

<mosaic_0001>
module attributes {stable_mosaic.version = 11 : i64} {
  func.func @_decoder_block_kernel(%arg0: i32, %arg1: i32, %arg2: memref<8x2x32xf32, #tpu.memory_space<vmem>>, %arg3: memref<32x96xbf16, #tpu.memory_space<vmem>>, %arg4: memref<1x96xf32, #tpu.memory_space<vmem>>, %arg5: memref<32x32xbf16, #tpu.memory_space<vmem>>, %arg6: memref<1x32xf32, #tpu.memory_space<vmem>>, %arg7: memref<1x32xf32, #tpu.memory_space<vmem>>, %arg8: memref<1x32xf32, #tpu.memory_space<vmem>>, %arg9: memref<32x128xbf16, #tpu.memory_space<vmem>>, %arg10: memref<1x128xf32, #tpu.memory_space<vmem>>, %arg11: memref<128x32xbf16, #tpu.memory_space<vmem>>, %arg12: memref<1x32xf32, #tpu.memory_space<vmem>>, %arg13: memref<1x32xf32, #tpu.memory_space<vmem>>, %arg14: memref<1x32xf32, #tpu.memory_space<vmem>>, %arg15: memref<4x2x32xf32, #tpu.memory_space<vmem>>, %arg16: memref<2x8x64xbf16, #tpu.memory_space<vmem>>, %arg17: memref<8x32xf32, #tpu.memory_space<vmem>>, %arg18: memref<8x32xf32, #tpu.memory_space<vmem>>) attributes {dimension_semantics = [#tpu.dimension_semantics<parallel>, #tpu.dimension_semantics<parallel>], iteration_bounds = array<i64: 1, 2>, scalar_prefetch = 0 : i64, scratch_operands = 3 : i64, tpu.core_type = #tpu.core_type<tc>, window_params = [{transform_indices = @transform_0, window_bounds = array<i64: 8, 2, 32>}, {pipeline_mode = #tpu.pipeline_mode<synchronous>, transform_indices = @transform_1, window_bounds = array<i64: 32, 96>}, {pipeline_mode = #tpu.pipeline_mode<synchronous>, transform_indices = @transform_2, window_bounds = array<i64: 1, 96>}, {pipeline_mode = #tpu.pipeline_mode<synchronous>, transform_indices = @transform_3, window_bounds = array<i64: 32, 32>}, {pipeline_mode = #tpu.pipeline_mode<synchronous>, transform_indices = @transform_4, window_bounds = array<i64: 1, 32>}, {pipeline_mode = #tpu.pipeline_mode<synchronous>, transform_indices = @transform_5, window_bounds = array<i64: 1, 32>}, {pipeline_mode = #tpu.pipeline_mode<synchronous>, transform_indices = @transform_6, window_bounds = array<i64: 1, 32>}, {pipeline_mode = #tpu.pipeline_mode<synchronous>, transform_indices = @transform_7, window_bounds = array<i64: 32, 128>}, {pipeline_mode = #tpu.pipeline_mode<synchronous>, transform_indices = @transform_8, window_bounds = array<i64: 1, 128>}, {pipeline_mode = #tpu.pipeline_mode<synchronous>, transform_indices = @transform_9, window_bounds = array<i64: 128, 32>}, {pipeline_mode = #tpu.pipeline_mode<synchronous>, transform_indices = @transform_10, window_bounds = array<i64: 1, 32>}, {pipeline_mode = #tpu.pipeline_mode<synchronous>, transform_indices = @transform_11, window_bounds = array<i64: 1, 32>}, {pipeline_mode = #tpu.pipeline_mode<synchronous>, transform_indices = @transform_12, window_bounds = array<i64: 1, 32>}, {transform_indices = @transform_13, window_bounds = array<i64: 4, 2, 32>}]} {
    %c4_i32 = arith.constant 4 : i32
    %0 = arith.muli %arg1, %c4_i32 : i32
    %1 = tpu.assume_multiple %0, 4 : i32
    %c0 = arith.constant 0 : index
    %c0_0 = arith.constant 0 : index
    %c0_1 = arith.constant 0 : index
    %2 = vector.load %arg2[%c0, %c0_0, %c0_1] : memref<8x2x32xf32, #tpu.memory_space<vmem>>, vector<8x2x32xf32>
    %3 = tpu.transpose %2, [1, 0, 2] : vector<8x2x32xf32> -> vector<2x8x32xf32>
    %4 = vector.shape_cast %3 : vector<2x8x32xf32> to vector<16x32xf32>
    %5 = arith.index_cast %1 : i32 to index
    %c0_2 = arith.constant 0 : index
    %c0_3 = arith.constant 0 : index
    %6 = vector.load %arg2[%5, %c0_2, %c0_3] : memref<8x2x32xf32, #tpu.memory_space<vmem>>, vector<4x2x32xf32>
    %7 = tpu.transpose %6, [1, 0, 2] : vector<4x2x32xf32> -> vector<2x4x32xf32>
    %8 = vector.shape_cast %7 : vector<2x4x32xf32> to vector<8x32xf32>
    %9 = arith.truncf %4 : vector<16x32xf32> to vector<16x32xbf16>
    %c0_4 = arith.constant 0 : index
    %c32 = arith.constant 32 : index
    %10 = vector.load %arg3[%c0_4, %c32] : memref<32x96xbf16, #tpu.memory_space<vmem>>, vector<32x64xbf16>
    %cst = arith.constant dense<0.000000e+00> : vector<16x64xf32>
    %11 = tpu.matmul %9, %10, %cst {dimension_numbers = #tpu.dot_dimension_numbers<[1], [0], [0], [1], [0, 0, 1, 1], [], []>} : vector<16x32xbf16>, vector<32x64xbf16>, vector<16x64xf32> -> vector<16x64xf32>
    %c0_5 = arith.constant 0 : index
    %c32_6 = arith.constant 32 : index
    %12 = vector.load %arg4[%c0_5, %c32_6] : memref<1x96xf32, #tpu.memory_space<vmem>>, vector<1x64xf32>
    %13 = vector.broadcast %12 : vector<1x64xf32> to vector<16x64xf32>
    %14 = arith.addf %11, %13 : vector<16x64xf32>
    %15 = vector.shape_cast %14 : vector<16x64xf32> to vector<2x8x64xf32>
    %16 = arith.truncf %15 : vector<2x8x64xf32> to vector<2x8x64xbf16>
    %c0_7 = arith.constant 0 : index
    %c0_8 = arith.constant 0 : index
    %c0_9 = arith.constant 0 : index
    %17 = vector.load %arg16[%c0_7, %c0_8, %c0_9] : memref<2x8x64xbf16, #tpu.memory_space<vmem>>, vector<2x8x64xbf16>
    tpu.vector_store %arg16[%c0_7, %c0_8, %c0_9], %16 {strides = array<i32>} : memref<2x8x64xbf16, #tpu.memory_space<vmem>>, vector<2x8x64xbf16>,
    %18 = arith.truncf %8 : vector<8x32xf32> to vector<8x32xbf16>
    %c0_10 = arith.constant 0 : index
    %c0_11 = arith.constant 0 : index
    %19 = vector.load %arg3[%c0_10, %c0_11] : memref<32x96xbf16, #tpu.memory_space<vmem>>, vector<32x32xbf16>
    %cst_12 = arith.constant dense<0.000000e+00> : vector<8x32xf32>
    %20 = tpu.matmul %18, %19, %cst_12 {dimension_numbers = #tpu.dot_dimension_numbers<[1], [0], [0], [1], [0, 0, 1, 1], [], []>} : vector<8x32xbf16>, vector<32x32xbf16>, vector<8x32xf32> -> vector<8x32xf32>
    %c0_13 = arith.constant 0 : index
    %c0_14 = arith.constant 0 : index
    %21 = vector.load %arg4[%c0_13, %c0_14] : memref<1x96xf32, #tpu.memory_space<vmem>>, vector<1x32xf32>
    %22 = vector.broadcast %21 : vector<1x32xf32> to vector<8x32xf32>
    %23 = arith.addf %20, %22 : vector<8x32xf32>
    %24 = arith.truncf %23 : vector<8x32xf32> to vector<8x32xbf16>
    %25 = vector.extract_strided_slice %24 {offsets = [0, 0], sizes = [4, 8], strides = [1, 1]} : vector<8x32xbf16> to vector<4x8xbf16>
    %cst_15 = arith.constant 0xFF800000 : f32
    %26 = vector.broadcast %cst_15 : f32 to vector<4x1xf32>
    %cst_16 = arith.constant 0.000000e+00 : f32
    %27 = vector.broadcast %cst_16 : f32 to vector<4x1xf32>
    %cst_17 = arith.constant 0.000000e+00 : f32
    %28 = vector.broadcast %cst_17 : f32 to vector<4x8xf32>
    %c0_18 = arith.constant 0 : index
    %c0_19 = arith.constant 0 : index
    %c0_20 = arith.constant 0 : index
    %29 = vector.load %arg16[%c0_18, %c0_19, %c0_20] : memref<2x8x64xbf16, #tpu.memory_space<vmem>>, vector<1x8x8xbf16>
    %30 = vector.shape_cast %29 : vector<1x8x8xbf16> to vector<8x8xbf16>
    %c0_21 = arith.constant 0 : index
    %c0_22 = arith.constant 0 : index
    %c32_23 = arith.constant 32 : index
    %31 = vector.load %arg16[%c0_21, %c0_22, %c32_23] : memref<2x8x64xbf16, #tpu.memory_space<vmem>>, vector<1x8x8xbf16>
    %32 = vector.shape_cast %31 : vector<1x8x8xbf16> to vector<8x8xbf16>
    %cst_24 = arith.constant dense<0.000000e+00> : vector<4x8xf32>
    %33 = tpu.matmul %25, %30, %cst_24 {dimension_numbers = #tpu.dot_dimension_numbers<[1], [1], [0], [0], [0, 0, 1, 0], [], []>} : vector<4x8xbf16>, vector<8x8xbf16>, vector<4x8xf32> -> vector<4x8xf32>
    %34 = tpu.iota {dimensions = array<i32: 0>} : vector<4x8xi32>
    %35 = vector.broadcast %1 : i32 to vector<4x8xi32>
    %36 = arith.addi %35, %34 : vector<4x8xi32>
    %37 = tpu.iota {dimensions = array<i32: 1>} : vector<4x8xi32>
    %c0_i32 = arith.constant 0 : i32
    %38 = vector.broadcast %c0_i32 : i32 to vector<4x8xi32>
    %39 = arith.addi %38, %37 : vector<4x8xi32>
    %40 = arith.cmpi sgt, %39, %36 : vector<4x8xi32>
    %cst_25 = arith.constant 0xFF800000 : f32
    %41 = vector.broadcast %cst_25 : f32 to vector<4x8xf32>
    %42 = arith.select %40, %41, %33 : vector<4x8xi1>, vector<4x8xf32>
    %cst_26 = arith.constant dense<0xFF800000> : vector<4xf32>
    %43 = vector.multi_reduction <maximumf>, %42, %cst_26 [1] : vector<4x8xf32> to vector<4xf32>
    %44 = vector.shape_cast %43 : vector<4xf32> to vector<4x1xf32>
    %45 = arith.maximumf %26, %44 : vector<4x1xf32>
    %46 = arith.subf %26, %45 : vector<4x1xf32>
    %47 = math.exp %46 : vector<4x1xf32>
    %48 = vector.broadcast %45 : vector<4x1xf32> to vector<4x8xf32>
    %49 = arith.subf %42, %48 : vector<4x8xf32>
    %50 = math.exp %49 : vector<4x8xf32>
    %51 = arith.mulf %47, %27 : vector<4x1xf32>
    %cst_27 = arith.constant dense<0.000000e+00> : vector<4xf32>
    %52 = vector.multi_reduction <add>, %50, %cst_27 [1] : vector<4x8xf32> to vector<4xf32>
    %53 = vector.shape_cast %52 : vector<4xf32> to vector<4x1xf32>
    %54 = arith.addf %51, %53 : vector<4x1xf32>
    %55 = vector.broadcast %47 : vector<4x1xf32> to vector<4x8xf32>
    %56 = arith.mulf %55, %28 : vector<4x8xf32>
    %57 = arith.truncf %50 : vector<4x8xf32> to vector<4x8xbf16>
    %cst_28 = arith.constant dense<0.000000e+00> : vector<4x8xf32>
    %58 = tpu.matmul %57, %32, %cst_28 {dimension_numbers = #tpu.dot_dimension_numbers<[1], [0], [0], [1], [0, 0, 1, 1], [], []>} : vector<4x8xbf16>, vector<8x8xbf16>, vector<4x8xf32> -> vector<4x8xf32>
    %59 = arith.addf %56, %58 : vector<4x8xf32>
    %60 = tpu.reciprocal %54 {approx = true} : vector<4x1xf32> -> vector<4x1xf32>
    %61 = vector.broadcast %60 : vector<4x1xf32> to vector<4x8xf32>
    %62 = arith.mulf %59, %61 : vector<4x8xf32>
    %c0_29 = arith.constant 0 : index
    %c0_30 = arith.constant 0 : index
    %63 = vector.load %arg17[%c0_29, %c0_30] : memref<8x32xf32, #tpu.memory_space<vmem>>, vector<4x8xf32>
    tpu.vector_store %arg17[%c0_29, %c0_30], %62 {strides = array<i32>} : memref<8x32xf32, #tpu.memory_space<vmem>>, vector<4x8xf32>,
    %64 = vector.extract_strided_slice %24 {offsets = [0, 8], sizes = [4, 8], strides = [1, 1]} : vector<8x32xbf16> to vector<4x8xbf16>
    %cst_31 = arith.constant 0xFF800000 : f32
    %65 = vector.broadcast %cst_31 : f32 to vector<4x1xf32>
    %cst_32 = arith.constant 0.000000e+00 : f32
    %66 = vector.broadcast %cst_32 : f32 to vector<4x1xf32>
    %cst_33 = arith.constant 0.000000e+00 : f32
    %67 = vector.broadcast %cst_33 : f32 to vector<4x8xf32>
    %c0_34 = arith.constant 0 : index
    %c0_35 = arith.constant 0 : index
    %c8 = arith.constant 8 : index
    %68 = vector.load %arg16[%c0_34, %c0_35, %c8] : memref<2x8x64xbf16, #tpu.memory_space<vmem>>, vector<1x8x8xbf16>
    %69 = vector.shape_cast %68 : vector<1x8x8xbf16> to vector<8x8xbf16>
    %c0_36 = arith.constant 0 : index
    %c0_37 = arith.constant 0 : index
    %c40 = arith.constant 40 : index
    %70 = vector.load %arg16[%c0_36, %c0_37, %c40] : memref<2x8x64xbf16, #tpu.memory_space<vmem>>, vector<1x8x8xbf16>
    %71 = vector.shape_cast %70 : vector<1x8x8xbf16> to vector<8x8xbf16>
    %cst_38 = arith.constant dense<0.000000e+00> : vector<4x8xf32>
    %72 = tpu.matmul %64, %69, %cst_38 {dimension_numbers = #tpu.dot_dimension_numbers<[1], [1], [0], [0], [0, 0, 1, 0], [], []>} : vector<4x8xbf16>, vector<8x8xbf16>, vector<4x8xf32> -> vector<4x8xf32>
    %73 = tpu.iota {dimensions = array<i32: 0>} : vector<4x8xi32>
    %74 = vector.broadcast %1 : i32 to vector<4x8xi32>
    %75 = arith.addi %74, %73 : vector<4x8xi32>
    %76 = tpu.iota {dimensions = array<i32: 1>} : vector<4x8xi32>
    %c0_i32_39 = arith.constant 0 : i32
    %77 = vector.broadcast %c0_i32_39 : i32 to vector<4x8xi32>
    %78 = arith.addi %77, %76 : vector<4x8xi32>
    %79 = arith.cmpi sgt, %78, %75 : vector<4x8xi32>
    %cst_40 = arith.constant 0xFF800000 : f32
    %80 = vector.broadcast %cst_40 : f32 to vector<4x8xf32>
    %81 = arith.select %79, %80, %72 : vector<4x8xi1>, vector<4x8xf32>
    %cst_41 = arith.constant dense<0xFF800000> : vector<4xf32>
    %82 = vector.multi_reduction <maximumf>, %81, %cst_41 [1] : vector<4x8xf32> to vector<4xf32>
    %83 = vector.shape_cast %82 : vector<4xf32> to vector<4x1xf32>
    %84 = arith.maximumf %65, %83 : vector<4x1xf32>
    %85 = arith.subf %65, %84 : vector<4x1xf32>
    %86 = math.exp %85 : vector<4x1xf32>
    %87 = vector.broadcast %84 : vector<4x1xf32> to vector<4x8xf32>
    %88 = arith.subf %81, %87 : vector<4x8xf32>
    %89 = math.exp %88 : vector<4x8xf32>
    %90 = arith.mulf %86, %66 : vector<4x1xf32>
    %cst_42 = arith.constant dense<0.000000e+00> : vector<4xf32>
    %91 = vector.multi_reduction <add>, %89, %cst_42 [1] : vector<4x8xf32> to vector<4xf32>
    %92 = vector.shape_cast %91 : vector<4xf32> to vector<4x1xf32>
    %93 = arith.addf %90, %92 : vector<4x1xf32>
    %94 = vector.broadcast %86 : vector<4x1xf32> to vector<4x8xf32>
    %95 = arith.mulf %94, %67 : vector<4x8xf32>
    %96 = arith.truncf %89 : vector<4x8xf32> to vector<4x8xbf16>
    %cst_43 = arith.constant dense<0.000000e+00> : vector<4x8xf32>
    %97 = tpu.matmul %96, %71, %cst_43 {dimension_numbers = #tpu.dot_dimension_numbers<[1], [0], [0], [1], [0, 0, 1, 1], [], []>} : vector<4x8xbf16>, vector<8x8xbf16>, vector<4x8xf32> -> vector<4x8xf32>
    %98 = arith.addf %95, %97 : vector<4x8xf32>
    %99 = tpu.reciprocal %93 {approx = true} : vector<4x1xf32> -> vector<4x1xf32>
    %100 = vector.broadcast %99 : vector<4x1xf32> to vector<4x8xf32>
    %101 = arith.mulf %98, %100 : vector<4x8xf32>
    %c0_44 = arith.constant 0 : index
    %c8_45 = arith.constant 8 : index
    %102 = vector.load %arg17[%c0_44, %c8_45] : memref<8x32xf32, #tpu.memory_space<vmem>>, vector<4x8xf32>
    tpu.vector_store %arg17[%c0_44, %c8_45], %101 {strides = array<i32>} : memref<8x32xf32, #tpu.memory_space<vmem>>, vector<4x8xf32>,
    %103 = vector.extract_strided_slice %24 {offsets = [0, 16], sizes = [4, 8], strides = [1, 1]} : vector<8x32xbf16> to vector<4x8xbf16>
    %cst_46 = arith.constant 0xFF800000 : f32
    %104 = vector.broadcast %cst_46 : f32 to vector<4x1xf32>
    %cst_47 = arith.constant 0.000000e+00 : f32
    %105 = vector.broadcast %cst_47 : f32 to vector<4x1xf32>
    %cst_48 = arith.constant 0.000000e+00 : f32
    %106 = vector.broadcast %cst_48 : f32 to vector<4x8xf32>
    %c0_49 = arith.constant 0 : index
    %c0_50 = arith.constant 0 : index
    %c16 = arith.constant 16 : index
    %107 = vector.load %arg16[%c0_49, %c0_50, %c16] : memref<2x8x64xbf16, #tpu.memory_space<vmem>>, vector<1x8x8xbf16>
    %108 = vector.shape_cast %107 : vector<1x8x8xbf16> to vector<8x8xbf16>
    %c0_51 = arith.constant 0 : index
    %c0_52 = arith.constant 0 : index
    %c48 = arith.constant 48 : index
    %109 = vector.load %arg16[%c0_51, %c0_52, %c48] : memref<2x8x64xbf16, #tpu.memory_space<vmem>>, vector<1x8x8xbf16>
    %110 = vector.shape_cast %109 : vector<1x8x8xbf16> to vector<8x8xbf16>
    %cst_53 = arith.constant dense<0.000000e+00> : vector<4x8xf32>
    %111 = tpu.matmul %103, %108, %cst_53 {dimension_numbers = #tpu.dot_dimension_numbers<[1], [1], [0], [0], [0, 0, 1, 0], [], []>} : vector<4x8xbf16>, vector<8x8xbf16>, vector<4x8xf32> -> vector<4x8xf32>
    %112 = tpu.iota {dimensions = array<i32: 0>} : vector<4x8xi32>
    %113 = vector.broadcast %1 : i32 to vector<4x8xi32>
    %114 = arith.addi %113, %112 : vector<4x8xi32>
    %115 = tpu.iota {dimensions = array<i32: 1>} : vector<4x8xi32>
    %c0_i32_54 = arith.constant 0 : i32
    %116 = vector.broadcast %c0_i32_54 : i32 to vector<4x8xi32>
    %117 = arith.addi %116, %115 : vector<4x8xi32>
    %118 = arith.cmpi sgt, %117, %114 : vector<4x8xi32>
    %cst_55 = arith.constant 0xFF800000 : f32
    %119 = vector.broadcast %cst_55 : f32 to vector<4x8xf32>
    %120 = arith.select %118, %119, %111 : vector<4x8xi1>, vector<4x8xf32>
    %cst_56 = arith.constant dense<0xFF800000> : vector<4xf32>
    %121 = vector.multi_reduction <maximumf>, %120, %cst_56 [1] : vector<4x8xf32> to vector<4xf32>
    %122 = vector.shape_cast %121 : vector<4xf32> to vector<4x1xf32>
    %123 = arith.maximumf %104, %122 : vector<4x1xf32>
    %124 = arith.subf %104, %123 : vector<4x1xf32>
    %125 = math.exp %124 : vector<4x1xf32>
    %126 = vector.broadcast %123 : vector<4x1xf32> to vector<4x8xf32>
    %127 = arith.subf %120, %126 : vector<4x8xf32>
    %128 = math.exp %127 : vector<4x8xf32>
    %129 = arith.mulf %125, %105 : vector<4x1xf32>
    %cst_57 = arith.constant dense<0.000000e+00> : vector<4xf32>
    %130 = vector.multi_reduction <add>, %128, %cst_57 [1] : vector<4x8xf32> to vector<4xf32>
    %131 = vector.shape_cast %130 : vector<4xf32> to vector<4x1xf32>
    %132 = arith.addf %129, %131 : vector<4x1xf32>
    %133 = vector.broadcast %125 : vector<4x1xf32> to vector<4x8xf32>
    %134 = arith.mulf %133, %106 : vector<4x8xf32>
    %135 = arith.truncf %128 : vector<4x8xf32> to vector<4x8xbf16>
    %cst_58 = arith.constant dense<0.000000e+00> : vector<4x8xf32>
    %136 = tpu.matmul %135, %110, %cst_58 {dimension_numbers = #tpu.dot_dimension_numbers<[1], [0], [0], [1], [0, 0, 1, 1], [], []>} : vector<4x8xbf16>, vector<8x8xbf16>, vector<4x8xf32> -> vector<4x8xf32>
    %137 = arith.addf %134, %136 : vector<4x8xf32>
    %138 = tpu.reciprocal %132 {approx = true} : vector<4x1xf32> -> vector<4x1xf32>
    %139 = vector.broadcast %138 : vector<4x1xf32> to vector<4x8xf32>
    %140 = arith.mulf %137, %139 : vector<4x8xf32>
    %c0_59 = arith.constant 0 : index
    %c16_60 = arith.constant 16 : index
    %141 = vector.load %arg17[%c0_59, %c16_60] : memref<8x32xf32, #tpu.memory_space<vmem>>, vector<4x8xf32>
    tpu.vector_store %arg17[%c0_59, %c16_60], %140 {strides = array<i32>} : memref<8x32xf32, #tpu.memory_space<vmem>>, vector<4x8xf32>,
    %142 = vector.extract_strided_slice %24 {offsets = [0, 24], sizes = [4, 8], strides = [1, 1]} : vector<8x32xbf16> to vector<4x8xbf16>
    %cst_61 = arith.constant 0xFF800000 : f32
    %143 = vector.broadcast %cst_61 : f32 to vector<4x1xf32>
    %cst_62 = arith.constant 0.000000e+00 : f32
    %144 = vector.broadcast %cst_62 : f32 to vector<4x1xf32>
    %cst_63 = arith.constant 0.000000e+00 : f32
    %145 = vector.broadcast %cst_63 : f32 to vector<4x8xf32>
    %c0_64 = arith.constant 0 : index
    %c0_65 = arith.constant 0 : index
    %c24 = arith.constant 24 : index
    %146 = vector.load %arg16[%c0_64, %c0_65, %c24] : memref<2x8x64xbf16, #tpu.memory_space<vmem>>, vector<1x8x8xbf16>
    %147 = vector.shape_cast %146 : vector<1x8x8xbf16> to vector<8x8xbf16>
    %c0_66 = arith.constant 0 : index
    %c0_67 = arith.constant 0 : index
    %c56 = arith.constant 56 : index
    %148 = vector.load %arg16[%c0_66, %c0_67, %c56] : memref<2x8x64xbf16, #tpu.memory_space<vmem>>, vector<1x8x8xbf16>
    %149 = vector.shape_cast %148 : vector<1x8x8xbf16> to vector<8x8xbf16>
    %cst_68 = arith.constant dense<0.000000e+00> : vector<4x8xf32>
    %150 = tpu.matmul %142, %147, %cst_68 {dimension_numbers = #tpu.dot_dimension_numbers<[1], [1], [0], [0], [0, 0, 1, 0], [], []>} : vector<4x8xbf16>, vector<8x8xbf16>, vector<4x8xf32> -> vector<4x8xf32>
    %151 = tpu.iota {dimensions = array<i32: 0>} : vector<4x8xi32>
    %152 = vector.broadcast %1 : i32 to vector<4x8xi32>
    %153 = arith.addi %152, %151 : vector<4x8xi32>
    %154 = tpu.iota {dimensions = array<i32: 1>} : vector<4x8xi32>
    %c0_i32_69 = arith.constant 0 : i32
    %155 = vector.broadcast %c0_i32_69 : i32 to vector<4x8xi32>
    %156 = arith.addi %155, %154 : vector<4x8xi32>
    %157 = arith.cmpi sgt, %156, %153 : vector<4x8xi32>
    %cst_70 = arith.constant 0xFF800000 : f32
    %158 = vector.broadcast %cst_70 : f32 to vector<4x8xf32>
    %159 = arith.select %157, %158, %150 : vector<4x8xi1>, vector<4x8xf32>
    %cst_71 = arith.constant dense<0xFF800000> : vector<4xf32>
    %160 = vector.multi_reduction <maximumf>, %159, %cst_71 [1] : vector<4x8xf32> to vector<4xf32>
    %161 = vector.shape_cast %160 : vector<4xf32> to vector<4x1xf32>
    %162 = arith.maximumf %143, %161 : vector<4x1xf32>
    %163 = arith.subf %143, %162 : vector<4x1xf32>
    %164 = math.exp %163 : vector<4x1xf32>
    %165 = vector.broadcast %162 : vector<4x1xf32> to vector<4x8xf32>
    %166 = arith.subf %159, %165 : vector<4x8xf32>
    %167 = math.exp %166 : vector<4x8xf32>
    %168 = arith.mulf %164, %144 : vector<4x1xf32>
    %cst_72 = arith.constant dense<0.000000e+00> : vector<4xf32>
    %169 = vector.multi_reduction <add>, %167, %cst_72 [1] : vector<4x8xf32> to vector<4xf32>
    %170 = vector.shape_cast %169 : vector<4xf32> to vector<4x1xf32>
    %171 = arith.addf %168, %170 : vector<4x1xf32>
    %172 = vector.broadcast %164 : vector<4x1xf32> to vector<4x8xf32>
    %173 = arith.mulf %172, %145 : vector<4x8xf32>
    %174 = arith.truncf %167 : vector<4x8xf32> to vector<4x8xbf16>
    %cst_73 = arith.constant dense<0.000000e+00> : vector<4x8xf32>
    %175 = tpu.matmul %174, %149, %cst_73 {dimension_numbers = #tpu.dot_dimension_numbers<[1], [0], [0], [1], [0, 0, 1, 1], [], []>} : vector<4x8xbf16>, vector<8x8xbf16>, vector<4x8xf32> -> vector<4x8xf32>
    %176 = arith.addf %173, %175 : vector<4x8xf32>
    %177 = tpu.reciprocal %171 {approx = true} : vector<4x1xf32> -> vector<4x1xf32>
    %178 = vector.broadcast %177 : vector<4x1xf32> to vector<4x8xf32>
    %179 = arith.mulf %176, %178 : vector<4x8xf32>
    %c0_74 = arith.constant 0 : index
    %c24_75 = arith.constant 24 : index
    %180 = vector.load %arg17[%c0_74, %c24_75] : memref<8x32xf32, #tpu.memory_space<vmem>>, vector<4x8xf32>
    tpu.vector_store %arg17[%c0_74, %c24_75], %179 {strides = array<i32>} : memref<8x32xf32, #tpu.memory_space<vmem>>, vector<4x8xf32>,
    %181 = vector.extract_strided_slice %24 {offsets = [4, 0], sizes = [4, 8], strides = [1, 1]} : vector<8x32xbf16> to vector<4x8xbf16>
    %cst_76 = arith.constant 0xFF800000 : f32
    %182 = vector.broadcast %cst_76 : f32 to vector<4x1xf32>
    %cst_77 = arith.constant 0.000000e+00 : f32
    %183 = vector.broadcast %cst_77 : f32 to vector<4x1xf32>
    %cst_78 = arith.constant 0.000000e+00 : f32
    %184 = vector.broadcast %cst_78 : f32 to vector<4x8xf32>
    %c1 = arith.constant 1 : index
    %c0_79 = arith.constant 0 : index
    %c0_80 = arith.constant 0 : index
    %185 = vector.load %arg16[%c1, %c0_79, %c0_80] : memref<2x8x64xbf16, #tpu.memory_space<vmem>>, vector<1x8x8xbf16>
    %186 = vector.shape_cast %185 : vector<1x8x8xbf16> to vector<8x8xbf16>
    %c1_81 = arith.constant 1 : index
    %c0_82 = arith.constant 0 : index
    %c32_83 = arith.constant 32 : index
    %187 = vector.load %arg16[%c1_81, %c0_82, %c32_83] : memref<2x8x64xbf16, #tpu.memory_space<vmem>>, vector<1x8x8xbf16>
    %188 = vector.shape_cast %187 : vector<1x8x8xbf16> to vector<8x8xbf16>
    %cst_84 = arith.constant dense<0.000000e+00> : vector<4x8xf32>
    %189 = tpu.matmul %181, %186, %cst_84 {dimension_numbers = #tpu.dot_dimension_numbers<[1], [1], [0], [0], [0, 0, 1, 0], [], []>} : vector<4x8xbf16>, vector<8x8xbf16>, vector<4x8xf32> -> vector<4x8xf32>
    %190 = tpu.iota {dimensions = array<i32: 0>} : vector<4x8xi32>
    %191 = vector.broadcast %1 : i32 to vector<4x8xi32>
    %192 = arith.addi %191, %190 : vector<4x8xi32>
    %193 = tpu.iota {dimensions = array<i32: 1>} : vector<4x8xi32>
    %c0_i32_85 = arith.constant 0 : i32
    %194 = vector.broadcast %c0_i32_85 : i32 to vector<4x8xi32>
    %195 = arith.addi %194, %193 : vector<4x8xi32>
    %196 = arith.cmpi sgt, %195, %192 : vector<4x8xi32>
    %cst_86 = arith.constant 0xFF800000 : f32
    %197 = vector.broadcast %cst_86 : f32 to vector<4x8xf32>
    %198 = arith.select %196, %197, %189 : vector<4x8xi1>, vector<4x8xf32>
    %cst_87 = arith.constant dense<0xFF800000> : vector<4xf32>
    %199 = vector.multi_reduction <maximumf>, %198, %cst_87 [1] : vector<4x8xf32> to vector<4xf32>
    %200 = vector.shape_cast %199 : vector<4xf32> to vector<4x1xf32>
    %201 = arith.maximumf %182, %200 : vector<4x1xf32>
    %202 = arith.subf %182, %201 : vector<4x1xf32>
    %203 = math.exp %202 : vector<4x1xf32>
    %204 = vector.broadcast %201 : vector<4x1xf32> to vector<4x8xf32>
    %205 = arith.subf %198, %204 : vector<4x8xf32>
    %206 = math.exp %205 : vector<4x8xf32>
    %207 = arith.mulf %203, %183 : vector<4x1xf32>
    %cst_88 = arith.constant dense<0.000000e+00> : vector<4xf32>
    %208 = vector.multi_reduction <add>, %206, %cst_88 [1] : vector<4x8xf32> to vector<4xf32>
    %209 = vector.shape_cast %208 : vector<4xf32> to vector<4x1xf32>
    %210 = arith.addf %207, %209 : vector<4x1xf32>
    %211 = vector.broadcast %203 : vector<4x1xf32> to vector<4x8xf32>
    %212 = arith.mulf %211, %184 : vector<4x8xf32>
    %213 = arith.truncf %206 : vector<4x8xf32> to vector<4x8xbf16>
    %cst_89 = arith.constant dense<0.000000e+00> : vector<4x8xf32>
    %214 = tpu.matmul %213, %188, %cst_89 {dimension_numbers = #tpu.dot_dimension_numbers<[1], [0], [0], [1], [0, 0, 1, 1], [], []>} : vector<4x8xbf16>, vector<8x8xbf16>, vector<4x8xf32> -> vector<4x8xf32>
    %215 = arith.addf %212, %214 : vector<4x8xf32>
    %216 = tpu.reciprocal %210 {approx = true} : vector<4x1xf32> -> vector<4x1xf32>
    %217 = vector.broadcast %216 : vector<4x1xf32> to vector<4x8xf32>
    %218 = arith.mulf %215, %217 : vector<4x8xf32>
    %c4 = arith.constant 4 : index
    %c0_90 = arith.constant 0 : index
    %219 = vector.load %arg17[%c4, %c0_90] : memref<8x32xf32, #tpu.memory_space<vmem>>, vector<4x8xf32>
    tpu.vector_store %arg17[%c4, %c0_90], %218 {strides = array<i32>} : memref<8x32xf32, #tpu.memory_space<vmem>>, vector<4x8xf32>,
    %220 = vector.extract_strided_slice %24 {offsets = [4, 8], sizes = [4, 8], strides = [1, 1]} : vector<8x32xbf16> to vector<4x8xbf16>
    %cst_91 = arith.constant 0xFF800000 : f32
    %221 = vector.broadcast %cst_91 : f32 to vector<4x1xf32>
    %cst_92 = arith.constant 0.000000e+00 : f32
    %222 = vector.broadcast %cst_92 : f32 to vector<4x1xf32>
    %cst_93 = arith.constant 0.000000e+00 : f32
    %223 = vector.broadcast %cst_93 : f32 to vector<4x8xf32>
    %c1_94 = arith.constant 1 : index
    %c0_95 = arith.constant 0 : index
    %c8_96 = arith.constant 8 : index
    %224 = vector.load %arg16[%c1_94, %c0_95, %c8_96] : memref<2x8x64xbf16, #tpu.memory_space<vmem>>, vector<1x8x8xbf16>
    %225 = vector.shape_cast %224 : vector<1x8x8xbf16> to vector<8x8xbf16>
    %c1_97 = arith.constant 1 : index
    %c0_98 = arith.constant 0 : index
    %c40_99 = arith.constant 40 : index
    %226 = vector.load %arg16[%c1_97, %c0_98, %c40_99] : memref<2x8x64xbf16, #tpu.memory_space<vmem>>, vector<1x8x8xbf16>
    %227 = vector.shape_cast %226 : vector<1x8x8xbf16> to vector<8x8xbf16>
    %cst_100 = arith.constant dense<0.000000e+00> : vector<4x8xf32>
    %228 = tpu.matmul %220, %225, %cst_100 {dimension_numbers = #tpu.dot_dimension_numbers<[1], [1], [0], [0], [0, 0, 1, 0], [], []>} : vector<4x8xbf16>, vector<8x8xbf16>, vector<4x8xf32> -> vector<4x8xf32>
    %229 = tpu.iota {dimensions = array<i32: 0>} : vector<4x8xi32>
    %230 = vector.broadcast %1 : i32 to vector<4x8xi32>
    %231 = arith.addi %230, %229 : vector<4x8xi32>
    %232 = tpu.iota {dimensions = array<i32: 1>} : vector<4x8xi32>
    %c0_i32_101 = arith.constant 0 : i32
    %233 = vector.broadcast %c0_i32_101 : i32 to vector<4x8xi32>
    %234 = arith.addi %233, %232 : vector<4x8xi32>
    %235 = arith.cmpi sgt, %234, %231 : vector<4x8xi32>
    %cst_102 = arith.constant 0xFF800000 : f32
    %236 = vector.broadcast %cst_102 : f32 to vector<4x8xf32>
    %237 = arith.select %235, %236, %228 : vector<4x8xi1>, vector<4x8xf32>
    %cst_103 = arith.constant dense<0xFF800000> : vector<4xf32>
    %238 = vector.multi_reduction <maximumf>, %237, %cst_103 [1] : vector<4x8xf32> to vector<4xf32>
    %239 = vector.shape_cast %238 : vector<4xf32> to vector<4x1xf32>
    %240 = arith.maximumf %221, %239 : vector<4x1xf32>
    %241 = arith.subf %221, %240 : vector<4x1xf32>
    %242 = math.exp %241 : vector<4x1xf32>
    %243 = vector.broadcast %240 : vector<4x1xf32> to vector<4x8xf32>
    %244 = arith.subf %237, %243 : vector<4x8xf32>
    %245 = math.exp %244 : vector<4x8xf32>
    %246 = arith.mulf %242, %222 : vector<4x1xf32>
    %cst_104 = arith.constant dense<0.000000e+00> : vector<4xf32>
    %247 = vector.multi_reduction <add>, %245, %cst_104 [1] : vector<4x8xf32> to vector<4xf32>
    %248 = vector.shape_cast %247 : vector<4xf32> to vector<4x1xf32>
    %249 = arith.addf %246, %248 : vector<4x1xf32>
    %250 = vector.broadcast %242 : vector<4x1xf32> to vector<4x8xf32>
    %251 = arith.mulf %250, %223 : vector<4x8xf32>
    %252 = arith.truncf %245 : vector<4x8xf32> to vector<4x8xbf16>
    %cst_105 = arith.constant dense<0.000000e+00> : vector<4x8xf32>
    %253 = tpu.matmul %252, %227, %cst_105 {dimension_numbers = #tpu.dot_dimension_numbers<[1], [0], [0], [1], [0, 0, 1, 1], [], []>} : vector<4x8xbf16>, vector<8x8xbf16>, vector<4x8xf32> -> vector<4x8xf32>
    %254 = arith.addf %251, %253 : vector<4x8xf32>
    %255 = tpu.reciprocal %249 {approx = true} : vector<4x1xf32> -> vector<4x1xf32>
    %256 = vector.broadcast %255 : vector<4x1xf32> to vector<4x8xf32>
    %257 = arith.mulf %254, %256 : vector<4x8xf32>
    %c4_106 = arith.constant 4 : index
    %c8_107 = arith.constant 8 : index
    %258 = vector.load %arg17[%c4_106, %c8_107] : memref<8x32xf32, #tpu.memory_space<vmem>>, vector<4x8xf32>
    tpu.vector_store %arg17[%c4_106, %c8_107], %257 {strides = array<i32>} : memref<8x32xf32, #tpu.memory_space<vmem>>, vector<4x8xf32>,
    %259 = vector.extract_strided_slice %24 {offsets = [4, 16], sizes = [4, 8], strides = [1, 1]} : vector<8x32xbf16> to vector<4x8xbf16>
    %cst_108 = arith.constant 0xFF800000 : f32
    %260 = vector.broadcast %cst_108 : f32 to vector<4x1xf32>
    %cst_109 = arith.constant 0.000000e+00 : f32
    %261 = vector.broadcast %cst_109 : f32 to vector<4x1xf32>
    %cst_110 = arith.constant 0.000000e+00 : f32
    %262 = vector.broadcast %cst_110 : f32 to vector<4x8xf32>
    %c1_111 = arith.constant 1 : index
    %c0_112 = arith.constant 0 : index
    %c16_113 = arith.constant 16 : index
    %263 = vector.load %arg16[%c1_111, %c0_112, %c16_113] : memref<2x8x64xbf16, #tpu.memory_space<vmem>>, vector<1x8x8xbf16>
    %264 = vector.shape_cast %263 : vector<1x8x8xbf16> to vector<8x8xbf16>
    %c1_114 = arith.constant 1 : index
    %c0_115 = arith.constant 0 : index
    %c48_116 = arith.constant 48 : index
    %265 = vector.load %arg16[%c1_114, %c0_115, %c48_116] : memref<2x8x64xbf16, #tpu.memory_space<vmem>>, vector<1x8x8xbf16>
    %266 = vector.shape_cast %265 : vector<1x8x8xbf16> to vector<8x8xbf16>
    %cst_117 = arith.constant dense<0.000000e+00> : vector<4x8xf32>
    %267 = tpu.matmul %259, %264, %cst_117 {dimension_numbers = #tpu.dot_dimension_numbers<[1], [1], [0], [0], [0, 0, 1, 0], [], []>} : vector<4x8xbf16>, vector<8x8xbf16>, vector<4x8xf32> -> vector<4x8xf32>
    %268 = tpu.iota {dimensions = array<i32: 0>} : vector<4x8xi32>
    %269 = vector.broadcast %1 : i32 to vector<4x8xi32>
    %270 = arith.addi %269, %268 : vector<4x8xi32>
    %271 = tpu.iota {dimensions = array<i32: 1>} : vector<4x8xi32>
    %c0_i32_118 = arith.constant 0 : i32
    %272 = vector.broadcast %c0_i32_118 : i32 to vector<4x8xi32>
    %273 = arith.addi %272, %271 : vector<4x8xi32>
    %274 = arith.cmpi sgt, %273, %270 : vector<4x8xi32>
    %cst_119 = arith.constant 0xFF800000 : f32
    %275 = vector.broadcast %cst_119 : f32 to vector<4x8xf32>
    %276 = arith.select %274, %275, %267 : vector<4x8xi1>, vector<4x8xf32>
    %cst_120 = arith.constant dense<0xFF800000> : vector<4xf32>
    %277 = vector.multi_reduction <maximumf>, %276, %cst_120 [1] : vector<4x8xf32> to vector<4xf32>
    %278 = vector.shape_cast %277 : vector<4xf32> to vector<4x1xf32>
    %279 = arith.maximumf %260, %278 : vector<4x1xf32>
    %280 = arith.subf %260, %279 : vector<4x1xf32>
    %281 = math.exp %280 : vector<4x1xf32>
    %282 = vector.broadcast %279 : vector<4x1xf32> to vector<4x8xf32>
    %283 = arith.subf %276, %282 : vector<4x8xf32>
    %284 = math.exp %283 : vector<4x8xf32>
    %285 = arith.mulf %281, %261 : vector<4x1xf32>
    %cst_121 = arith.constant dense<0.000000e+00> : vector<4xf32>
    %286 = vector.multi_reduction <add>, %284, %cst_121 [1] : vector<4x8xf32> to vector<4xf32>
    %287 = vector.shape_cast %286 : vector<4xf32> to vector<4x1xf32>
    %288 = arith.addf %285, %287 : vector<4x1xf32>
    %289 = vector.broadcast %281 : vector<4x1xf32> to vector<4x8xf32>
    %290 = arith.mulf %289, %262 : vector<4x8xf32>
    %291 = arith.truncf %284 : vector<4x8xf32> to vector<4x8xbf16>
    %cst_122 = arith.constant dense<0.000000e+00> : vector<4x8xf32>
    %292 = tpu.matmul %291, %266, %cst_122 {dimension_numbers = #tpu.dot_dimension_numbers<[1], [0], [0], [1], [0, 0, 1, 1], [], []>} : vector<4x8xbf16>, vector<8x8xbf16>, vector<4x8xf32> -> vector<4x8xf32>
    %293 = arith.addf %290, %292 : vector<4x8xf32>
    %294 = tpu.reciprocal %288 {approx = true} : vector<4x1xf32> -> vector<4x1xf32>
    %295 = vector.broadcast %294 : vector<4x1xf32> to vector<4x8xf32>
    %296 = arith.mulf %293, %295 : vector<4x8xf32>
    %c4_123 = arith.constant 4 : index
    %c16_124 = arith.constant 16 : index
    %297 = vector.load %arg17[%c4_123, %c16_124] : memref<8x32xf32, #tpu.memory_space<vmem>>, vector<4x8xf32>
    tpu.vector_store %arg17[%c4_123, %c16_124], %296 {strides = array<i32>} : memref<8x32xf32, #tpu.memory_space<vmem>>, vector<4x8xf32>,
    %298 = vector.extract_strided_slice %24 {offsets = [4, 24], sizes = [4, 8], strides = [1, 1]} : vector<8x32xbf16> to vector<4x8xbf16>
    %cst_125 = arith.constant 0xFF800000 : f32
    %299 = vector.broadcast %cst_125 : f32 to vector<4x1xf32>
    %cst_126 = arith.constant 0.000000e+00 : f32
    %300 = vector.broadcast %cst_126 : f32 to vector<4x1xf32>
    %cst_127 = arith.constant 0.000000e+00 : f32
    %301 = vector.broadcast %cst_127 : f32 to vector<4x8xf32>
    %c1_128 = arith.constant 1 : index
    %c0_129 = arith.constant 0 : index
    %c24_130 = arith.constant 24 : index
    %302 = vector.load %arg16[%c1_128, %c0_129, %c24_130] : memref<2x8x64xbf16, #tpu.memory_space<vmem>>, vector<1x8x8xbf16>
    %303 = vector.shape_cast %302 : vector<1x8x8xbf16> to vector<8x8xbf16>
    %c1_131 = arith.constant 1 : index
    %c0_132 = arith.constant 0 : index
    %c56_133 = arith.constant 56 : index
    %304 = vector.load %arg16[%c1_131, %c0_132, %c56_133] : memref<2x8x64xbf16, #tpu.memory_space<vmem>>, vector<1x8x8xbf16>
    %305 = vector.shape_cast %304 : vector<1x8x8xbf16> to vector<8x8xbf16>
    %cst_134 = arith.constant dense<0.000000e+00> : vector<4x8xf32>
    %306 = tpu.matmul %298, %303, %cst_134 {dimension_numbers = #tpu.dot_dimension_numbers<[1], [1], [0], [0], [0, 0, 1, 0], [], []>} : vector<4x8xbf16>, vector<8x8xbf16>, vector<4x8xf32> -> vector<4x8xf32>
    %307 = tpu.iota {dimensions = array<i32: 0>} : vector<4x8xi32>
    %308 = vector.broadcast %1 : i32 to vector<4x8xi32>
    %309 = arith.addi %308, %307 : vector<4x8xi32>
    %310 = tpu.iota {dimensions = array<i32: 1>} : vector<4x8xi32>
    %c0_i32_135 = arith.constant 0 : i32
    %311 = vector.broadcast %c0_i32_135 : i32 to vector<4x8xi32>
    %312 = arith.addi %311, %310 : vector<4x8xi32>
    %313 = arith.cmpi sgt, %312, %309 : vector<4x8xi32>
    %cst_136 = arith.constant 0xFF800000 : f32
    %314 = vector.broadcast %cst_136 : f32 to vector<4x8xf32>
    %315 = arith.select %313, %314, %306 : vector<4x8xi1>, vector<4x8xf32>
    %cst_137 = arith.constant dense<0xFF800000> : vector<4xf32>
    %316 = vector.multi_reduction <maximumf>, %315, %cst_137 [1] : vector<4x8xf32> to vector<4xf32>
    %317 = vector.shape_cast %316 : vector<4xf32> to vector<4x1xf32>
    %318 = arith.maximumf %299, %317 : vector<4x1xf32>
    %319 = arith.subf %299, %318 : vector<4x1xf32>
    %320 = math.exp %319 : vector<4x1xf32>
    %321 = vector.broadcast %318 : vector<4x1xf32> to vector<4x8xf32>
    %322 = arith.subf %315, %321 : vector<4x8xf32>
    %323 = math.exp %322 : vector<4x8xf32>
    %324 = arith.mulf %320, %300 : vector<4x1xf32>
    %cst_138 = arith.constant dense<0.000000e+00> : vector<4xf32>
    %325 = vector.multi_reduction <add>, %323, %cst_138 [1] : vector<4x8xf32> to vector<4xf32>
    %326 = vector.shape_cast %325 : vector<4xf32> to vector<4x1xf32>
    %327 = arith.addf %324, %326 : vector<4x1xf32>
    %328 = vector.broadcast %320 : vector<4x1xf32> to vector<4x8xf32>
    %329 = arith.mulf %328, %301 : vector<4x8xf32>
    %330 = arith.truncf %323 : vector<4x8xf32> to vector<4x8xbf16>
    %cst_139 = arith.constant dense<0.000000e+00> : vector<4x8xf32>
    %331 = tpu.matmul %330, %305, %cst_139 {dimension_numbers = #tpu.dot_dimension_numbers<[1], [0], [0], [1], [0, 0, 1, 1], [], []>} : vector<4x8xbf16>, vector<8x8xbf16>, vector<4x8xf32> -> vector<4x8xf32>
    %332 = arith.addf %329, %331 : vector<4x8xf32>
    %333 = tpu.reciprocal %327 {approx = true} : vector<4x1xf32> -> vector<4x1xf32>
    %334 = vector.broadcast %333 : vector<4x1xf32> to vector<4x8xf32>
    %335 = arith.mulf %332, %334 : vector<4x8xf32>
    %c4_140 = arith.constant 4 : index
    %c24_141 = arith.constant 24 : index
    %336 = vector.load %arg17[%c4_140, %c24_141] : memref<8x32xf32, #tpu.memory_space<vmem>>, vector<4x8xf32>
    tpu.vector_store %arg17[%c4_140, %c24_141], %335 {strides = array<i32>} : memref<8x32xf32, #tpu.memory_space<vmem>>, vector<4x8xf32>,
    %c0_142 = arith.constant 0 : index
    %c0_143 = arith.constant 0 : index
    %337 = vector.load %arg17[%c0_142, %c0_143] : memref<8x32xf32, #tpu.memory_space<vmem>>, vector<8x32xf32>
    %338 = arith.truncf %337 : vector<8x32xf32> to vector<8x32xbf16>
    %c0_144 = arith.constant 0 : index
    %c0_145 = arith.constant 0 : index
    %339 = vector.load %arg5[%c0_144, %c0_145] : memref<32x32xbf16, #tpu.memory_space<vmem>>, vector<32x32xbf16>
    %cst_146 = arith.constant dense<0.000000e+00> : vector<8x32xf32>
    %340 = tpu.matmul %338, %339, %cst_146 {dimension_numbers = #tpu.dot_dimension_numbers<[1], [0], [0], [1], [0, 0, 1, 1], [], []>} : vector<8x32xbf16>, vector<32x32xbf16>, vector<8x32xf32> -> vector<8x32xf32>
    %c0_147 = arith.constant 0 : index
    %c0_148 = arith.constant 0 : index
    %341 = vector.load %arg6[%c0_147, %c0_148] : memref<1x32xf32, #tpu.memory_space<vmem>>, vector<1x32xf32>
    %342 = vector.broadcast %341 : vector<1x32xf32> to vector<8x32xf32>
    %343 = arith.addf %340, %342 : vector<8x32xf32>
    %344 = arith.addf %8, %343 : vector<8x32xf32>
    %c0_149 = arith.constant 0 : index
    %c0_150 = arith.constant 0 : index
    %345 = vector.load %arg7[%c0_149, %c0_150] : memref<1x32xf32, #tpu.memory_space<vmem>>, vector<1x32xf32>
    %c0_151 = arith.constant 0 : index
    %c0_152 = arith.constant 0 : index
    %346 = vector.load %arg8[%c0_151, %c0_152] : memref<1x32xf32, #tpu.memory_space<vmem>>, vector<1x32xf32>
    %cst_153 = arith.constant dense<0.000000e+00> : vector<8xf32>
    %347 = vector.multi_reduction <add>, %344, %cst_153 [1] : vector<8x32xf32> to vector<8xf32>
    %348 = vector.shape_cast %347 : vector<8xf32> to vector<8x1xf32>
    %cst_154 = arith.constant 3.200000e+01 : f32
    %349 = vector.broadcast %cst_154 : f32 to vector<8x1xf32>
    %350 = arith.divf %348, %349 : vector<8x1xf32>
    %351 = vector.broadcast %350 : vector<8x1xf32> to vector<8x32xf32>
    %352 = arith.subf %344, %351 : vector<8x32xf32>
    %353 = arith.mulf %352, %352 : vector<8x32xf32>
    %cst_155 = arith.constant dense<0.000000e+00> : vector<8xf32>
    %354 = vector.multi_reduction <add>, %353, %cst_155 [1] : vector<8x32xf32> to vector<8xf32>
    %355 = vector.shape_cast %354 : vector<8xf32> to vector<8x1xf32>
    %cst_156 = arith.constant 3.200000e+01 : f32
    %356 = vector.broadcast %cst_156 : f32 to vector<8x1xf32>
    %357 = arith.divf %355, %356 : vector<8x1xf32>
    %358 = vector.broadcast %350 : vector<8x1xf32> to vector<8x32xf32>
    %359 = arith.subf %344, %358 : vector<8x32xf32>
    %cst_157 = arith.constant 9.99999974E-6 : f32
    %360 = vector.broadcast %cst_157 : f32 to vector<8x1xf32>
    %361 = arith.addf %357, %360 : vector<8x1xf32>
    %362 = math.rsqrt %361 : vector<8x1xf32>
    %363 = vector.broadcast %362 : vector<8x1xf32> to vector<8x32xf32>
    %364 = arith.mulf %359, %363 : vector<8x32xf32>
    %365 = vector.broadcast %345 : vector<1x32xf32> to vector<8x32xf32>
    %366 = arith.mulf %364, %365 : vector<8x32xf32>
    %367 = vector.broadcast %346 : vector<1x32xf32> to vector<8x32xf32>
    %368 = arith.addf %366, %367 : vector<8x32xf32>
    %369 = arith.truncf %368 : vector<8x32xf32> to vector<8x32xbf16>
    %c0_158 = arith.constant 0 : index
    %c0_159 = arith.constant 0 : index
    %370 = vector.load %arg9[%c0_158, %c0_159] : memref<32x128xbf16, #tpu.memory_space<vmem>>, vector<32x128xbf16>
    %cst_160 = arith.constant dense<0.000000e+00> : vector<8x128xf32>
    %371 = tpu.matmul %369, %370, %cst_160 {dimension_numbers = #tpu.dot_dimension_numbers<[1], [0], [0], [1], [0, 0, 1, 1], [], []>} : vector<8x32xbf16>, vector<32x128xbf16>, vector<8x128xf32> -> vector<8x128xf32>
    %c0_161 = arith.constant 0 : index
    %c0_162 = arith.constant 0 : index
    %372 = vector.load %arg10[%c0_161, %c0_162] : memref<1x128xf32, #tpu.memory_space<vmem>>, vector<1x128xf32>
    %373 = vector.broadcast %372 : vector<1x128xf32> to vector<8x128xf32>
    %374 = arith.addf %371, %373 : vector<8x128xf32>
    %cst_163 = arith.constant 5.000000e-01 : f32
    %375 = vector.broadcast %cst_163 : f32 to vector<8x128xf32>
    %376 = arith.mulf %375, %374 : vector<8x128xf32>
    %cst_164 = arith.constant 0.707106769 : f32
    %377 = vector.broadcast %cst_164 : f32 to vector<8x128xf32>
    %378 = arith.mulf %374, %377 : vector<8x128xf32>
    %379 = math.erf %378 : vector<8x128xf32>
    %cst_165 = arith.constant 1.000000e+00 : f32
    %380 = vector.broadcast %cst_165 : f32 to vector<8x128xf32>
    %381 = arith.addf %380, %379 : vector<8x128xf32>
    %382 = arith.mulf %376, %381 : vector<8x128xf32>
    %383 = arith.truncf %382 : vector<8x128xf32> to vector<8x128xbf16>
    %c0_166 = arith.constant 0 : index
    %c0_167 = arith.constant 0 : index
    %384 = vector.load %arg11[%c0_166, %c0_167] : memref<128x32xbf16, #tpu.memory_space<vmem>>, vector<128x32xbf16>
    %cst_168 = arith.constant dense<0.000000e+00> : vector<8x32xf32>
    %385 = tpu.matmul %383, %384, %cst_168 {dimension_numbers = #tpu.dot_dimension_numbers<[1], [0], [0], [1], [0, 0, 1, 1], [], []>} : vector<8x128xbf16>, vector<128x32xbf16>, vector<8x32xf32> -> vector<8x32xf32>
    %c0_169 = arith.constant 0 : index
    %c0_170 = arith.constant 0 : index
    %386 = vector.load %arg12[%c0_169, %c0_170] : memref<1x32xf32, #tpu.memory_space<vmem>>, vector<1x32xf32>
    %387 = vector.broadcast %386 : vector<1x32xf32> to vector<8x32xf32>
    %388 = arith.addf %385, %387 : vector<8x32xf32>
    %389 = arith.addf %368, %388 : vector<8x32xf32>
    %c0_171 = arith.constant 0 : index
    %c0_172 = arith.constant 0 : index
    %390 = vector.load %arg13[%c0_171, %c0_172] : memref<1x32xf32, #tpu.memory_space<vmem>>, vector<1x32xf32>
    %c0_173 = arith.constant 0 : index
    %c0_174 = arith.constant 0 : index
    %391 = vector.load %arg14[%c0_173, %c0_174] : memref<1x32xf32, #tpu.memory_space<vmem>>, vector<1x32xf32>
    %cst_175 = arith.constant dense<0.000000e+00> : vector<8xf32>
    %392 = vector.multi_reduction <add>, %389, %cst_175 [1] : vector<8x32xf32> to vector<8xf32>
    %393 = vector.shape_cast %392 : vector<8xf32> to vector<8x1xf32>
    %cst_176 = arith.constant 3.200000e+01 : f32
    %394 = vector.broadcast %cst_176 : f32 to vector<8x1xf32>
    %395 = arith.divf %393, %394 : vector<8x1xf32>
    %396 = vector.broadcast %395 : vector<8x1xf32> to vector<8x32xf32>
    %397 = arith.subf %389, %396 : vector<8x32xf32>
    %398 = arith.mulf %397, %397 : vector<8x32xf32>
    %cst_177 = arith.constant dense<0.000000e+00> : vector<8xf32>
    %399 = vector.multi_reduction <add>, %398, %cst_177 [1] : vector<8x32xf32> to vector<8xf32>
    %400 = vector.shape_cast %399 : vector<8xf32> to vector<8x1xf32>
    %cst_178 = arith.constant 3.200000e+01 : f32
    %401 = vector.broadcast %cst_178 : f32 to vector<8x1xf32>
    %402 = arith.divf %400, %401 : vector<8x1xf32>
    %403 = vector.broadcast %395 : vector<8x1xf32> to vector<8x32xf32>
    %404 = arith.subf %389, %403 : vector<8x32xf32>
    %cst_179 = arith.constant 9.99999974E-6 : f32
    %405 = vector.broadcast %cst_179 : f32 to vector<8x1xf32>
    %406 = arith.addf %402, %405 : vector<8x1xf32>
    %407 = math.rsqrt %406 : vector<8x1xf32>
    %408 = vector.broadcast %407 : vector<8x1xf32> to vector<8x32xf32>
    %409 = arith.mulf %404, %408 : vector<8x32xf32>
    %410 = vector.broadcast %390 : vector<1x32xf32> to vector<8x32xf32>
    %411 = arith.mulf %409, %410 : vector<8x32xf32>
    %412 = vector.broadcast %391 : vector<1x32xf32> to vector<8x32xf32>
    %413 = arith.addf %411, %412 : vector<8x32xf32>
    %414 = vector.shape_cast %413 : vector<8x32xf32> to vector<2x4x32xf32>
    %415 = tpu.transpose %414, [1, 0, 2] : vector<2x4x32xf32> -> vector<4x2x32xf32>
    %c0_180 = arith.constant 0 : index
    %c0_181 = arith.constant 0 : index
    %c0_182 = arith.constant 0 : index
    %416 = vector.load %arg15[%c0_180, %c0_181, %c0_182] : memref<4x2x32xf32, #tpu.memory_space<vmem>>, vector<4x2x32xf32>
    tpu.vector_store %arg15[%c0_180, %c0_181, %c0_182], %415 {strides = array<i32>} : memref<4x2x32xf32, #tpu.memory_space<vmem>>, vector<4x2x32xf32>,
    return
  }
  func.func @transform_0(%arg0: i32, %arg1: i32) -> (i32, i32, i32) {
    %c0_i32 = arith.constant 0 : i32
    %c0_i32_0 = arith.constant 0 : i32
    %c0_i32_1 = arith.constant 0 : i32
    return %c0_i32, %arg0, %c0_i32_0 : i32, i32, i32
  }
  func.func @transform_1(%arg0: i32, %arg1: i32) -> (i32, i32) {
    %c0_i32 = arith.constant 0 : i32
    %c0_i32_0 = arith.constant 0 : i32
    %c0_i32_1 = arith.constant 0 : i32
    return %c0_i32, %c0_i32_0 : i32, i32
  }
  func.func @transform_2(%arg0: i32, %arg1: i32) -> (i32, i32) {
    %c0_i32 = arith.constant 0 : i32
    %c0_i32_0 = arith.constant 0 : i32
    %c0_i32_1 = arith.constant 0 : i32
    return %c0_i32, %c0_i32_0 : i32, i32
  }
  func.func @transform_3(%arg0: i32, %arg1: i32) -> (i32, i32) {
    %c0_i32 = arith.constant 0 : i32
    %c0_i32_0 = arith.constant 0 : i32
    %c0_i32_1 = arith.constant 0 : i32
    return %c0_i32, %c0_i32_0 : i32, i32
  }
  func.func @transform_4(%arg0: i32, %arg1: i32) -> (i32, i32) {
    %c0_i32 = arith.constant 0 : i32
    %c0_i32_0 = arith.constant 0 : i32
    %c0_i32_1 = arith.constant 0 : i32
    return %c0_i32, %c0_i32_0 : i32, i32
  }
  func.func @transform_5(%arg0: i32, %arg1: i32) -> (i32, i32) {
    %c0_i32 = arith.constant 0 : i32
    %c0_i32_0 = arith.constant 0 : i32
    %c0_i32_1 = arith.constant 0 : i32
    return %c0_i32, %c0_i32_0 : i32, i32
  }
  func.func @transform_6(%arg0: i32, %arg1: i32) -> (i32, i32) {
    %c0_i32 = arith.constant 0 : i32
    %c0_i32_0 = arith.constant 0 : i32
    %c0_i32_1 = arith.constant 0 : i32
    return %c0_i32, %c0_i32_0 : i32, i32
  }
  func.func @transform_7(%arg0: i32, %arg1: i32) -> (i32, i32) {
    %c0_i32 = arith.constant 0 : i32
    %c0_i32_0 = arith.constant 0 : i32
    %c0_i32_1 = arith.constant 0 : i32
    return %c0_i32, %c0_i32_0 : i32, i32
  }
  func.func @transform_8(%arg0: i32, %arg1: i32) -> (i32, i32) {
    %c0_i32 = arith.constant 0 : i32
    %c0_i32_0 = arith.constant 0 : i32
    %c0_i32_1 = arith.constant 0 : i32
    return %c0_i32, %c0_i32_0 : i32, i32
  }
  func.func @transform_9(%arg0: i32, %arg1: i32) -> (i32, i32) {
    %c0_i32 = arith.constant 0 : i32
    %c0_i32_0 = arith.constant 0 : i32
    %c0_i32_1 = arith.constant 0 : i32
    return %c0_i32, %c0_i32_0 : i32, i32
  }
  func.func @transform_10(%arg0: i32, %arg1: i32) -> (i32, i32) {
    %c0_i32 = arith.constant 0 : i32
    %c0_i32_0 = arith.constant 0 : i32
    %c0_i32_1 = arith.constant 0 : i32
    return %c0_i32, %c0_i32_0 : i32, i32
  }
  func.func @transform_11(%arg0: i32, %arg1: i32) -> (i32, i32) {
    %c0_i32 = arith.constant 0 : i32
    %c0_i32_0 = arith.constant 0 : i32
    %c0_i32_1 = arith.constant 0 : i32
    return %c0_i32, %c0_i32_0 : i32, i32
  }
  func.func @transform_12(%arg0: i32, %arg1: i32) -> (i32, i32) {
    %c0_i32 = arith.constant 0 : i32
    %c0_i32_0 = arith.constant 0 : i32
    %c0_i32_1 = arith.constant 0 : i32
    return %c0_i32, %c0_i32_0 : i32, i32
  }
  func.func @transform_13(%arg0: i32, %arg1: i32) -> (i32, i32, i32) {
    %c0_i32 = arith.constant 0 : i32
    %c0_i32_0 = arith.constant 0 : i32
    return %arg1, %arg0, %c0_i32 : i32, i32, i32
  }
}

</mosaic_0001>

<llo_original>
// kernel: tpu_custom_call.1
$region0: #{tpu_custom_call.1}
  #allocation0 [shape = 'u32[]', space=smem, size = 0x4, offset = 0x4, fixed_abs, tag = 'smem constant byte address 0x4 - core index']
  #allocation1 [shape = 'u32[144,128]{1,0:T(1,128)}', space=vmem, size = 0x12000, scoped, tag = 'internal scratch']
  #allocation2 [shape = 'bf16[2,8,64]{2,1,0:T(8,128)(2,1)}', space=vmem, size = 0x1000, scoped, tag = 'scratch operand']
  #allocation3 [shape = 'f32[8,32]{1,0:T(8,128)}', space=vmem, size = 0x1000, scoped, tag = 'scratch operand']
  #allocation4 [shape = 'f32[8,32]{1,0:T(8,128)}', space=vmem, size = 0x1000, scoped, tag = 'scratch operand']
  %s0 = inlined_call_operand.vmem [shape: f32[8,2,32], index: 0, kind: input, shape index: {}]
  %s1 = inlined_call_operand.vmem [shape: bf16[32,96], index: 1, kind: input, shape index: {}]
  %s2 = inlined_call_operand.vmem [shape: f32[1,96], index: 2, kind: input, shape index: {}]
  %s3 = inlined_call_operand.vmem [shape: bf16[32,32], index: 3, kind: input, shape index: {}]
  %s4 = inlined_call_operand.vmem [shape: f32[1,32], index: 4, kind: input, shape index: {}]
  %s5 = inlined_call_operand.vmem [shape: f32[1,32], index: 5, kind: input, shape index: {}]
  %s6 = inlined_call_operand.vmem [shape: f32[1,32], index: 6, kind: input, shape index: {}]
  %s7 = inlined_call_operand.vmem [shape: bf16[32,128], index: 7, kind: input, shape index: {}]
  %s8 = inlined_call_operand.vmem [shape: f32[1,128], index: 8, kind: input, shape index: {}]
  %s9 = inlined_call_operand.vmem [shape: bf16[128,32], index: 9, kind: input, shape index: {}]
  %s10 = inlined_call_operand.vmem [shape: f32[1,32], index: 10, kind: input, shape index: {}]
  %s11 = inlined_call_operand.vmem [shape: f32[1,32], index: 11, kind: input, shape index: {}]
  %s12 = inlined_call_operand.vmem [shape: f32[1,32], index: 12, kind: input, shape index: {}]
  %s13 = inlined_call_operand.hbm [shape: f32[8,2,32], index: 13, kind: output, shape index: {}]
  %s14 = sld [smem:[#allocation0]]
  $region85: #{tpu_custom_call.1} parent=0
    _
  %s16 = ssub.s32 1, %s14
  %s17 = scalar_select 0, %s16, %s14
  $region1: #{tpu_custom_call.1} parent=0
    #allocation5 [shape = 'u8[8192]{0}', space=vmem, size = 0x2000, scoped, tag = 'output window, operand 0']
    #allocation6 [shape = 's32[2]{0}', space=sflag, size = 0x8, scoped, tag = 'scoped memory for tpu_custom_call.1']
    %18 = vsyncpa [#allocation6], 0
    %s19 = scalar_lea.sflag [#allocation6], 1
    %20 = vsyncpa %s19, 0
    loop: start=0, step=1, limit=4
    $region2: #{tpu_custom_call.1} parent=1 // loop_pre_header
      _
    $region3: #{tpu_custom_call.1} parent=1 // loop_header
      %s22 = sphi 0, %s26
      %p23 = scmp.ge.s32.totalorder %s22, 4
      %s29 = sphi 0, %s41
      %s30 = sphi 0, %s37
      %s31 = sphi 0, %s29
      %s32 = sphi 0, %s30
      %s33 = sphi 0, %s31
      %s34 = sphi 0, %s32
      %s44 = sphi 0, %s46
      %s47 = sphi 0, %s44
      %s48 = sphi 0, %s47
      %s64 = sphi 0, %s48
      %s68 = sphi 0, %s68
      %s70 = sphi 0, %s68
      %s71 = sphi 0, %s70
      %s85 = sphi 0, %s71
      %s89 = sphi 0, %s89
      %s91 = sphi 0, %s89
      %s92 = sphi 0, %s91
      %s106 = sphi 0, %s92
      %s110 = sphi 0, %s110
      %s112 = sphi 0, %s110
      %s113 = sphi 0, %s112
      %s127 = sphi 0, %s113
      %s131 = sphi 0, %s131
      %s133 = sphi 0, %s131
      %s134 = sphi 0, %s133
      %s148 = sphi 0, %s134
      %s152 = sphi 0, %s152
      %s154 = sphi 0, %s152
      %s155 = sphi 0, %s154
      %s169 = sphi 0, %s155
      %s173 = sphi 0, %s173
      %s175 = sphi 0, %s173
      %s176 = sphi 0, %s175
      %s190 = sphi 0, %s176
      %s194 = sphi 0, %s194
      %s196 = sphi 0, %s194
      %s197 = sphi 0, %s196
      %s211 = sphi 0, %s197
      %s215 = sphi 0, %s215
      %s217 = sphi 0, %s215
      %s218 = sphi 0, %s217
      %s232 = sphi 0, %s218
      %s236 = sphi 0, %s236
      %s238 = sphi 0, %s236
      %s239 = sphi 0, %s238
      %s253 = sphi 0, %s239
      %s257 = sphi 0, %s257
      %s259 = sphi 0, %s257
      %s260 = sphi 0, %s259
      %s274 = sphi 0, %s260
      %s278 = sphi 0, %s278
      %s280 = sphi 0, %s278
      %s281 = sphi 0, %s280
      %s295 = sphi 0, %s281
      %s299 = sphi 0, %s299
      %s301 = sphi 0, %s299
      %s302 = sphi 0, %s301
      %s316 = sphi 0, %s302
      %s324 = sphi 0, %s326
      %s327 = sphi 0, %s324
      %s328 = sphi 0, %s327
      %s344 = sphi 0, %s328
    $region4: #{tpu_custom_call.1} parent=1 // loop_header_branch
      %25 = sbr.rel (%p23) target = $region8
    $region5: #{tpu_custom_call.1} parent=1 // loop_body
      %s27 = ssub.s32 %s22, 1
      %s28 = ssub.s32 %s22, 2
      %s35 = sadd.s32 1, %s30
      %p36 = scmp.ge.s32.totalorder %s35, 2
      %s37 = scalar_select %p36, 0, %s35
      %s38 = sadd.s32 1, %s29
      %s39 = scalar_select %p36, %s38, %s29
      %p40 = scmp.ge.s32.totalorder %s39, 1
      %s41 = scalar_select %p40, 0, %s39
      %s42 = ssub.s32 %s29, %s41
      %p43 = scmp.eq.s32.totalorder %s42, 0
      %s45 = sadd.s32 %s44, 1
      %s46 = scalar_select %p43, %s44, %s45
      %p49 = pneg %p43
      %p50 = scmp.eq.s32.totalorder %s22, 1
      %p51 = por %p49, %p50
      %p52 = scmp.ne.s32.totalorder %s44, %s47
      %p53 = scmp.eq.s32.totalorder %s22, 0
      %p54 = por %p52, %p53
      %p55 = scmp.ne.s32.totalorder %s44, %s47
      %p56 = scmp.eq.s32.totalorder %s27, 1
      %p57 = por %p55, %p56
      %p58 = scmp.ne.s32.totalorder %s47, %s48
      %p59 = scmp.eq.s32.totalorder %s27, 0
      %p60 = por %p58, %p59
      %p61 = scmp.ne.s32.totalorder %s47, %s48
      %p62 = scmp.eq.s32.totalorder %s28, 1
      %p63 = por %p61, %p62
      %p65 = scmp.ne.s32.totalorder %s48, %s64
      %p66 = scmp.eq.s32.totalorder %s28, 0
      %p67 = por %p65, %p66
      %s69 = sadd.s32 %s68, 1
      %p72 = scmp.eq.s32.totalorder %s22, 1
      %p73 = scmp.ne.s32.totalorder %s68, %s70
      %p74 = scmp.eq.s32.totalorder %s22, 0
      %p75 = por %p73, %p74
      %p76 = scmp.ne.s32.totalorder %s68, %s70
      %p77 = scmp.eq.s32.totalorder %s27, 1
      %p78 = por %p76, %p77
      %p79 = scmp.ne.s32.totalorder %s70, %s71
      %p80 = scmp.eq.s32.totalorder %s27, 0
      %p81 = por %p79, %p80
      %p82 = scmp.ne.s32.totalorder %s70, %s71
      %p83 = scmp.eq.s32.totalorder %s28, 1
      %p84 = por %p82, %p83
      %p86 = scmp.ne.s32.totalorder %s71, %s85
      %p87 = scmp.eq.s32.totalorder %s28, 0
      %p88 = por %p86, %p87
      %s90 = sadd.s32 %s89, 1
      %p93 = scmp.eq.s32.totalorder %s22, 1
      %p94 = scmp.ne.s32.totalorder %s89, %s91
      %p95 = scmp.eq.s32.totalorder %s22, 0
      %p96 = por %p94, %p95
      %p97 = scmp.ne.s32.totalorder %s89, %s91
      %p98 = scmp.eq.s32.totalorder %s27, 1
      %p99 = por %p97, %p98
      %p100 = scmp.ne.s32.totalorder %s91, %s92
      %p101 = scmp.eq.s32.totalorder %s27, 0
      %p102 = por %p100, %p101
      %p103 = scmp.ne.s32.totalorder %s91, %s92
      %p104 = scmp.eq.s32.totalorder %s28, 1
      %p105 = por %p103, %p104
      %p107 = scmp.ne.s32.totalorder %s92, %s106
      %p108 = scmp.eq.s32.totalorder %s28, 0
      %p109 = por %p107, %p108
      %s111 = sadd.s32 %s110, 1
      %p114 = scmp.eq.s32.totalorder %s22, 1
      %p115 = scmp.ne.s32.totalorder %s110, %s112
      %p116 = scmp.eq.s32.totalorder %s22, 0
      %p117 = por %p115, %p116
      %p118 = scmp.ne.s32.totalorder %s110, %s112
      %p119 = scmp.eq.s32.totalorder %s27, 1
      %p120 = por %p118, %p119
      %p121 = scmp.ne.s32.totalorder %s112, %s113
      %p122 = scmp.eq.s32.totalorder %s27, 0
      %p123 = por %p121, %p122
      %p124 = scmp.ne.s32.totalorder %s112, %s113
      %p125 = scmp.eq.s32.totalorder %s28, 1
      %p126 = por %p124, %p125
      %p128 = scmp.ne.s32.totalorder %s113, %s127
      %p129 = scmp.eq.s32.totalorder %s28, 0
      %p130 = por %p128, %p129
      %s132 = sadd.s32 %s131, 1
      %p135 = scmp.eq.s32.totalorder %s22, 1
      %p136 = scmp.ne.s32.totalorder %s131, %s133
      %p137 = scmp.eq.s32.totalorder %s22, 0
      %p138 = por %p136, %p137
      %p139 = scmp.ne.s32.totalorder %s131, %s133
      %p140 = scmp.eq.s32.totalorder %s27, 1
      %p141 = por %p139, %p140
      %p142 = scmp.ne.s32.totalorder %s133, %s134
      %p143 = scmp.eq.s32.totalorder %s27, 0
      %p144 = por %p142, %p143
      %p145 = scmp.ne.s32.totalorder %s133, %s134
      %p146 = scmp.eq.s32.totalorder %s28, 1
      %p147 = por %p145, %p146
      %p149 = scmp.ne.s32.totalorder %s134, %s148
      %p150 = scmp.eq.s32.totalorder %s28, 0
      %p151 = por %p149, %p150
      %s153 = sadd.s32 %s152, 1
      %p156 = scmp.eq.s32.totalorder %s22, 1
      %p157 = scmp.ne.s32.totalorder %s152, %s154
      %p158 = scmp.eq.s32.totalorder %s22, 0
      %p159 = por %p157, %p158
      %p160 = scmp.ne.s32.totalorder %s152, %s154
      %p161 = scmp.eq.s32.totalorder %s27, 1
      %p162 = por %p160, %p161
      %p163 = scmp.ne.s32.totalorder %s154, %s155
      %p164 = scmp.eq.s32.totalorder %s27, 0
      %p165 = por %p163, %p164
      %p166 = scmp.ne.s32.totalorder %s154, %s155
      %p167 = scmp.eq.s32.totalorder %s28, 1
      %p168 = por %p166, %p167
      %p170 = scmp.ne.s32.totalorder %s155, %s169
      %p171 = scmp.eq.s32.totalorder %s28, 0
      %p172 = por %p170, %p171
      %s174 = sadd.s32 %s173, 1
      %p177 = scmp.eq.s32.totalorder %s22, 1
      %p178 = scmp.ne.s32.totalorder %s173, %s175
      %p179 = scmp.eq.s32.totalorder %s22, 0
      %p180 = por %p178, %p179
      %p181 = scmp.ne.s32.totalorder %s173, %s175
      %p182 = scmp.eq.s32.totalorder %s27, 1
      %p183 = por %p181, %p182
      %p184 = scmp.ne.s32.totalorder %s175, %s176
      %p185 = scmp.eq.s32.totalorder %s27, 0
      %p186 = por %p184, %p185
      %p187 = scmp.ne.s32.totalorder %s175, %s176
      %p188 = scmp.eq.s32.totalorder %s28, 1
      %p189 = por %p187, %p188
      %p191 = scmp.ne.s32.totalorder %s176, %s190
      %p192 = scmp.eq.s32.totalorder %s28, 0
      %p193 = por %p191, %p192
      %s195 = sadd.s32 %s194, 1
      %p198 = scmp.eq.s32.totalorder %s22, 1
      %p199 = scmp.ne.s32.totalorder %s194, %s196
      %p200 = scmp.eq.s32.totalorder %s22, 0
      %p201 = por %p199, %p200
      %p202 = scmp.ne.s32.totalorder %s194, %s196
      %p203 = scmp.eq.s32.totalorder %s27, 1
      %p204 = por %p202, %p203
      %p205 = scmp.ne.s32.totalorder %s196, %s197
      %p206 = scmp.eq.s32.totalorder %s27, 0
      %p207 = por %p205, %p206
      %p208 = scmp.ne.s32.totalorder %s196, %s197
      %p209 = scmp.eq.s32.totalorder %s28, 1
      %p210 = por %p208, %p209
      %p212 = scmp.ne.s32.totalorder %s197, %s211
      %p213 = scmp.eq.s32.totalorder %s28, 0
      %p214 = por %p212, %p213
      %s216 = sadd.s32 %s215, 1
      %p219 = scmp.eq.s32.totalorder %s22, 1
      %p220 = scmp.ne.s32.totalorder %s215, %s217
      %p221 = scmp.eq.s32.totalorder %s22, 0
      %p222 = por %p220, %p221
      %p223 = scmp.ne.s32.totalorder %s215, %s217
      %p224 = scmp.eq.s32.totalorder %s27, 1
      %p225 = por %p223, %p224
      %p226 = scmp.ne.s32.totalorder %s217, %s218
      %p227 = scmp.eq.s32.totalorder %s27, 0
      %p228 = por %p226, %p227
      %p229 = scmp.ne.s32.totalorder %s217, %s218
      %p230 = scmp.eq.s32.totalorder %s28, 1
      %p231 = por %p229, %p230
      %p233 = scmp.ne.s32.totalorder %s218, %s232
      %p234 = scmp.eq.s32.totalorder %s28, 0
      %p235 = por %p233, %p234
      %s237 = sadd.s32 %s236, 1
      %p240 = scmp.eq.s32.totalorder %s22, 1
      %p241 = scmp.ne.s32.totalorder %s236, %s238
      %p242 = scmp.eq.s32.totalorder %s22, 0
      %p243 = por %p241, %p242
      %p244 = scmp.ne.s32.totalorder %s236, %s238
      %p245 = scmp.eq.s32.totalorder %s27, 1
      %p246 = por %p244, %p245
      %p247 = scmp.ne.s32.totalorder %s238, %s239
      %p248 = scmp.eq.s32.totalorder %s27, 0
      %p249 = por %p247, %p248
      %p250 = scmp.ne.s32.totalorder %s238, %s239
      %p251 = scmp.eq.s32.totalorder %s28, 1
      %p252 = por %p250, %p251
      %p254 = scmp.ne.s32.totalorder %s239, %s253
      %p255 = scmp.eq.s32.totalorder %s28, 0
      %p256 = por %p254, %p255
      %s258 = sadd.s32 %s257, 1
      %p261 = scmp.eq.s32.totalorder %s22, 1
      %p262 = scmp.ne.s32.totalorder %s257, %s259
      %p263 = scmp.eq.s32.totalorder %s22, 0
      %p264 = por %p262, %p263
      %p265 = scmp.ne.s32.totalorder %s257, %s259
      %p266 = scmp.eq.s32.totalorder %s27, 1
      %p267 = por %p265, %p266
      %p268 = scmp.ne.s32.totalorder %s259, %s260
      %p269 = scmp.eq.s32.totalorder %s27, 0
      %p270 = por %p268, %p269
      %p271 = scmp.ne.s32.totalorder %s259, %s260
      %p272 = scmp.eq.s32.totalorder %s28, 1
      %p273 = por %p271, %p272
      %p275 = scmp.ne.s32.totalorder %s260, %s274
      %p276 = scmp.eq.s32.totalorder %s28, 0
      %p277 = por %p275, %p276
      %s279 = sadd.s32 %s278, 1
      %p282 = scmp.eq.s32.totalorder %s22, 1
      %p283 = scmp.ne.s32.totalorder %s278, %s280
      %p284 = scmp.eq.s32.totalorder %s22, 0
      %p285 = por %p283, %p284
      %p286 = scmp.ne.s32.totalorder %s278, %s280
      %p287 = scmp.eq.s32.totalorder %s27, 1
      %p288 = por %p286, %p287
      %p289 = scmp.ne.s32.totalorder %s280, %s281
      %p290 = scmp.eq.s32.totalorder %s27, 0
      %p291 = por %p289, %p290
      %p292 = scmp.ne.s32.totalorder %s280, %s281
      %p293 = scmp.eq.s32.totalorder %s28, 1
      %p294 = por %p292, %p293
      %p296 = scmp.ne.s32.totalorder %s281, %s295
      %p297 = scmp.eq.s32.totalorder %s28, 0
      %p298 = por %p296, %p297
      %s300 = sadd.s32 %s299, 1
      %p303 = scmp.eq.s32.totalorder %s22, 1
      %p304 = scmp.ne.s32.totalorder %s299, %s301
      %p305 = scmp.eq.s32.totalorder %s22, 0
      %p306 = por %p304, %p305
      %p307 = scmp.ne.s32.totalorder %s299, %s301
      %p308 = scmp.eq.s32.totalorder %s27, 1
      %p309 = por %p307, %p308
      %p310 = scmp.ne.s32.totalorder %s301, %s302
      %p311 = scmp.eq.s32.totalorder %s27, 0
      %p312 = por %p310, %p311
      %p313 = scmp.ne.s32.totalorder %s301, %s302
      %p314 = scmp.eq.s32.totalorder %s28, 1
      %p315 = por %p313, %p314
      %p317 = scmp.ne.s32.totalorder %s302, %s316
      %p318 = scmp.eq.s32.totalorder %s28, 0
      %p319 = por %p317, %p318
      %s320 = ssub.s32 %s30, %s37
      %s321 = ssub.s32 %s29, %s41
      %s322 = sor.u32 %s320, %s321
      %p323 = scmp.eq.s32.totalorder %s322, 0
      %s325 = sadd.s32 %s324, 1
      %s326 = scalar_select %p323, %s324, %s325
      %p329 = pneg %p323
      %p330 = scmp.eq.s32.totalorder %s22, 1
      %p331 = por %p329, %p330
      %p332 = scmp.ne.s32.totalorder %s324, %s327
      %p333 = scmp.eq.s32.totalorder %s22, 0
      %p334 = por %p332, %p333
      %p335 = scmp.ne.s32.totalorder %s324, %s327
      %p336 = scmp.eq.s32.totalorder %s27, 1
      %p337 = por %p335, %p336
      %p338 = scmp.ne.s32.totalorder %s327, %s328
      %p339 = scmp.eq.s32.totalorder %s27, 0
      %p340 = por %p338, %p339
      %p341 = scmp.ne.s32.totalorder %s327, %s328
      %p342 = scmp.eq.s32.totalorder %s28, 1
      %p343 = por %p341, %p342
      %p345 = scmp.ne.s32.totalorder %s328, %s344
      %p346 = scmp.eq.s32.totalorder %s28, 0
      %p347 = por %p345, %p346
      %p348 = scmp.le.s32.totalorder 1, %s22
      %p349 = scmp.lt.s32.totalorder %s22, 3
      %p350 = pnand %p348, %p349
      %p351 = pneg %p350
      // Predicated region
      $region9: #{tpu_custom_call.1} parent=5 // pred_check
        _
      $region10: #{tpu_custom_call.1} parent=5 // pred_check_branch
        %353 = sbr.rel (%p350) target = $region12
      $region11: #{tpu_custom_call.1} parent=5 // pred_region
        %s354 = ssub.s32 %s22, 1
        // Predicated region
        $region13: #{tpu_custom_call.1} parent=11 // pred_check
          %p355 = pneg %p60
        $region14: #{tpu_custom_call.1} parent=11 // pred_check_branch
          %357 = sbr.rel (%p355) target = $region16
        $region15: #{tpu_custom_call.1} parent=11 // pred_region
          %p358 = scmp.lt.s32.totalorder %s31, 0
          %s359 = scalar_select %p358, %s31, 0
          %s360 = smul.addr %s359, 2
          %s361 = scalar_lea.vmem %s0, %s360
        $region16: #{tpu_custom_call.1} parent=11 // pred_fallthru
          _
        // Predicated region
        $region17: #{tpu_custom_call.1} parent=11 // pred_check
          %p362 = pneg %p81
        $region18: #{tpu_custom_call.1} parent=11 // pred_check_branch
          %364 = sbr.rel (%p362) target = $region20
        $region19: #{tpu_custom_call.1} parent=11 // pred_region
          _
        $region20: #{tpu_custom_call.1} parent=11 // pred_fallthru
          _
        // Predicated region
        $region21: #{tpu_custom_call.1} parent=11 // pred_check
          %p365 = pneg %p102
        $region22: #{tpu_custom_call.1} parent=11 // pred_check_branch
          %367 = sbr.rel (%p365) target = $region24
        $region23: #{tpu_custom_call.1} parent=11 // pred_region
          _
        $region24: #{tpu_custom_call.1} parent=11 // pred_fallthru
          _
        // Predicated region
        $region25: #{tpu_custom_call.1} parent=11 // pred_check
          %p368 = pneg %p123
        $region26: #{tpu_custom_call.1} parent=11 // pred_check_branch
          %370 = sbr.rel (%p368) target = $region28
        $region27: #{tpu_custom_call.1} parent=11 // pred_region
          _
        $region28: #{tpu_custom_call.1} parent=11 // pred_fallthru
          _
        // Predicated region
        $region29: #{tpu_custom_call.1} parent=11 // pred_check
          %p371 = pneg %p144
        $region30: #{tpu_custom_call.1} parent=11 // pred_check_branch
          %373 = sbr.rel (%p371) target = $region32
        $region31: #{tpu_custom_call.1} parent=11 // pred_region
          _
        $region32: #{tpu_custom_call.1} parent=11 // pred_fallthru
          _
        // Predicated region
        $region33: #{tpu_custom_call.1} parent=11 // pred_check
          %p374 = pneg %p165
        $region34: #{tpu_custom_call.1} parent=11 // pred_check_branch
          %376 = sbr.rel (%p374) target = $region36
        $region35: #{tpu_custom_call.1} parent=11 // pred_region
          _
        $region36: #{tpu_custom_call.1} parent=11 // pred_fallthru
          _
        // Predicated region
        $region37: #{tpu_custom_call.1} parent=11 // pred_check
          %p377 = pneg %p186
        $region38: #{tpu_custom_call.1} parent=11 // pred_check_branch
          %379 = sbr.rel (%p377) target = $region40
        $region39: #{tpu_custom_call.1} parent=11 // pred_region
          _
        $region40: #{tpu_custom_call.1} parent=11 // pred_fallthru
          _
        // Predicated region
        $region41: #{tpu_custom_call.1} parent=11 // pred_check
          %p380 = pneg %p207
        $region42: #{tpu_custom_call.1} parent=11 // pred_check_branch
          %382 = sbr.rel (%p380) target = $region44
        $region43: #{tpu_custom_call.1} parent=11 // pred_region
          _
        $region44: #{tpu_custom_call.1} parent=11 // pred_fallthru
          _
        // Predicated region
        $region45: #{tpu_custom_call.1} parent=11 // pred_check
          %p383 = pneg %p228
        $region46: #{tpu_custom_call.1} parent=11 // pred_check_branch
          %385 = sbr.rel (%p383) target = $region48
        $region47: #{tpu_custom_call.1} parent=11 // pred_region
          _
        $region48: #{tpu_custom_call.1} parent=11 // pred_fallthru
          _
        // Predicated region
        $region49: #{tpu_custom_call.1} parent=11 // pred_check
          %p386 = pneg %p249
        $region50: #{tpu_custom_call.1} parent=11 // pred_check_branch
          %388 = sbr.rel (%p386) target = $region52
        $region51: #{tpu_custom_call.1} parent=11 // pred_region
          _
        $region52: #{tpu_custom_call.1} parent=11 // pred_fallthru
          _
        // Predicated region
        $region53: #{tpu_custom_call.1} parent=11 // pred_check
          %p389 = pneg %p270
        $region54: #{tpu_custom_call.1} parent=11 // pred_check_branch
          %391 = sbr.rel (%p389) target = $region56
        $region55: #{tpu_custom_call.1} parent=11 // pred_region
          _
        $region56: #{tpu_custom_call.1} parent=11 // pred_fallthru
          _
        // Predicated region
        $region57: #{tpu_custom_call.1} parent=11 // pred_check
          %p392 = pneg %p291
        $region58: #{tpu_custom_call.1} parent=11 // pred_check_branch
          %394 = sbr.rel (%p392) target = $region60
        $region59: #{tpu_custom_call.1} parent=11 // pred_region
          _
        $region60: #{tpu_custom_call.1} parent=11 // pred_fallthru
          _
        // Predicated region
        $region61: #{tpu_custom_call.1} parent=11 // pred_check
          %p395 = pneg %p312
        $region62: #{tpu_custom_call.1} parent=11 // pred_check_branch
          %397 = sbr.rel (%p395) target = $region64
        $region63: #{tpu_custom_call.1} parent=11 // pred_region
          _
        $region64: #{tpu_custom_call.1} parent=11 // pred_fallthru
          _
      $region12: #{tpu_custom_call.1} parent=5 // pred_fallthru
        _
      %p398 = scmp.lt.s32.totalorder %s22, 2
      // Predicated region
      $region65: #{tpu_custom_call.1} parent=5 // pred_check
        %p399 = pneg %p398
      $region66: #{tpu_custom_call.1} parent=5 // pred_check_branch
        %401 = sbr.rel (%p399) target = $region68
      $region67: #{tpu_custom_call.1} parent=5 // pred_region
        _
      $region68: #{tpu_custom_call.1} parent=5 // pred_fallthru
        _
      %p402 = scmp.le.s32.totalorder 1, %s22
      %p403 = scmp.lt.s32.totalorder %s22, 3
      %p404 = pnand %p402, %p403
      %p405 = pneg %p404
      // Predicated region
      $region69: #{tpu_custom_call.1} parent=5 // pred_check
        _
      $region70: #{tpu_custom_call.1} parent=5 // pred_check_branch
        %407 = sbr.rel (%p404) target = $region72
      $region71: #{tpu_custom_call.1} parent=5 // pred_region
        %s408 = ssub.s32 %s22, 1
        %p409 = scmp.lt.s32.totalorder %s31, 0
        %s410 = scalar_select %p409, %s31, 0
        %s411 = smul.addr %s410, 2
        %s412 = scalar_lea.vmem %s0, %s411
        %p413 = pneg %p60
        %p414 = pneg %p57
        %p415 = pneg %p81
        %p416 = pneg %p78
        %p417 = pneg %p102
        %p418 = pneg %p99
        %p419 = pneg %p123
        %p420 = pneg %p120
        %p421 = pneg %p144
        %p422 = pneg %p141
        %p423 = pneg %p165
        %p424 = pneg %p162
        %p425 = pneg %p186
        %p426 = pneg %p183
        %p427 = pneg %p207
        %p428 = pneg %p204
        %p429 = pneg %p228
        %p430 = pneg %p225
        %p431 = pneg %p249
        %p432 = pneg %p246
        %p433 = pneg %p270
        %p434 = pneg %p267
        %p435 = pneg %p291
        %p436 = pneg %p288
        %p437 = pneg %p312
        %p438 = pneg %p309
        %p439 = pneg %p340
        %p440 = pneg %p337
        %s441 = sand.u32 %s327, 1
        %s442 = scalar_lea.sflag [#allocation6], %s441
        %s443 = sand.u32 %s327, 1
        %s444 = smul.addr %s443, 8
        %s445 = scalar_lea.vmem [#allocation5], %s444
        %p446 = scmp.lt.s32.totalorder %s31, 0
        %s447 = scalar_select %p446, %s31, 0
        %s448 = smul.addr %s447, 2
        %s449 = scalar_lea.vmem %s0, %s448
        %s450 = smul.u32 4, %s32
        %s452 = smul.u32 %s32, 4
        %v453 = vld [vmem:[%s449] sm:$0x3]
        %v454 = vld [vmem:[%s449 + $0x2] sm:$0x3]
        %v455 = vld [vmem:[%s449 + $0x4] sm:$0x3]
        %v456 = vld [vmem:[%s449 + $0x6] sm:$0x3]
        %v457 = vld [vmem:[%s449 + $0x8] sm:$0x3]
        %v458 = vld [vmem:[%s449 + $0xa] sm:$0x3]
        %v459 = vld [vmem:[%s449 + $0xc] sm:$0x3]
        %v460 = vld [vmem:[%s449 + $0xe] sm:$0x3]
        %v461 = vcombine.low %v453, %v455
        %v463 = vunpack.c.l.s4 1983009808
        %v464 = vunpack.c.0.s8 %v463
        %v465 = vlaneseq
        %v466 = vshrl.u32 %v465, 7
        %v467 = vsub.s32 %v464, %v466
        %v468 = vrot.slane %v461, %v467
        %v469 = vcombine.low %v454, %v456
        %v471 = vunpack.c.l.s4 1983009808
        %v472 = vunpack.c.0.s8 %v471
        %v473 = vlaneseq
        %v474 = vshrl.u32 %v473, 7
        %v475 = vsub.s32 %v472, %v474
        %v476 = vrot.slane %v469, %v475
        %v477 = vcombine.low %v457, %v459
        %v479 = vunpack.c.l.s4 1983009808
        %v480 = vunpack.c.0.s8 %v479
        %v481 = vlaneseq
        %v482 = vshrl.u32 %v481, 7
        %v483 = vsub.s32 %v480, %v482
        %v484 = vrot.slane %v477, %v483
        %v485 = vcombine.low %v458, %v460
        %v487 = vunpack.c.l.s4 1983009808
        %v488 = vunpack.c.0.s8 %v487
        %v489 = vlaneseq
        %v490 = vshrl.u32 %v489, 7
        %v491 = vsub.s32 %v488, %v490
        %v492 = vrot.slane %v485, %v491
        %v493 = vcombine.low %v468, %v476
        %v495 = vunpack.c.l.s4 1934713408
        %v496 = vunpack.c.0.s8 %v495
        %v497 = vlaneseq
        %v498 = vshrl.u32 %v497, 7
        %v499 = vsub.s32 %v496, %v498
        %v500 = vrot.slane %v493, %v499
        %v501 = vcombine.low %v484, %v492
        %v503 = vunpack.c.l.s4 1934713408
        %v504 = vunpack.c.0.s8 %v503
        %v505 = vlaneseq
        %v506 = vshrl.u32 %v505, 7
        %v507 = vsub.s32 %v504, %v506
        %v508 = vrot.slane %v501, %v507
        %v509 = vcombine.low %v500, %v508
        %v510 = vcombine.high %v500, %v508
        %s511 = smul.u32 %s452, 2
        %s512 = scalar_lea.vmem %s449, %s511
        %v513 = vld [vmem:[%s512] sm:$0x3]
        %v514 = vld [vmem:[%s512 + $0x2] sm:$0x3]
        %v515 = vld [vmem:[%s512 + $0x4] sm:$0x3]
        %v516 = vld [vmem:[%s512 + $0x6] sm:$0x3]
        %v517 = vcombine.low %v513, %v515
        %v519 = vunpack.c.l.s4 1983009808
        %v520 = vunpack.c.0.s8 %v519
        %v521 = vlaneseq
        %v522 = vshrl.u32 %v521, 7
        %v523 = vsub.s32 %v520, %v522
        %v524 = vrot.slane %v517, %v523
        %v525 = vcombine.low %v514, %v516
        %v527 = vunpack.c.l.s4 1983009808
        %v528 = vunpack.c.0.s8 %v527
        %v529 = vlaneseq
        %v530 = vshrl.u32 %v529, 7
        %v531 = vsub.s32 %v528, %v530
        %v532 = vrot.slane %v525, %v531
        %v533 = vcombine.low %v524, %v532
        %v535 = vunpack.c.l.s4 1934713408
        %v536 = vunpack.c.0.s8 %v535
        %v537 = vlaneseq
        %v538 = vshrl.u32 %v537, 7
        %v539 = vsub.s32 %v536, %v538
        %v540 = vrot.slane %v533, %v539
        %v541 = vcombine.high %v540, 0.0
        %v542 = vpack.c.bf16 %v510, %v509
        %v543 = vld [vmem:[%s1] sm:$0xf]
        %v544 = vld [vmem:[%s1 + $0x4] sm:$0xf]
        %v545 = vld [vmem:[%s1 + $0x8] sm:$0xf]
        %v546 = vld [vmem:[%s1 + $0xc] sm:$0xf]
        %v547 = vld [vmem:[%s2] sm:$0x1]
        %v549 = vlaneseq
        %v550 = vshrl.u32 %v549, 7
        %v551 = vsub.s32 0, %v550
        %v552 = vrot.slane %v547, %v551
        %v557 = vunpack.c.l.b16 %v543
        %v558 = vunpack.c.l.b16 %v544
        %v559 = vunpack.c.l.b16 %v545
        %v560 = vunpack.c.l.b16 %v546
        %v561 = vpack.c.b16 %v558, %v557
        %v562 = vpack.c.b16 %v560, %v559
        %563 = vrot.lane.b32.xlu0 %v561, 96
        %v564 = vpop.permute.xlu0 %563
        %565 = vrot.lane.b32.xlu0 %v562, 96
        %v566 = vpop.permute.xlu0 %565
        %569 = vrot.lane.b32.xlu0 %v552, 96
        %v570 = vpop.permute.xlu0 %569
        %vm572 = vcmask 261120
        %v574 = vsel %vm572, %v542, 0
        %576 = vmatprep.subr.bf16.mxu0 0
        %577 = vmatpush1.bf16.msra.mxu0 %v564
        %578 = vmatprep.subr.bf16.mxu0 0
        %579 = vmatpush1.bf16.msra.mxu0 %v566
        %580 = vmatprep.subr.bf16.mxu0 0
        %581 = vmatpush1.bf16.msra.mxu0 0
        %582 = vmatprep.subr.bf16.mxu0 0
        %583 = vmatpush1.bf16.msra.mxu0 0
        %584 = vmatprep.subr.bf16.mxu0 0
        %585 = vmatpush1.bf16.msra.mxu0 0
        %586 = vmatprep.subr.bf16.mxu0 0
        %587 = vmatpush1.bf16.msra.mxu0 0
        %588 = vmatprep.subr.bf16.mxu0 0
        %589 = vmatpush1.bf16.msra.mxu0 0
        %590 = vmatprep.subr.bf16.mxu0 0
        %591 = vmatpush1.bf16.msra.mxu0 0
        %592 = vmatprep.subr.bf16.mxu0 0
        %593 = vmatpush1.bf16.msra.mxu0 0
        %594 = vmatprep.subr.bf16.mxu0 0
        %595 = vmatpush1.bf16.msra.mxu0 0
        %596 = vmatprep.subr.bf16.mxu0 0
        %597 = vmatpush1.bf16.msra.mxu0 0
        %598 = vmatprep.subr.bf16.mxu0 0
        %599 = vmatpush1.bf16.msra.mxu0 0
        %600 = vmatprep.subr.bf16.mxu0 0
        %601 = vmatpush1.bf16.msra.mxu0 0
        %602 = vmatprep.subr.bf16.mxu0 0
        %603 = vmatpush1.bf16.msra.mxu0 0
        %604 = vmatprep.subr.bf16.mxu0 0
        %605 = vmatpush1.bf16.msra.mxu0 0
        %606 = vmatprep.subr.bf16.mxu0 0
        %607 = vmatpush1.bf16.msra.mxu0 0
        %608 = vmatprep.mubr.bf16.mxu0 0
        %609 = vmatmul.mubr.bf16.gmra.mrb[0].mxu0 %v574
        %v610 = vpop.f32.mrb[0].mxu0
        %v611 = vadd.f32 %v570, %v610
        %v612 = vpop.f32.mrb[0].mxu0
        %v613 = vpop.f32.mrb[0].mxu0
        %v614 = vadd.f32 %v570, %v613
        %v615 = vpop.f32.mrb[0].mxu0
        %616 = vdwg.mxu0
        %v617 = vpack.c.bf16 %v611, %v611
        %v618 = vpack.c.bf16 %v614, %v614
        %vm619 = vcmask 519168
        %620 = vst.msk [vmem:[#allocation2] sm:$0xf] %vm619, %v617
        %621 = vst.msk [vmem:[#allocation2 + $0x4] sm:$0xf] %vm619, %v618
        %v624 = vcombine.low %v540, %v541
        %v626 = vpack.c.bf16 %v624, %v624
        %v627 = vld [vmem:[%s1] sm:$0xf]
        %v628 = vld [vmem:[%s1 + $0x4] sm:$0xf]
        %v629 = vld [vmem:[%s1 + $0x8] sm:$0xf]
        %v630 = vld [vmem:[%s1 + $0xc] sm:$0xf]
        %v631 = vld [vmem:[%s2] sm:$0x1]
        %v633 = vlaneseq
        %v634 = vshrl.u32 %v633, 7
        %v635 = vsub.s32 0, %v634
        %v636 = vrot.slane %v631, %v635
        %v642 = vunpack.c.l.b16 %v627
        %v643 = vunpack.c.l.b16 %v628
        %v644 = vunpack.c.l.b16 %v629
        %v645 = vunpack.c.l.b16 %v630
        %v646 = vpack.c.b16 %v643, %v642
        %v647 = vpack.c.b16 %v645, %v644
        %v651 = vsel %vm572, %v626, 0
        %653 = vmatprep.subr.bf16.mxu0 0
        %654 = vmatpush1.bf16.msra.mxu0 %v646
        %655 = vmatprep.subr.bf16.mxu0 0
        %656 = vmatpush1.bf16.msra.mxu0 %v647
        %657 = vmatprep.subr.bf16.mxu0 0
        %658 = vmatpush1.bf16.msra.mxu0 0
        %659 = vmatprep.subr.bf16.mxu0 0
        %660 = vmatpush1.bf16.msra.mxu0 0
        %661 = vmatprep.subr.bf16.mxu0 0
        %662 = vmatpush1.bf16.msra.mxu0 0
        %663 = vmatprep.subr.bf16.mxu0 0
        %664 = vmatpush1.bf16.msra.mxu0 0
        %665 = vmatprep.subr.bf16.mxu0 0
        %666 = vmatpush1.bf16.msra.mxu0 0
        %667 = vmatprep.subr.bf16.mxu0 0
        %668 = vmatpush1.bf16.msra.mxu0 0
        %669 = vmatprep.subr.bf16.mxu0 0
        %670 = vmatpush1.bf16.msra.mxu0 0
        %671 = vmatprep.subr.bf16.mxu0 0
        %672 = vmatpush1.bf16.msra.mxu0 0
        %673 = vmatprep.subr.bf16.mxu0 0
        %674 = vmatpush1.bf16.msra.mxu0 0
        %675 = vmatprep.subr.bf16.mxu0 0
        %676 = vmatpush1.bf16.msra.mxu0 0
        %677 = vmatprep.subr.bf16.mxu0 0
        %678 = vmatpush1.bf16.msra.mxu0 0
        %679 = vmatprep.subr.bf16.mxu0 0
        %680 = vmatpush1.bf16.msra.mxu0 0
        %681 = vmatprep.subr.bf16.mxu0 0
        %682 = vmatpush1.bf16.msra.mxu0 0
        %683 = vmatprep.subr.bf16.mxu0 0
        %684 = vmatpush1.bf16.msra.mxu0 0
        %685 = vmatprep.mubr.bf16.mxu0 0
        %686 = vmatmul.mubr.bf16.gmra.mrb[0].mxu0 %v651
        %v687 = vpop.f32.mrb[0].mxu0
        %v688 = vadd.f32 %v636, %v687
        %v689 = vpop.f32.mrb[0].mxu0
        %v690 = vpop.f32.mrb[0].mxu0
        %v691 = vpop.f32.mrb[0].mxu0
        %692 = vdwg.mxu0
        %v693 = vpack.c.bf16 %v688, %v688
        %v694 = vld [vmem:[#allocation2] sm:$0xf]
        %vm695 = vcmask 64512
        %v697 = vsel %vm695, %v693, 0
        %v700 = vsel %vm695, %v694, 0
        %702 = vmatprep.subr.bf16.mxu0 0
        %703 = vmatpush1.bf16.xpose.msra.mxu0 %v700
        %704 = vmatprep.subr.bf16.mxu0 0
        %705 = vmatpush1.bf16.xpose.msra.mxu0 0
        %706 = vmatprep.subr.bf16.mxu0 0
        %707 = vmatpush1.bf16.xpose.msra.mxu0 0
        %708 = vmatprep.subr.bf16.mxu0 0
        %709 = vmatpush1.bf16.xpose.msra.mxu0 0
        %710 = vmatprep.subr.bf16.mxu0 0
        %711 = vmatpush1.bf16.xpose.msra.mxu0 0
        %712 = vmatprep.subr.bf16.mxu0 0
        %713 = vmatpush1.bf16.xpose.msra.mxu0 0
        %714 = vmatprep.subr.bf16.mxu0 0
        %715 = vmatpush1.bf16.xpose.msra.mxu0 0
        %716 = vmatprep.subr.bf16.mxu0 0
        %717 = vmatpush1.bf16.xpose.msra.mxu0 0
        %718 = vmatprep.subr.bf16.mxu0 0
        %719 = vmatpush1.bf16.xpose.msra.mxu0 0
        %720 = vmatprep.subr.bf16.mxu0 0
        %721 = vmatpush1.bf16.xpose.msra.mxu0 0
        %722 = vmatprep.subr.bf16.mxu0 0
        %723 = vmatpush1.bf16.xpose.msra.mxu0 0
        %724 = vmatprep.subr.bf16.mxu0 0
        %725 = vmatpush1.bf16.xpose.msra.mxu0 0
        %726 = vmatprep.subr.bf16.mxu0 0
        %727 = vmatpush1.bf16.xpose.msra.mxu0 0
        %728 = vmatprep.subr.bf16.mxu0 0
        %729 = vmatpush1.bf16.xpose.msra.mxu0 0
        %730 = vmatprep.subr.bf16.mxu0 0
        %731 = vmatpush1.bf16.xpose.msra.mxu0 0
        %732 = vmatprep.subr.bf16.mxu0 0
        %733 = vmatpush1.bf16.xpose.msra.mxu0 0
        %734 = vmatprep.mubr.bf16.mxu0 0
        %735 = vmatmul.mubr.bf16.gmra.mrb[0].mxu0 %v697
        %v736 = vpop.f32.mrb[0].mxu0
        %v737 = vadd.f32 0.0, %v736
        %v738 = vpop.f32.mrb[0].mxu0
        %v739 = vpop.f32.mrb[0].mxu0
        %v740 = vpop.f32.mrb[0].mxu0
        %741 = vdwg.mxu0
        %v742 = vlaneseq
        %v743 = vshrl.u32 %v742, 7
        %v744 = vstv %s452
        %v745 = vadd.s32 %v744, %v743
        %v746 = vlaneseq
        %v747 = vand.u32 %v746, 127
        %vm748 = vcmp.gt.s32.totalorder %v747, %v745
        %v749 = vsel %vm748, -inf, %v737
        %vm750 = vcmask 60416
        %v751 = vsel %vm750, %v749, -inf
        %752 = vmax.xlane.f32.xlu0 %v751
        %v753 = vpop.xlane.xlu0 %752
        %v754 = vsub.f32 -inf, %v753
        %v755 = vmul.f32 %v754, 1.442695
        %v756 = vpow.pop %v755
        %v757 = vsub.f32 %v749, %v753
        %v758 = vmul.f32 %v757, 1.442695
        %v759 = vpow.pop %v758
        %v760 = vmul.f32 %v756, 0.0
        %v761 = vsel %vm750, %v759, 0.0
        %762 = vadd.xlane.f32.xlu0 %v761
        %v763 = vpop.xlane.xlu0 %762
        %v764 = vadd.f32 %v760, %v763
        %v765 = vpack.c.bf16 %v759, %v759
        %v767 = vunpack.c.l.b16 %v694
        %v768 = vpack.c.b16 %v767, %v767
        %769 = vrot.lane.b32.xlu0 %v768, 96
        %v770 = vpop.permute.xlu0 %769
        %v772 = vsel %vm695, %v765, 0
        %vm774 = vcmask 1043456
        %v776 = vsel %vm774, %v770, 0
        %778 = vmatprep.subr.bf16.mxu0 0
        %779 = vmatpush1.bf16.msra.mxu0 %v776
        %780 = vmatprep.subr.bf16.mxu0 0
        %781 = vmatpush1.bf16.msra.mxu0 0
        %782 = vmatprep.subr.bf16.mxu0 0
        %783 = vmatpush1.bf16.msra.mxu0 0
        %784 = vmatprep.subr.bf16.mxu0 0
        %785 = vmatpush1.bf16.msra.mxu0 0
        %786 = vmatprep.subr.bf16.mxu0 0
        %787 = vmatpush1.bf16.msra.mxu0 0
        %788 = vmatprep.subr.bf16.mxu0 0
        %789 = vmatpush1.bf16.msra.mxu0 0
        %790 = vmatprep.subr.bf16.mxu0 0
        %791 = vmatpush1.bf16.msra.mxu0 0
        %792 = vmatprep.subr.bf16.mxu0 0
        %793 = vmatpush1.bf16.msra.mxu0 0
        %794 = vmatprep.subr.bf16.mxu0 0
        %795 = vmatpush1.bf16.msra.mxu0 0
        %796 = vmatprep.subr.bf16.mxu0 0
        %797 = vmatpush1.bf16.msra.mxu0 0
        %798 = vmatprep.subr.bf16.mxu0 0
        %799 = vmatpush1.bf16.msra.mxu0 0
        %800 = vmatprep.subr.bf16.mxu0 0
        %801 = vmatpush1.bf16.msra.mxu0 0
        %802 = vmatprep.subr.bf16.mxu0 0
        %803 = vmatpush1.bf16.msra.mxu0 0
        %804 = vmatprep.subr.bf16.mxu0 0
        %805 = vmatpush1.bf16.msra.mxu0 0
        %806 = vmatprep.subr.bf16.mxu0 0
        %807 = vmatpush1.bf16.msra.mxu0 0
        %808 = vmatprep.subr.bf16.mxu0 0
        %809 = vmatpush1.bf16.msra.mxu0 0
        %810 = vmatprep.mubr.bf16.mxu0 0
        %811 = vmatmul.mubr.bf16.gmra.mrb[0].mxu0 %v772
        %v812 = vpop.f32.mrb[0].mxu0
        %v813 = vadd.f32 0.0, %v812
        %v814 = vpop.f32.mrb[0].mxu0
        %v815 = vpop.f32.mrb[0].mxu0
        %v816 = vpop.f32.mrb[0].mxu0
        %817 = vdwg.mxu0
        %v818 = vadd.f32 %v760, %v813
        %v819 = vrcp.pop %v764
        %v820 = vmul.f32 %v818, %v819
        %821 = vst.msk [vmem:[#allocation3] sm:$0xf] %vm750, %v820
        %v822 = vld [vmem:[#allocation2] sm:$0xf]
        %824 = vrot.lane.b32.xlu0 %v693, 120
        %v825 = vpop.permute.xlu0 %824
        %v827 = vunpack.c.l.b16 %v822
        %v828 = vpack.c.b16 %v827, %v827
        %829 = vrot.lane.b32.xlu0 %v828, 120
        %v830 = vpop.permute.xlu0 %829
        %v832 = vsel %vm695, %v825, 0
        %v835 = vsel %vm695, %v830, 0
        %837 = vmatprep.subr.bf16.mxu0 0
        %838 = vmatpush1.bf16.xpose.msra.mxu0 %v835
        %839 = vmatprep.subr.bf16.mxu0 0
        %840 = vmatpush1.bf16.xpose.msra.mxu0 0
        %841 = vmatprep.subr.bf16.mxu0 0
        %842 = vmatpush1.bf16.xpose.msra.mxu0 0
        %843 = vmatprep.subr.bf16.mxu0 0
        %844 = vmatpush1.bf16.xpose.msra.mxu0 0
        %845 = vmatprep.subr.bf16.mxu0 0
        %846 = vmatpush1.bf16.xpose.msra.mxu0 0
        %847 = vmatprep.subr.bf16.mxu0 0
        %848 = vmatpush1.bf16.xpose.msra.mxu0 0
        %849 = vmatprep.subr.bf16.mxu0 0
        %850 = vmatpush1.bf16.xpose.msra.mxu0 0
        %851 = vmatprep.subr.bf16.mxu0 0
        %852 = vmatpush1.bf16.xpose.msra.mxu0 0
        %853 = vmatprep.subr.bf16.mxu0 0
        %854 = vmatpush1.bf16.xpose.msra.mxu0 0
        %855 = vmatprep.subr.bf16.mxu0 0
        %856 = vmatpush1.bf16.xpose.msra.mxu0 0
        %857 = vmatprep.subr.bf16.mxu0 0
        %858 = vmatpush1.bf16.xpose.msra.mxu0 0
        %859 = vmatprep.subr.bf16.mxu0 0
        %860 = vmatpush1.bf16.xpose.msra.mxu0 0
        %861 = vmatprep.subr.bf16.mxu0 0
        %862 = vmatpush1.bf16.xpose.msra.mxu0 0
        %863 = vmatprep.subr.bf16.mxu0 0
        %864 = vmatpush1.bf16.xpose.msra.mxu0 0
        %865 = vmatprep.subr.bf16.mxu0 0
        %866 = vmatpush1.bf16.xpose.msra.mxu0 0
        %867 = vmatprep.subr.bf16.mxu0 0
        %868 = vmatpush1.bf16.xpose.msra.mxu0 0
        %869 = vmatprep.mubr.bf16.mxu0 0
        %870 = vmatmul.mubr.bf16.gmra.mrb[0].mxu0 %v832
        %v871 = vpop.f32.mrb[0].mxu0
        %v872 = vadd.f32 0.0, %v871
        %v873 = vpop.f32.mrb[0].mxu0
        %v874 = vpop.f32.mrb[0].mxu0
        %v875 = vpop.f32.mrb[0].mxu0
        %876 = vdwg.mxu0
        %v877 = vsel %vm748, -inf, %v872
        %v878 = vsel %vm750, %v877, -inf
        %879 = vmax.xlane.f32.xlu0 %v878
        %v880 = vpop.xlane.xlu0 %879
        %v881 = vsub.f32 -inf, %v880
        %v882 = vmul.f32 %v881, 1.442695
        %v883 = vpow.pop %v882
        %v884 = vsub.f32 %v877, %v880
        %v885 = vmul.f32 %v884, 1.442695
        %v886 = vpow.pop %v885
        %v887 = vmul.f32 %v883, 0.0
        %v888 = vsel %vm750, %v886, 0.0
        %889 = vadd.xlane.f32.xlu0 %v888
        %v890 = vpop.xlane.xlu0 %889
        %v891 = vadd.f32 %v887, %v890
        %v892 = vpack.c.bf16 %v886, %v886
        %893 = vrot.lane.b32.xlu0 %v828, 88
        %v894 = vpop.permute.xlu0 %893
        %v896 = vsel %vm695, %v892, 0
        %v899 = vsel %vm774, %v894, 0
        %901 = vmatprep.subr.bf16.mxu0 0
        %902 = vmatpush1.bf16.msra.mxu0 %v899
        %903 = vmatprep.subr.bf16.mxu0 0
        %904 = vmatpush1.bf16.msra.mxu0 0
        %905 = vmatprep.subr.bf16.mxu0 0
        %906 = vmatpush1.bf16.msra.mxu0 0
        %907 = vmatprep.subr.bf16.mxu0 0
        %908 = vmatpush1.bf16.msra.mxu0 0
        %909 = vmatprep.subr.bf16.mxu0 0
        %910 = vmatpush1.bf16.msra.mxu0 0
        %911 = vmatprep.subr.bf16.mxu0 0
        %912 = vmatpush1.bf16.msra.mxu0 0
        %913 = vmatprep.subr.bf16.mxu0 0
        %914 = vmatpush1.bf16.msra.mxu0 0
        %915 = vmatprep.subr.bf16.mxu0 0
        %916 = vmatpush1.bf16.msra.mxu0 0
        %917 = vmatprep.subr.bf16.mxu0 0
        %918 = vmatpush1.bf16.msra.mxu0 0
        %919 = vmatprep.subr.bf16.mxu0 0
        %920 = vmatpush1.bf16.msra.mxu0 0
        %921 = vmatprep.subr.bf16.mxu0 0
        %922 = vmatpush1.bf16.msra.mxu0 0
        %923 = vmatprep.subr.bf16.mxu0 0
        %924 = vmatpush1.bf16.msra.mxu0 0
        %925 = vmatprep.subr.bf16.mxu0 0
        %926 = vmatpush1.bf16.msra.mxu0 0
        %927 = vmatprep.subr.bf16.mxu0 0
        %928 = vmatpush1.bf16.msra.mxu0 0
        %929 = vmatprep.subr.bf16.mxu0 0
        %930 = vmatpush1.bf16.msra.mxu0 0
        %931 = vmatprep.subr.bf16.mxu0 0
        %932 = vmatpush1.bf16.msra.mxu0 0
        %933 = vmatprep.mubr.bf16.mxu0 0
        %934 = vmatmul.mubr.bf16.gmra.mrb[0].mxu0 %v896
        %v935 = vpop.f32.mrb[0].mxu0
        %v936 = vadd.f32 0.0, %v935
        %v937 = vpop.f32.mrb[0].mxu0
        %v938 = vpop.f32.mrb[0].mxu0
        %v939 = vpop.f32.mrb[0].mxu0
        %940 = vdwg.mxu0
        %v941 = vadd.f32 %v887, %v936
        %v942 = vrcp.pop %v891
        %v943 = vmul.f32 %v941, %v942
        %945 = vrot.lane.b32.xlu0 %v943, 8
        %v946 = vpop.permute.xlu0 %945
        %vm948 = vcmask 126016
        %949 = vst.msk [vmem:[#allocation3] sm:$0xf] %vm948, %v946
        %v950 = vld [vmem:[#allocation2] sm:$0xf]
        %951 = vrot.lane.b32.xlu0 %v693, 112
        %v952 = vpop.permute.xlu0 %951
        %v954 = vunpack.c.l.b16 %v950
        %v955 = vpack.c.b16 %v954, %v954
        %956 = vrot.lane.b32.xlu0 %v955, 112
        %v957 = vpop.permute.xlu0 %956
        %v959 = vsel %vm695, %v952, 0
        %v962 = vsel %vm695, %v957, 0
        %964 = vmatprep.subr.bf16.mxu0 0
        %965 = vmatpush1.bf16.xpose.msra.mxu0 %v962
        %966 = vmatprep.subr.bf16.mxu0 0
        %967 = vmatpush1.bf16.xpose.msra.mxu0 0
        %968 = vmatprep.subr.bf16.mxu0 0
        %969 = vmatpush1.bf16.xpose.msra.mxu0 0
        %970 = vmatprep.subr.bf16.mxu0 0
        %971 = vmatpush1.bf16.xpose.msra.mxu0 0
        %972 = vmatprep.subr.bf16.mxu0 0
        %973 = vmatpush1.bf16.xpose.msra.mxu0 0
        %974 = vmatprep.subr.bf16.mxu0 0
        %975 = vmatpush1.bf16.xpose.msra.mxu0 0
        %976 = vmatprep.subr.bf16.mxu0 0
        %977 = vmatpush1.bf16.xpose.msra.mxu0 0
        %978 = vmatprep.subr.bf16.mxu0 0
        %979 = vmatpush1.bf16.xpose.msra.mxu0 0
        %980 = vmatprep.subr.bf16.mxu0 0
        %981 = vmatpush1.bf16.xpose.msra.mxu0 0
        %982 = vmatprep.subr.bf16.mxu0 0
        %983 = vmatpush1.bf16.xpose.msra.mxu0 0
        %984 = vmatprep.subr.bf16.mxu0 0
        %985 = vmatpush1.bf16.xpose.msra.mxu0 0
        %986 = vmatprep.subr.bf16.mxu0 0
        %987 = vmatpush1.bf16.xpose.msra.mxu0 0
        %988 = vmatprep.subr.bf16.mxu0 0
        %989 = vmatpush1.bf16.xpose.msra.mxu0 0
        %990 = vmatprep.subr.bf16.mxu0 0
        %991 = vmatpush1.bf16.xpose.msra.mxu0 0
        %992 = vmatprep.subr.bf16.mxu0 0
        %993 = vmatpush1.bf16.xpose.msra.mxu0 0
        %994 = vmatprep.subr.bf16.mxu0 0
        %995 = vmatpush1.bf16.xpose.msra.mxu0 0
        %996 = vmatprep.mubr.bf16.mxu0 0
        %997 = vmatmul.mubr.bf16.gmra.mrb[0].mxu0 %v959
        %v998 = vpop.f32.mrb[0].mxu0
        %v999 = vadd.f32 0.0, %v998
        %v1000 = vpop.f32.mrb[0].mxu0
        %v1001 = vpop.f32.mrb[0].mxu0
        %v1002 = vpop.f32.mrb[0].mxu0
        %1003 = vdwg.mxu0
        %v1004 = vsel %vm748, -inf, %v999
        %v1005 = vsel %vm750, %v1004, -inf
        %1006 = vmax.xlane.f32.xlu0 %v1005
        %v1007 = vpop.xlane.xlu0 %1006
        %v1008 = vsub.f32 -inf, %v1007
        %v1009 = vmul.f32 %v1008, 1.442695
        %v1010 = vpow.pop %v1009
        %v1011 = vsub.f32 %v1004, %v1007
        %v1012 = vmul.f32 %v1011, 1.442695
        %v1013 = vpow.pop %v1012
        %v1014 = vmul.f32 %v1010, 0.0
        %v1015 = vsel %vm750, %v1013, 0.0
        %1016 = vadd.xlane.f32.xlu0 %v1015
        %v1017 = vpop.xlane.xlu0 %1016
        %v1018 = vadd.f32 %v1014, %v1017
        %v1019 = vpack.c.bf16 %v1013, %v1013
        %1020 = vrot.lane.b32.xlu0 %v955, 80
        %v1021 = vpop.permute.xlu0 %1020
        %v1023 = vsel %vm695, %v1019, 0
        %v1026 = vsel %vm774, %v1021, 0
        %1028 = vmatprep.subr.bf16.mxu0 0
        %1029 = vmatpush1.bf16.msra.mxu0 %v1026
        %1030 = vmatprep.subr.bf16.mxu0 0
        %1031 = vmatpush1.bf16.msra.mxu0 0
        %1032 = vmatprep.subr.bf16.mxu0 0
        %1033 = vmatpush1.bf16.msra.mxu0 0
        %1034 = vmatprep.subr.bf16.mxu0 0
        %1035 = vmatpush1.bf16.msra.mxu0 0
        %1036 = vmatprep.subr.bf16.mxu0 0
        %1037 = vmatpush1.bf16.msra.mxu0 0
        %1038 = vmatprep.subr.bf16.mxu0 0
        %1039 = vmatpush1.bf16.msra.mxu0 0
        %1040 = vmatprep.subr.bf16.mxu0 0
        %1041 = vmatpush1.bf16.msra.mxu0 0
        %1042 = vmatprep.subr.bf16.mxu0 0
        %1043 = vmatpush1.bf16.msra.mxu0 0
        %1044 = vmatprep.subr.bf16.mxu0 0
        %1045 = vmatpush1.bf16.msra.mxu0 0
        %1046 = vmatprep.subr.bf16.mxu0 0
        %1047 = vmatpush1.bf16.msra.mxu0 0
        %1048 = vmatprep.subr.bf16.mxu0 0
        %1049 = vmatpush1.bf16.msra.mxu0 0
        %1050 = vmatprep.subr.bf16.mxu0 0
        %1051 = vmatpush1.bf16.msra.mxu0 0
        %1052 = vmatprep.subr.bf16.mxu0 0
        %1053 = vmatpush1.bf16.msra.mxu0 0
        %1054 = vmatprep.subr.bf16.mxu0 0
        %1055 = vmatpush1.bf16.msra.mxu0 0
        %1056 = vmatprep.subr.bf16.mxu0 0
        %1057 = vmatpush1.bf16.msra.mxu0 0
        %1058 = vmatprep.subr.bf16.mxu0 0
        %1059 = vmatpush1.bf16.msra.mxu0 0
        %1060 = vmatprep.mubr.bf16.mxu0 0
        %1061 = vmatmul.mubr.bf16.gmra.mrb[0].mxu0 %v1023
        %v1062 = vpop.f32.mrb[0].mxu0
        %v1063 = vadd.f32 0.0, %v1062
        %v1064 = vpop.f32.mrb[0].mxu0
        %v1065 = vpop.f32.mrb[0].mxu0
        %v1066 = vpop.f32.mrb[0].mxu0
        %1067 = vdwg.mxu0
        %v1068 = vadd.f32 %v1014, %v1063
        %v1069 = vrcp.pop %v1018
        %v1070 = vmul.f32 %v1068, %v1069
        %1072 = vrot.lane.b32.xlu0 %v1070, 16
        %v1073 = vpop.permute.xlu0 %1072
        %vm1075 = vcmask 191616
        %1076 = vst.msk [vmem:[#allocation3] sm:$0xf] %vm1075, %v1073
        %v1077 = vld [vmem:[#allocation2] sm:$0xf]
        %1078 = vrot.lane.b32.xlu0 %v693, 104
        %v1079 = vpop.permute.xlu0 %1078
        %v1081 = vunpack.c.l.b16 %v1077
        %v1082 = vpack.c.b16 %v1081, %v1081
        %1083 = vrot.lane.b32.xlu0 %v1082, 104
        %v1084 = vpop.permute.xlu0 %1083
        %v1086 = vsel %vm695, %v1079, 0
        %v1089 = vsel %vm695, %v1084, 0
        %1091 = vmatprep.subr.bf16.mxu0 0
        %1092 = vmatpush1.bf16.xpose.msra.mxu0 %v1089
        %1093 = vmatprep.subr.bf16.mxu0 0
        %1094 = vmatpush1.bf16.xpose.msra.mxu0 0
        %1095 = vmatprep.subr.bf16.mxu0 0
        %1096 = vmatpush1.bf16.xpose.msra.mxu0 0
        %1097 = vmatprep.subr.bf16.mxu0 0
        %1098 = vmatpush1.bf16.xpose.msra.mxu0 0
        %1099 = vmatprep.subr.bf16.mxu0 0
        %1100 = vmatpush1.bf16.xpose.msra.mxu0 0
        %1101 = vmatprep.subr.bf16.mxu0 0
        %1102 = vmatpush1.bf16.xpose.msra.mxu0 0
        %1103 = vmatprep.subr.bf16.mxu0 0
        %1104 = vmatpush1.bf16.xpose.msra.mxu0 0
        %1105 = vmatprep.subr.bf16.mxu0 0
        %1106 = vmatpush1.bf16.xpose.msra.mxu0 0
        %1107 = vmatprep.subr.bf16.mxu0 0
        %1108 = vmatpush1.bf16.xpose.msra.mxu0 0
        %1109 = vmatprep.subr.bf16.mxu0 0
        %1110 = vmatpush1.bf16.xpose.msra.mxu0 0
        %1111 = vmatprep.subr.bf16.mxu0 0
        %1112 = vmatpush1.bf16.xpose.msra.mxu0 0
        %1113 = vmatprep.subr.bf16.mxu0 0
        %1114 = vmatpush1.bf16.xpose.msra.mxu0 0
        %1115 = vmatprep.subr.bf16.mxu0 0
        %1116 = vmatpush1.bf16.xpose.msra.mxu0 0
        %1117 = vmatprep.subr.bf16.mxu0 0
        %1118 = vmatpush1.bf16.xpose.msra.mxu0 0
        %1119 = vmatprep.subr.bf16.mxu0 0
        %1120 = vmatpush1.bf16.xpose.msra.mxu0 0
        %1121 = vmatprep.subr.bf16.mxu0 0
        %1122 = vmatpush1.bf16.xpose.msra.mxu0 0
        %1123 = vmatprep.mubr.bf16.mxu0 0
        %1124 = vmatmul.mubr.bf16.gmra.mrb[0].mxu0 %v1086
        %v1125 = vpop.f32.mrb[0].mxu0
        %v1126 = vadd.f32 0.0, %v1125
        %v1127 = vpop.f32.mrb[0].mxu0
        %v1128 = vpop.f32.mrb[0].mxu0
        %v1129 = vpop.f32.mrb[0].mxu0
        %1130 = vdwg.mxu0
        %v1131 = vsel %vm748, -inf, %v1126
        %v1132 = vsel %vm750, %v1131, -inf
        %1133 = vmax.xlane.f32.xlu0 %v1132
        %v1134 = vpop.xlane.xlu0 %1133
        %v1135 = vsub.f32 -inf, %v1134
        %v1136 = vmul.f32 %v1135, 1.442695
        %v1137 = vpow.pop %v1136
        %v1138 = vsub.f32 %v1131, %v1134
        %v1139 = vmul.f32 %v1138, 1.442695
        %v1140 = vpow.pop %v1139
        %v1141 = vmul.f32 %v1137, 0.0
        %v1142 = vsel %vm750, %v1140, 0.0
        %1143 = vadd.xlane.f32.xlu0 %v1142
        %v1144 = vpop.xlane.xlu0 %1143
        %v1145 = vadd.f32 %v1141, %v1144
        %v1146 = vpack.c.bf16 %v1140, %v1140
        %1147 = vrot.lane.b32.xlu0 %v1082, 72
        %v1148 = vpop.permute.xlu0 %1147
        %v1150 = vsel %vm695, %v1146, 0
        %v1153 = vsel %vm774, %v1148, 0
        %1155 = vmatprep.subr.bf16.mxu0 0
        %1156 = vmatpush1.bf16.msra.mxu0 %v1153
        %1157 = vmatprep.subr.bf16.mxu0 0
        %1158 = vmatpush1.bf16.msra.mxu0 0
        %1159 = vmatprep.subr.bf16.mxu0 0
        %1160 = vmatpush1.bf16.msra.mxu0 0
        %1161 = vmatprep.subr.bf16.mxu0 0
        %1162 = vmatpush1.bf16.msra.mxu0 0
        %1163 = vmatprep.subr.bf16.mxu0 0
        %1164 = vmatpush1.bf16.msra.mxu0 0
        %1165 = vmatprep.subr.bf16.mxu0 0
        %1166 = vmatpush1.bf16.msra.mxu0 0
        %1167 = vmatprep.subr.bf16.mxu0 0
        %1168 = vmatpush1.bf16.msra.mxu0 0
        %1169 = vmatprep.subr.bf16.mxu0 0
        %1170 = vmatpush1.bf16.msra.mxu0 0
        %1171 = vmatprep.subr.bf16.mxu0 0
        %1172 = vmatpush1.bf16.msra.mxu0 0
        %1173 = vmatprep.subr.bf16.mxu0 0
        %1174 = vmatpush1.bf16.msra.mxu0 0
        %1175 = vmatprep.subr.bf16.mxu0 0
        %1176 = vmatpush1.bf16.msra.mxu0 0
        %1177 = vmatprep.subr.bf16.mxu0 0
        %1178 = vmatpush1.bf16.msra.mxu0 0
        %1179 = vmatprep.subr.bf16.mxu0 0
        %1180 = vmatpush1.bf16.msra.mxu0 0
        %1181 = vmatprep.subr.bf16.mxu0 0
        %1182 = vmatpush1.bf16.msra.mxu0 0
        %1183 = vmatprep.subr.bf16.mxu0 0
        %1184 = vmatpush1.bf16.msra.mxu0 0
        %1185 = vmatprep.subr.bf16.mxu0 0
        %1186 = vmatpush1.bf16.msra.mxu0 0
        %1187 = vmatprep.mubr.bf16.mxu0 0
        %1188 = vmatmul.mubr.bf16.gmra.mrb[0].mxu0 %v1150
        %v1189 = vpop.f32.mrb[0].mxu0
        %v1190 = vadd.f32 0.0, %v1189
        %v1191 = vpop.f32.mrb[0].mxu0
        %v1192 = vpop.f32.mrb[0].mxu0
        %v1193 = vpop.f32.mrb[0].mxu0
        %1194 = vdwg.mxu0
        %v1195 = vadd.f32 %v1141, %v1190
        %v1196 = vrcp.pop %v1145
        %v1197 = vmul.f32 %v1195, %v1196
        %1199 = vrot.lane.b32.xlu0 %v1197, 24
        %v1200 = vpop.permute.xlu0 %1199
        %vm1202 = vcmask 257216
        %1203 = vst.msk [vmem:[#allocation3] sm:$0xf] %vm1202, %v1200
        %s1204 = scalar_lea.vmem [#allocation2], 4
        %v1205 = vld [vmem:[%s1204] sm:$0xf]
        %v1206 = vrot.slane %v693, 2
        %v1208 = vsel %vm695, %v1206, 0
        %v1211 = vsel %vm695, %v1205, 0
        %1213 = vmatprep.subr.bf16.mxu0 0
        %1214 = vmatpush1.bf16.xpose.msra.mxu0 %v1211
        %1215 = vmatprep.subr.bf16.mxu0 0
        %1216 = vmatpush1.bf16.xpose.msra.mxu0 0
        %1217 = vmatprep.subr.bf16.mxu0 0
        %1218 = vmatpush1.bf16.xpose.msra.mxu0 0
        %1219 = vmatprep.subr.bf16.mxu0 0
        %1220 = vmatpush1.bf16.xpose.msra.mxu0 0
        %1221 = vmatprep.subr.bf16.mxu0 0
        %1222 = vmatpush1.bf16.xpose.msra.mxu0 0
        %1223 = vmatprep.subr.bf16.mxu0 0
        %1224 = vmatpush1.bf16.xpose.msra.mxu0 0
        %1225 = vmatprep.subr.bf16.mxu0 0
        %1226 = vmatpush1.bf16.xpose.msra.mxu0 0
        %1227 = vmatprep.subr.bf16.mxu0 0
        %1228 = vmatpush1.bf16.xpose.msra.mxu0 0
        %1229 = vmatprep.subr.bf16.mxu0 0
        %1230 = vmatpush1.bf16.xpose.msra.mxu0 0
        %1231 = vmatprep.subr.bf16.mxu0 0
        %1232 = vmatpush1.bf16.xpose.msra.mxu0 0
        %1233 = vmatprep.subr.bf16.mxu0 0
        %1234 = vmatpush1.bf16.xpose.msra.mxu0 0
        %1235 = vmatprep.subr.bf16.mxu0 0
        %1236 = vmatpush1.bf16.xpose.msra.mxu0 0
        %1237 = vmatprep.subr.bf16.mxu0 0
        %1238 = vmatpush1.bf16.xpose.msra.mxu0 0
        %1239 = vmatprep.subr.bf16.mxu0 0
        %1240 = vmatpush1.bf16.xpose.msra.mxu0 0
        %1241 = vmatprep.subr.bf16.mxu0 0
        %1242 = vmatpush1.bf16.xpose.msra.mxu0 0
        %1243 = vmatprep.subr.bf16.mxu0 0
        %1244 = vmatpush1.bf16.xpose.msra.mxu0 0
        %1245 = vmatprep.mubr.bf16.mxu0 0
        %1246 = vmatmul.mubr.bf16.gmra.mrb[0].mxu0 %v1208
        %v1247 = vpop.f32.mrb[0].mxu0
        %v1248 = vadd.f32 0.0, %v1247
        %v1249 = vpop.f32.mrb[0].mxu0
        %v1250 = vpop.f32.mrb[0].mxu0
        %v1251 = vpop.f32.mrb[0].mxu0
        %1252 = vdwg.mxu0
        %v1253 = vsel %vm748, -inf, %v1248
        %v1254 = vsel %vm750, %v1253, -inf
        %1255 = vmax.xlane.f32.xlu0 %v1254
        %v1256 = vpop.xlane.xlu0 %1255
        %v1257 = vsub.f32 -inf, %v1256
        %v1258 = vmul.f32 %v1257, 1.442695
        %v1259 = vpow.pop %v1258
        %v1260 = vsub.f32 %v1253, %v1256
        %v1261 = vmul.f32 %v1260, 1.442695
        %v1262 = vpow.pop %v1261
        %v1263 = vmul.f32 %v1259, 0.0
        %v1264 = vsel %vm750, %v1262, 0.0
        %1265 = vadd.xlane.f32.xlu0 %v1264
        %v1266 = vpop.xlane.xlu0 %1265
        %v1267 = vadd.f32 %v1263, %v1266
        %v1268 = vpack.c.bf16 %v1262, %v1262
        %v1270 = vunpack.c.l.b16 %v1205
        %v1271 = vpack.c.b16 %v1270, %v1270
        %1272 = vrot.lane.b32.xlu0 %v1271, 96
        %v1273 = vpop.permute.xlu0 %1272
        %v1275 = vsel %vm695, %v1268, 0
        %v1278 = vsel %vm774, %v1273, 0
        %1280 = vmatprep.subr.bf16.mxu0 0
        %1281 = vmatpush1.bf16.msra.mxu0 %v1278
        %1282 = vmatprep.subr.bf16.mxu0 0
        %1283 = vmatpush1.bf16.msra.mxu0 0
        %1284 = vmatprep.subr.bf16.mxu0 0
        %1285 = vmatpush1.bf16.msra.mxu0 0
        %1286 = vmatprep.subr.bf16.mxu0 0
        %1287 = vmatpush1.bf16.msra.mxu0 0
        %1288 = vmatprep.subr.bf16.mxu0 0
        %1289 = vmatpush1.bf16.msra.mxu0 0
        %1290 = vmatprep.subr.bf16.mxu0 0
        %1291 = vmatpush1.bf16.msra.mxu0 0
        %1292 = vmatprep.subr.bf16.mxu0 0
        %1293 = vmatpush1.bf16.msra.mxu0 0
        %1294 = vmatprep.subr.bf16.mxu0 0
        %1295 = vmatpush1.bf16.msra.mxu0 0
        %1296 = vmatprep.subr.bf16.mxu0 0
        %1297 = vmatpush1.bf16.msra.mxu0 0
        %1298 = vmatprep.subr.bf16.mxu0 0
        %1299 = vmatpush1.bf16.msra.mxu0 0
        %1300 = vmatprep.subr.bf16.mxu0 0
        %1301 = vmatpush1.bf16.msra.mxu0 0
        %1302 = vmatprep.subr.bf16.mxu0 0
        %1303 = vmatpush1.bf16.msra.mxu0 0
        %1304 = vmatprep.subr.bf16.mxu0 0
        %1305 = vmatpush1.bf16.msra.mxu0 0
        %1306 = vmatprep.subr.bf16.mxu0 0
        %1307 = vmatpush1.bf16.msra.mxu0 0
        %1308 = vmatprep.subr.bf16.mxu0 0
        %1309 = vmatpush1.bf16.msra.mxu0 0
        %1310 = vmatprep.subr.bf16.mxu0 0
        %1311 = vmatpush1.bf16.msra.mxu0 0
        %1312 = vmatprep.mubr.bf16.mxu0 0
        %1313 = vmatmul.mubr.bf16.gmra.mrb[0].mxu0 %v1275
        %v1314 = vpop.f32.mrb[0].mxu0
        %v1315 = vadd.f32 0.0, %v1314
        %v1316 = vpop.f32.mrb[0].mxu0
        %v1317 = vpop.f32.mrb[0].mxu0
        %v1318 = vpop.f32.mrb[0].mxu0
        %1319 = vdwg.mxu0
        %v1320 = vadd.f32 %v1263, %v1315
        %v1321 = vrcp.pop %v1267
        %v1322 = vmul.f32 %v1320, %v1321
        %1323 = vst.msk [vmem:[#allocation3 + $0x4] sm:$0xf] %vm750, %v1322
        %v1324 = vld [vmem:[%s1204] sm:$0xf]
        %1325 = vrot.lane.b32.xlu0 %v1206, 120
        %v1326 = vpop.permute.xlu0 %1325
        %v1328 = vunpack.c.l.b16 %v1324
        %v1329 = vpack.c.b16 %v1328, %v1328
        %1330 = vrot.lane.b32.xlu0 %v1329, 120
        %v1331 = vpop.permute.xlu0 %1330
        %v1333 = vsel %vm695, %v1326, 0
        %v1336 = vsel %vm695, %v1331, 0
        %1338 = vmatprep.subr.bf16.mxu0 0
        %1339 = vmatpush1.bf16.xpose.msra.mxu0 %v1336
        %1340 = vmatprep.subr.bf16.mxu0 0
        %1341 = vmatpush1.bf16.xpose.msra.mxu0 0
        %1342 = vmatprep.subr.bf16.mxu0 0
        %1343 = vmatpush1.bf16.xpose.msra.mxu0 0
        %1344 = vmatprep.subr.bf16.mxu0 0
        %1345 = vmatpush1.bf16.xpose.msra.mxu0 0
        %1346 = vmatprep.subr.bf16.mxu0 0
        %1347 = vmatpush1.bf16.xpose.msra.mxu0 0
        %1348 = vmatprep.subr.bf16.mxu0 0
        %1349 = vmatpush1.bf16.xpose.msra.mxu0 0
        %1350 = vmatprep.subr.bf16.mxu0 0
        %1351 = vmatpush1.bf16.xpose.msra.mxu0 0
        %1352 = vmatprep.subr.bf16.mxu0 0
        %1353 = vmatpush1.bf16.xpose.msra.mxu0 0
        %1354 = vmatprep.subr.bf16.mxu0 0
        %1355 = vmatpush1.bf16.xpose.msra.mxu0 0
        %1356 = vmatprep.subr.bf16.mxu0 0
        %1357 = vmatpush1.bf16.xpose.msra.mxu0 0
        %1358 = vmatprep.subr.bf16.mxu0 0
        %1359 = vmatpush1.bf16.xpose.msra.mxu0 0
        %1360 = vmatprep.subr.bf16.mxu0 0
        %1361 = vmatpush1.bf16.xpose.msra.mxu0 0
        %1362 = vmatprep.subr.bf16.mxu0 0
        %1363 = vmatpush1.bf16.xpose.msra.mxu0 0
        %1364 = vmatprep.subr.bf16.mxu0 0
        %1365 = vmatpush1.bf16.xpose.msra.mxu0 0
        %1366 = vmatprep.subr.bf16.mxu0 0
        %1367 = vmatpush1.bf16.xpose.msra.mxu0 0
        %1368 = vmatprep.subr.bf16.mxu0 0
        %1369 = vmatpush1.bf16.xpose.msra.mxu0 0
        %1370 = vmatprep.mubr.bf16.mxu0 0
        %1371 = vmatmul.mubr.bf16.gmra.mrb[0].mxu0 %v1333
        %v1372 = vpop.f32.mrb[0].mxu0
        %v1373 = vadd.f32 0.0, %v1372
        %v1374 = vpop.f32.mrb[0].mxu0
        %v1375 = vpop.f32.mrb[0].mxu0
        %v1376 = vpop.f32.mrb[0].mxu0
        %1377 = vdwg.mxu0
        %v1378 = vsel %vm748, -inf, %v1373
        %v1379 = vsel %vm750, %v1378, -inf
        %1380 = vmax.xlane.f32.xlu0 %v1379
        %v1381 = vpop.xlane.xlu0 %1380
        %v1382 = vsub.f32 -inf, %v1381
        %v1383 = vmul.f32 %v1382, 1.442695
        %v1384 = vpow.pop %v1383
        %v1385 = vsub.f32 %v1378, %v1381
        %v1386 = vmul.f32 %v1385, 1.442695
        %v1387 = vpow.pop %v1386
        %v1388 = vmul.f32 %v1384, 0.0
        %v1389 = vsel %vm750, %v1387, 0.0
        %1390 = vadd.xlane.f32.xlu0 %v1389
        %v1391 = vpop.xlane.xlu0 %1390
        %v1392 = vadd.f32 %v1388, %v1391
        %v1393 = vpack.c.bf16 %v1387, %v1387
        %1394 = vrot.lane.b32.xlu0 %v1329, 88
        %v1395 = vpop.permute.xlu0 %1394
        %v1397 = vsel %vm695, %v1393, 0
        %v1400 = vsel %vm774, %v1395, 0
        %1402 = vmatprep.subr.bf16.mxu0 0
        %1403 = vmatpush1.bf16.msra.mxu0 %v1400
        %1404 = vmatprep.subr.bf16.mxu0 0
        %1405 = vmatpush1.bf16.msra.mxu0 0
        %1406 = vmatprep.subr.bf16.mxu0 0
        %1407 = vmatpush1.bf16.msra.mxu0 0
        %1408 = vmatprep.subr.bf16.mxu0 0
        %1409 = vmatpush1.bf16.msra.mxu0 0
        %1410 = vmatprep.subr.bf16.mxu0 0
        %1411 = vmatpush1.bf16.msra.mxu0 0
        %1412 = vmatprep.subr.bf16.mxu0 0
        %1413 = vmatpush1.bf16.msra.mxu0 0
        %1414 = vmatprep.subr.bf16.mxu0 0
        %1415 = vmatpush1.bf16.msra.mxu0 0
        %1416 = vmatprep.subr.bf16.mxu0 0
        %1417 = vmatpush1.bf16.msra.mxu0 0
        %1418 = vmatprep.subr.bf16.mxu0 0
        %1419 = vmatpush1.bf16.msra.mxu0 0
        %1420 = vmatprep.subr.bf16.mxu0 0
        %1421 = vmatpush1.bf16.msra.mxu0 0
        %1422 = vmatprep.subr.bf16.mxu0 0
        %1423 = vmatpush1.bf16.msra.mxu0 0
        %1424 = vmatprep.subr.bf16.mxu0 0
        %1425 = vmatpush1.bf16.msra.mxu0 0
        %1426 = vmatprep.subr.bf16.mxu0 0
        %1427 = vmatpush1.bf16.msra.mxu0 0
        %1428 = vmatprep.subr.bf16.mxu0 0
        %1429 = vmatpush1.bf16.msra.mxu0 0
        %1430 = vmatprep.subr.bf16.mxu0 0
        %1431 = vmatpush1.bf16.msra.mxu0 0
        %1432 = vmatprep.subr.bf16.mxu0 0
        %1433 = vmatpush1.bf16.msra.mxu0 0
        %1434 = vmatprep.mubr.bf16.mxu0 0
        %1435 = vmatmul.mubr.bf16.gmra.mrb[0].mxu0 %v1397
        %v1436 = vpop.f32.mrb[0].mxu0
        %v1437 = vadd.f32 0.0, %v1436
        %v1438 = vpop.f32.mrb[0].mxu0
        %v1439 = vpop.f32.mrb[0].mxu0
        %v1440 = vpop.f32.mrb[0].mxu0
        %1441 = vdwg.mxu0
        %v1442 = vadd.f32 %v1388, %v1437
        %v1443 = vrcp.pop %v1392
        %v1444 = vmul.f32 %v1442, %v1443
        %1446 = vrot.lane.b32.xlu0 %v1444, 8
        %v1447 = vpop.permute.xlu0 %1446
        %1449 = vst.msk [vmem:[#allocation3 + $0x4] sm:$0xf] %vm948, %v1447
        %v1450 = vld [vmem:[%s1204] sm:$0xf]
        %1451 = vrot.lane.b32.xlu0 %v1206, 112
        %v1452 = vpop.permute.xlu0 %1451
        %v1454 = vunpack.c.l.b16 %v1450
        %v1455 = vpack.c.b16 %v1454, %v1454
        %1456 = vrot.lane.b32.xlu0 %v1455, 112
        %v1457 = vpop.permute.xlu0 %1456
        %v1459 = vsel %vm695, %v1452, 0
        %v1462 = vsel %vm695, %v1457, 0
        %1464 = vmatprep.subr.bf16.mxu0 0
        %1465 = vmatpush1.bf16.xpose.msra.mxu0 %v1462
        %1466 = vmatprep.subr.bf16.mxu0 0
        %1467 = vmatpush1.bf16.xpose.msra.mxu0 0
        %1468 = vmatprep.subr.bf16.mxu0 0
        %1469 = vmatpush1.bf16.xpose.msra.mxu0 0
        %1470 = vmatprep.subr.bf16.mxu0 0
        %1471 = vmatpush1.bf16.xpose.msra.mxu0 0
        %1472 = vmatprep.subr.bf16.mxu0 0
        %1473 = vmatpush1.bf16.xpose.msra.mxu0 0
        %1474 = vmatprep.subr.bf16.mxu0 0
        %1475 = vmatpush1.bf16.xpose.msra.mxu0 0
        %1476 = vmatprep.subr.bf16.mxu0 0
        %1477 = vmatpush1.bf16.xpose.msra.mxu0 0
        %1478 = vmatprep.subr.bf16.mxu0 0
        %1479 = vmatpush1.bf16.xpose.msra.mxu0 0
        %1480 = vmatprep.subr.bf16.mxu0 0
        %1481 = vmatpush1.bf16.xpose.msra.mxu0 0
        %1482 = vmatprep.subr.bf16.mxu0 0
        %1483 = vmatpush1.bf16.xpose.msra.mxu0 0
        %1484 = vmatprep.subr.bf16.mxu0 0
        %1485 = vmatpush1.bf16.xpose.msra.mxu0 0
        %1486 = vmatprep.subr.bf16.mxu0 0
        %1487 = vmatpush1.bf16.xpose.msra.mxu0 0
        %1488 = vmatprep.subr.bf16.mxu0 0
        %1489 = vmatpush1.bf16.xpose.msra.mxu0 0
        %1490 = vmatprep.subr.bf16.mxu0 0
        %1491 = vmatpush1.bf16.xpose.msra.mxu0 0
        %1492 = vmatprep.subr.bf16.mxu0 0
        %1493 = vmatpush1.bf16.xpose.msra.mxu0 0
        %1494 = vmatprep.subr.bf16.mxu0 0
        %1495 = vmatpush1.bf16.xpose.msra.mxu0 0
        %1496 = vmatprep.mubr.bf16.mxu0 0
        %1497 = vmatmul.mubr.bf16.gmra.mrb[0].mxu0 %v1459
        %v1498 = vpop.f32.mrb[0].mxu0
        %v1499 = vadd.f32 0.0, %v1498
        %v1500 = vpop.f32.mrb[0].mxu0
        %v1501 = vpop.f32.mrb[0].mxu0
        %v1502 = vpop.f32.mrb[0].mxu0
        %1503 = vdwg.mxu0
        %v1504 = vsel %vm748, -inf, %v1499
        %v1505 = vsel %vm750, %v1504, -inf
        %1506 = vmax.xlane.f32.xlu0 %v1505
        %v1507 = vpop.xlane.xlu0 %1506
        %v1508 = vsub.f32 -inf, %v1507
        %v1509 = vmul.f32 %v1508, 1.442695
        %v1510 = vpow.pop %v1509
        %v1511 = vsub.f32 %v1504, %v1507
        %v1512 = vmul.f32 %v1511, 1.442695
        %v1513 = vpow.pop %v1512
        %v1514 = vmul.f32 %v1510, 0.0
        %v1515 = vsel %vm750, %v1513, 0.0
        %1516 = vadd.xlane.f32.xlu0 %v1515
        %v1517 = vpop.xlane.xlu0 %1516
        %v1518 = vadd.f32 %v1514, %v1517
        %v1519 = vpack.c.bf16 %v1513, %v1513
        %1520 = vrot.lane.b32.xlu0 %v1455, 80
        %v1521 = vpop.permute.xlu0 %1520
        %v1523 = vsel %vm695, %v1519, 0
        %v1526 = vsel %vm774, %v1521, 0
        %1528 = vmatprep.subr.bf16.mxu0 0
        %1529 = vmatpush1.bf16.msra.mxu0 %v1526
        %1530 = vmatprep.subr.bf16.mxu0 0
        %1531 = vmatpush1.bf16.msra.mxu0 0
        %1532 = vmatprep.subr.bf16.mxu0 0
        %1533 = vmatpush1.bf16.msra.mxu0 0
        %1534 = vmatprep.subr.bf16.mxu0 0
        %1535 = vmatpush1.bf16.msra.mxu0 0
        %1536 = vmatprep.subr.bf16.mxu0 0
        %1537 = vmatpush1.bf16.msra.mxu0 0
        %1538 = vmatprep.subr.bf16.mxu0 0
        %1539 = vmatpush1.bf16.msra.mxu0 0
        %1540 = vmatprep.subr.bf16.mxu0 0
        %1541 = vmatpush1.bf16.msra.mxu0 0
        %1542 = vmatprep.subr.bf16.mxu0 0
        %1543 = vmatpush1.bf16.msra.mxu0 0
        %1544 = vmatprep.subr.bf16.mxu0 0
        %1545 = vmatpush1.bf16.msra.mxu0 0
        %1546 = vmatprep.subr.bf16.mxu0 0
        %1547 = vmatpush1.bf16.msra.mxu0 0
        %1548 = vmatprep.subr.bf16.mxu0 0
        %1549 = vmatpush1.bf16.msra.mxu0 0
        %1550 = vmatprep.subr.bf16.mxu0 0
        %1551 = vmatpush1.bf16.msra.mxu0 0
        %1552 = vmatprep.subr.bf16.mxu0 0
        %1553 = vmatpush1.bf16.msra.mxu0 0
        %1554 = vmatprep.subr.bf16.mxu0 0
        %1555 = vmatpush1.bf16.msra.mxu0 0
        %1556 = vmatprep.subr.bf16.mxu0 0
        %1557 = vmatpush1.bf16.msra.mxu0 0
        %1558 = vmatprep.subr.bf16.mxu0 0
        %1559 = vmatpush1.bf16.msra.mxu0 0
        %1560 = vmatprep.mubr.bf16.mxu0 0
        %1561 = vmatmul.mubr.bf16.gmra.mrb[0].mxu0 %v1523
        %v1562 = vpop.f32.mrb[0].mxu0
        %v1563 = vadd.f32 0.0, %v1562
        %v1564 = vpop.f32.mrb[0].mxu0
        %v1565 = vpop.f32.mrb[0].mxu0
        %v1566 = vpop.f32.mrb[0].mxu0
        %1567 = vdwg.mxu0
        %v1568 = vadd.f32 %v1514, %v1563
        %v1569 = vrcp.pop %v1518
        %v1570 = vmul.f32 %v1568, %v1569
        %1572 = vrot.lane.b32.xlu0 %v1570, 16
        %v1573 = vpop.permute.xlu0 %1572
        %1575 = vst.msk [vmem:[#allocation3 + $0x4] sm:$0xf] %vm1075, %v1573
        %v1576 = vld [vmem:[%s1204] sm:$0xf]
        %1577 = vrot.lane.b32.xlu0 %v1206, 104
        %v1578 = vpop.permute.xlu0 %1577
        %v1580 = vunpack.c.l.b16 %v1576
        %v1581 = vpack.c.b16 %v1580, %v1580
        %1582 = vrot.lane.b32.xlu0 %v1581, 104
        %v1583 = vpop.permute.xlu0 %1582
        %v1585 = vsel %vm695, %v1578, 0
        %v1588 = vsel %vm695, %v1583, 0
        %1590 = vmatprep.subr.bf16.mxu0 0
        %1591 = vmatpush1.bf16.xpose.msra.mxu0 %v1588
        %1592 = vmatprep.subr.bf16.mxu0 0
        %1593 = vmatpush1.bf16.xpose.msra.mxu0 0
        %1594 = vmatprep.subr.bf16.mxu0 0
        %1595 = vmatpush1.bf16.xpose.msra.mxu0 0
        %1596 = vmatprep.subr.bf16.mxu0 0
        %1597 = vmatpush1.bf16.xpose.msra.mxu0 0
        %1598 = vmatprep.subr.bf16.mxu0 0
        %1599 = vmatpush1.bf16.xpose.msra.mxu0 0
        %1600 = vmatprep.subr.bf16.mxu0 0
        %1601 = vmatpush1.bf16.xpose.msra.mxu0 0
        %1602 = vmatprep.subr.bf16.mxu0 0
        %1603 = vmatpush1.bf16.xpose.msra.mxu0 0
        %1604 = vmatprep.subr.bf16.mxu0 0
        %1605 = vmatpush1.bf16.xpose.msra.mxu0 0
        %1606 = vmatprep.subr.bf16.mxu0 0
        %1607 = vmatpush1.bf16.xpose.msra.mxu0 0
        %1608 = vmatprep.subr.bf16.mxu0 0
        %1609 = vmatpush1.bf16.xpose.msra.mxu0 0
        %1610 = vmatprep.subr.bf16.mxu0 0
        %1611 = vmatpush1.bf16.xpose.msra.mxu0 0
        %1612 = vmatprep.subr.bf16.mxu0 0
        %1613 = vmatpush1.bf16.xpose.msra.mxu0 0
        %1614 = vmatprep.subr.bf16.mxu0 0
        %1615 = vmatpush1.bf16.xpose.msra.mxu0 0
        %1616 = vmatprep.subr.bf16.mxu0 0
        %1617 = vmatpush1.bf16.xpose.msra.mxu0 0
        %1618 = vmatprep.subr.bf16.mxu0 0
        %1619 = vmatpush1.bf16.xpose.msra.mxu0 0
        %1620 = vmatprep.subr.bf16.mxu0 0
        %1621 = vmatpush1.bf16.xpose.msra.mxu0 0
        %1622 = vmatprep.mubr.bf16.mxu0 0
        %1623 = vmatmul.mubr.bf16.gmra.mrb[0].mxu0 %v1585
        %v1624 = vpop.f32.mrb[0].mxu0
        %v1625 = vadd.f32 0.0, %v1624
        %v1626 = vpop.f32.mrb[0].mxu0
        %v1627 = vpop.f32.mrb[0].mxu0
        %v1628 = vpop.f32.mrb[0].mxu0
        %1629 = vdwg.mxu0
        %v1630 = vsel %vm748, -inf, %v1625
        %v1631 = vsel %vm750, %v1630, -inf
        %1632 = vmax.xlane.f32.xlu0 %v1631
        %v1633 = vpop.xlane.xlu0 %1632
        %v1634 = vsub.f32 -inf, %v1633
        %v1635 = vmul.f32 %v1634, 1.442695
        %v1636 = vpow.pop %v1635
        %v1637 = vsub.f32 %v1630, %v1633
        %v1638 = vmul.f32 %v1637, 1.442695
        %v1639 = vpow.pop %v1638
        %v1640 = vmul.f32 %v1636, 0.0
        %v1641 = vsel %vm750, %v1639, 0.0
        %1642 = vadd.xlane.f32.xlu0 %v1641
        %v1643 = vpop.xlane.xlu0 %1642
        %v1644 = vadd.f32 %v1640, %v1643
        %v1645 = vpack.c.bf16 %v1639, %v1639
        %1646 = vrot.lane.b32.xlu0 %v1581, 72
        %v1647 = vpop.permute.xlu0 %1646
        %v1649 = vsel %vm695, %v1645, 0
        %v1652 = vsel %vm774, %v1647, 0
        %1654 = vmatprep.subr.bf16.mxu0 0
        %1655 = vmatpush1.bf16.msra.mxu0 %v1652
        %1656 = vmatprep.subr.bf16.mxu0 0
        %1657 = vmatpush1.bf16.msra.mxu0 0
        %1658 = vmatprep.subr.bf16.mxu0 0
        %1659 = vmatpush1.bf16.msra.mxu0 0
        %1660 = vmatprep.subr.bf16.mxu0 0
        %1661 = vmatpush1.bf16.msra.mxu0 0
        %1662 = vmatprep.subr.bf16.mxu0 0
        %1663 = vmatpush1.bf16.msra.mxu0 0
        %1664 = vmatprep.subr.bf16.mxu0 0
        %1665 = vmatpush1.bf16.msra.mxu0 0
        %1666 = vmatprep.subr.bf16.mxu0 0
        %1667 = vmatpush1.bf16.msra.mxu0 0
        %1668 = vmatprep.subr.bf16.mxu0 0
        %1669 = vmatpush1.bf16.msra.mxu0 0
        %1670 = vmatprep.subr.bf16.mxu0 0
        %1671 = vmatpush1.bf16.msra.mxu0 0
        %1672 = vmatprep.subr.bf16.mxu0 0
        %1673 = vmatpush1.bf16.msra.mxu0 0
        %1674 = vmatprep.subr.bf16.mxu0 0
        %1675 = vmatpush1.bf16.msra.mxu0 0
        %1676 = vmatprep.subr.bf16.mxu0 0
        %1677 = vmatpush1.bf16.msra.mxu0 0
        %1678 = vmatprep.subr.bf16.mxu0 0
        %1679 = vmatpush1.bf16.msra.mxu0 0
        %1680 = vmatprep.subr.bf16.mxu0 0
        %1681 = vmatpush1.bf16.msra.mxu0 0
        %1682 = vmatprep.subr.bf16.mxu0 0
        %1683 = vmatpush1.bf16.msra.mxu0 0
        %1684 = vmatprep.subr.bf16.mxu0 0
        %1685 = vmatpush1.bf16.msra.mxu0 0
        %1686 = vmatprep.mubr.bf16.mxu0 0
        %1687 = vmatmul.mubr.bf16.gmra.mrb[0].mxu0 %v1649
        %v1688 = vpop.f32.mrb[0].mxu0
        %v1689 = vadd.f32 0.0, %v1688
        %v1690 = vpop.f32.mrb[0].mxu0
        %v1691 = vpop.f32.mrb[0].mxu0
        %v1692 = vpop.f32.mrb[0].mxu0
        %1693 = vdwg.mxu0
        %v1694 = vadd.f32 %v1640, %v1689
        %v1695 = vrcp.pop %v1644
        %v1696 = vmul.f32 %v1694, %v1695
        %1698 = vrot.lane.b32.xlu0 %v1696, 24
        %v1699 = vpop.permute.xlu0 %1698
        %1701 = vst.msk [vmem:[#allocation3 + $0x4] sm:$0xf] %vm1202, %v1699
        %v1702 = vld [vmem:[#allocation3] sm:$0xff]
        %v1703 = vpack.c.bf16 %v1702, %v1702
        %v1704 = vld [vmem:[%s3] sm:$0xf]
        %v1705 = vld [vmem:[%s3 + $0x4] sm:$0xf]
        %v1706 = vld [vmem:[%s3 + $0x8] sm:$0xf]
        %v1707 = vld [vmem:[%s3 + $0xc] sm:$0xf]
        %v1708 = vld [vmem:[%s4] sm:$0x1]
        %v1710 = vlaneseq
        %v1711 = vshrl.u32 %v1710, 7
        %v1712 = vsub.s32 0, %v1711
        %v1713 = vrot.slane %v1708, %v1712
        %v1719 = vunpack.c.l.b16 %v1704
        %v1720 = vunpack.c.l.b16 %v1705
        %v1721 = vunpack.c.l.b16 %v1706
        %v1722 = vunpack.c.l.b16 %v1707
        %v1723 = vpack.c.b16 %v1720, %v1719
        %v1724 = vpack.c.b16 %v1722, %v1721
        %v1728 = vsel %vm572, %v1703, 0
        %1730 = vmatprep.subr.bf16.mxu0 0
        %1731 = vmatpush1.bf16.msra.mxu0 %v1723
        %1732 = vmatprep.subr.bf16.mxu0 0
        %1733 = vmatpush1.bf16.msra.mxu0 %v1724
        %1734 = vmatprep.subr.bf16.mxu0 0
        %1735 = vmatpush1.bf16.msra.mxu0 0
        %1736 = vmatprep.subr.bf16.mxu0 0
        %1737 = vmatpush1.bf16.msra.mxu0 0
        %1738 = vmatprep.subr.bf16.mxu0 0
        %1739 = vmatpush1.bf16.msra.mxu0 0
        %1740 = vmatprep.subr.bf16.mxu0 0
        %1741 = vmatpush1.bf16.msra.mxu0 0
        %1742 = vmatprep.subr.bf16.mxu0 0
        %1743 = vmatpush1.bf16.msra.mxu0 0
        %1744 = vmatprep.subr.bf16.mxu0 0
        %1745 = vmatpush1.bf16.msra.mxu0 0
        %1746 = vmatprep.subr.bf16.mxu0 0
        %1747 = vmatpush1.bf16.msra.mxu0 0
        %1748 = vmatprep.subr.bf16.mxu0 0
        %1749 = vmatpush1.bf16.msra.mxu0 0
        %1750 = vmatprep.subr.bf16.mxu0 0
        %1751 = vmatpush1.bf16.msra.mxu0 0
        %1752 = vmatprep.subr.bf16.mxu0 0
        %1753 = vmatpush1.bf16.msra.mxu0 0
        %1754 = vmatprep.subr.bf16.mxu0 0
        %1755 = vmatpush1.bf16.msra.mxu0 0
        %1756 = vmatprep.subr.bf16.mxu0 0
        %1757 = vmatpush1.bf16.msra.mxu0 0
        %1758 = vmatprep.subr.bf16.mxu0 0
        %1759 = vmatpush1.bf16.msra.mxu0 0
        %1760 = vmatprep.subr.bf16.mxu0 0
        %1761 = vmatpush1.bf16.msra.mxu0 0
        %1762 = vmatprep.mubr.bf16.mxu0 0
        %1763 = vmatmul.mubr.bf16.gmra.mrb[0].mxu0 %v1728
        %v1764 = vpop.f32.mrb[0].mxu0
        %v1765 = vadd.f32 %v1713, %v1764
        %v1766 = vpop.f32.mrb[0].mxu0
        %v1767 = vpop.f32.mrb[0].mxu0
        %v1768 = vpop.f32.mrb[0].mxu0
        %1769 = vdwg.mxu0
        %v1771 = vcombine.high %v1765, %v1765
        %v1773 = vadd.f32 %v540, %v1765
        %v1774 = vadd.f32 %v541, %v1771
        %v1775 = vld [vmem:[%s5] sm:$0x1]
        %v1776 = vld [vmem:[%s6] sm:$0x1]
        %v1779 = vcombine.low %v1773, %v1774
        %v1781 = vsel %vm572, %v1779, 0.0
        %1782 = vadd.xlane.f32.xlu0 %v1781
        %v1783 = vpop.xlane.xlu0 %1782
        %v1784 = vrcp.pop 32.0
        %v1785 = vmul.f32 %v1783, %v1784
        %v1788 = vunpack.c.l.s4 839922192
        %v1789 = vunpack.c.0.s8 %v1788
        %v1790 = vlaneseq
        %v1791 = vshrl.u32 %v1790, 7
        %v1792 = vsub.s32 %v1789, %v1791
        %v1793 = vrot.slane %v1785, %v1792
        %v1795 = vunpack.c.l.s4 1985246804
        %v1796 = vunpack.c.0.s8 %v1795
        %v1797 = vlaneseq
        %v1798 = vshrl.u32 %v1797, 7
        %v1799 = vsub.s32 %v1796, %v1798
        %v1800 = vrot.slane %v1785, %v1799
        %v1803 = vsub.f32 %v1773, %v1793
        %v1804 = vsub.f32 %v1774, %v1800
        %v1805 = vmul.f32 %v1803, %v1803
        %v1806 = vmul.f32 %v1804, %v1804
        %v1809 = vcombine.low %v1805, %v1806
        %v1811 = vsel %vm572, %v1809, 0.0
        %1812 = vadd.xlane.f32.xlu0 %v1811
        %v1813 = vpop.xlane.xlu0 %1812
        %v1814 = vmul.f32 %v1813, %v1784
        %v1815 = vadd.f32 %v1814, 1e-05
        %v1816 = vrsqrt.pop %v1815
        %v1819 = vunpack.c.l.s4 839922192
        %v1820 = vunpack.c.0.s8 %v1819
        %v1821 = vlaneseq
        %v1822 = vshrl.u32 %v1821, 7
        %v1823 = vsub.s32 %v1820, %v1822
        %v1824 = vrot.slane %v1816, %v1823
        %v1826 = vunpack.c.l.s4 1985246804
        %v1827 = vunpack.c.0.s8 %v1826
        %v1828 = vlaneseq
        %v1829 = vshrl.u32 %v1828, 7
        %v1830 = vsub.s32 %v1827, %v1829
        %v1831 = vrot.slane %v1816, %v1830
        %v1834 = vmul.f32 %v1803, %v1824
        %v1835 = vmul.f32 %v1804, %v1831
        %v1837 = vlaneseq
        %v1838 = vshrl.u32 %v1837, 7
        %v1839 = vsub.s32 0, %v1838
        %v1840 = vrot.slane %v1775, %v1839
        %v1842 = vcombine.high %v1840, %v1840
        %v1844 = vmul.f32 %v1834, %v1840
        %v1845 = vmul.f32 %v1835, %v1842
        %v1847 = vlaneseq
        %v1848 = vshrl.u32 %v1847, 7
        %v1849 = vsub.s32 0, %v1848
        %v1850 = vrot.slane %v1776, %v1849
        %v1852 = vcombine.high %v1850, %v1850
        %v1854 = vadd.f32 %v1844, %v1850
        %v1855 = vadd.f32 %v1845, %v1852
        %v1858 = vcombine.low %v1854, %v1855
        %v1860 = vpack.c.bf16 %v1858, %v1858
        %v1861 = vld [vmem:[%s7] sm:$0xf]
        %v1862 = vld [vmem:[%s7 + $0x4] sm:$0xf]
        %v1863 = vld [vmem:[%s7 + $0x8] sm:$0xf]
        %v1864 = vld [vmem:[%s7 + $0xc] sm:$0xf]
        %v1865 = vld [vmem:[%s8] sm:$0x1]
        %v1867 = vlaneseq
        %v1868 = vshrl.u32 %v1867, 7
        %v1869 = vsub.s32 0, %v1868
        %v1870 = vrot.slane %v1865, %v1869
        %v1876 = vunpack.c.l.b16 %v1861
        %v1877 = vunpack.c.l.b16 %v1862
        %v1878 = vunpack.c.l.b16 %v1863
        %v1879 = vunpack.c.l.b16 %v1864
        %v1880 = vpack.c.b16 %v1877, %v1876
        %v1881 = vpack.c.b16 %v1879, %v1878
        %v1885 = vsel %vm572, %v1860, 0
        %1887 = vmatprep.subr.bf16.mxu0 0
        %1888 = vmatpush1.bf16.msra.mxu0 %v1880
        %1889 = vmatprep.subr.bf16.mxu0 0
        %1890 = vmatpush1.bf16.msra.mxu0 %v1881
        %1891 = vmatprep.subr.bf16.mxu0 0
        %1892 = vmatpush1.bf16.msra.mxu0 0
        %1893 = vmatprep.subr.bf16.mxu0 0
        %1894 = vmatpush1.bf16.msra.mxu0 0
        %1895 = vmatprep.subr.bf16.mxu0 0
        %1896 = vmatpush1.bf16.msra.mxu0 0
        %1897 = vmatprep.subr.bf16.mxu0 0
        %1898 = vmatpush1.bf16.msra.mxu0 0
        %1899 = vmatprep.subr.bf16.mxu0 0
        %1900 = vmatpush1.bf16.msra.mxu0 0
        %1901 = vmatprep.subr.bf16.mxu0 0
        %1902 = vmatpush1.bf16.msra.mxu0 0
        %1903 = vmatprep.subr.bf16.mxu0 0
        %1904 = vmatpush1.bf16.msra.mxu0 0
        %1905 = vmatprep.subr.bf16.mxu0 0
        %1906 = vmatpush1.bf16.msra.mxu0 0
        %1907 = vmatprep.subr.bf16.mxu0 0
        %1908 = vmatpush1.bf16.msra.mxu0 0
        %1909 = vmatprep.subr.bf16.mxu0 0
        %1910 = vmatpush1.bf16.msra.mxu0 0
        %1911 = vmatprep.subr.bf16.mxu0 0
        %1912 = vmatpush1.bf16.msra.mxu0 0
        %1913 = vmatprep.subr.bf16.mxu0 0
        %1914 = vmatpush1.bf16.msra.mxu0 0
        %1915 = vmatprep.subr.bf16.mxu0 0
        %1916 = vmatpush1.bf16.msra.mxu0 0
        %1917 = vmatprep.subr.bf16.mxu0 0
        %1918 = vmatpush1.bf16.msra.mxu0 0
        %1919 = vmatprep.mubr.bf16.mxu0 0
        %1920 = vmatmul.mubr.bf16.gmra.mrb[0].mxu0 %v1885
        %v1921 = vpop.f32.mrb[0].mxu0
        %v1922 = vadd.f32 %v1870, %v1921
        %v1923 = vpop.f32.mrb[0].mxu0
        %v1924 = vpop.f32.mrb[0].mxu0
        %v1925 = vpop.f32.mrb[0].mxu0
        %1926 = vdwg.mxu0
        %v1927 = vmul.f32 %v1922, 0.5
        %v1928 = vmul.f32 %v1922, 0.70710677
        %v1929 = verf.f32.pop %v1928
        %v1930 = vadd.f32 %v1929, 1.0
        %v1931 = vmul.f32 %v1927, %v1930
        %v1932 = vpack.c.bf16 %v1931, %v1931
        %v1933 = vld [vmem:[%s9] sm:$0xf]
        %v1934 = vld [vmem:[%s9 + $0x4] sm:$0xf]
        %v1935 = vld [vmem:[%s9 + $0x8] sm:$0xf]
        %v1936 = vld [vmem:[%s9 + $0xc] sm:$0xf]
        %v1937 = vld [vmem:[%s9 + $0x10] sm:$0xf]
        %v1938 = vld [vmem:[%s9 + $0x14] sm:$0xf]
        %v1939 = vld [vmem:[%s9 + $0x18] sm:$0xf]
        %v1940 = vld [vmem:[%s9 + $0x1c] sm:$0xf]
        %v1941 = vld [vmem:[%s9 + $0x20] sm:$0xf]
        %v1942 = vld [vmem:[%s9 + $0x24] sm:$0xf]
        %v1943 = vld [vmem:[%s9 + $0x28] sm:$0xf]
        %v1944 = vld [vmem:[%s9 + $0x2c] sm:$0xf]
        %v1945 = vld [vmem:[%s9 + $0x30] sm:$0xf]
        %v1946 = vld [vmem:[%s9 + $0x34] sm:$0xf]
        %v1947 = vld [vmem:[%s9 + $0x38] sm:$0xf]
        %v1948 = vld [vmem:[%s9 + $0x3c] sm:$0xf]
        %v1949 = vld [vmem:[%s10] sm:$0x1]
        %v1951 = vlaneseq
        %v1952 = vshrl.u32 %v1951, 7
        %v1953 = vsub.s32 0, %v1952
        %v1954 = vrot.slane %v1949, %v1953
        %v1972 = vunpack.c.l.b16 %v1933
        %v1973 = vunpack.c.l.b16 %v1934
        %v1974 = vunpack.c.l.b16 %v1935
        %v1975 = vunpack.c.l.b16 %v1936
        %v1976 = vunpack.c.l.b16 %v1937
        %v1977 = vunpack.c.l.b16 %v1938
        %v1978 = vunpack.c.l.b16 %v1939
        %v1979 = vunpack.c.l.b16 %v1940
        %v1980 = vunpack.c.l.b16 %v1941
        %v1981 = vunpack.c.l.b16 %v1942
        %v1982 = vunpack.c.l.b16 %v1943
        %v1983 = vunpack.c.l.b16 %v1944
        %v1984 = vunpack.c.l.b16 %v1945
        %v1985 = vunpack.c.l.b16 %v1946
        %v1986 = vunpack.c.l.b16 %v1947
        %v1987 = vunpack.c.l.b16 %v1948
        %v1988 = vpack.c.b16 %v1973, %v1972
        %v1989 = vpack.c.b16 %v1975, %v1974
        %v1990 = vpack.c.b16 %v1977, %v1976
        %v1991 = vpack.c.b16 %v1979, %v1978
        %v1992 = vpack.c.b16 %v1981, %v1980
        %v1993 = vpack.c.b16 %v1983, %v1982
        %v1994 = vpack.c.b16 %v1985, %v1984
        %v1995 = vpack.c.b16 %v1987, %v1986
        %2004 = vmatprep.subr.bf16.mxu0 0
        %2005 = vmatpush1.bf16.msra.mxu0 %v1988
        %2006 = vmatprep.subr.bf16.mxu0 0
        %2007 = vmatpush1.bf16.msra.mxu0 %v1989
        %2008 = vmatprep.subr.bf16.mxu0 0
        %2009 = vmatpush1.bf16.msra.mxu0 %v1990
        %2010 = vmatprep.subr.bf16.mxu0 0
        %2011 = vmatpush1.bf16.msra.mxu0 %v1991
        %2012 = vmatprep.subr.bf16.mxu0 0
        %2013 = vmatpush1.bf16.msra.mxu0 %v1992
        %2014 = vmatprep.subr.bf16.mxu0 0
        %2015 = vmatpush1.bf16.msra.mxu0 %v1993
        %2016 = vmatprep.subr.bf16.mxu0 0
        %2017 = vmatpush1.bf16.msra.mxu0 %v1994
        %2018 = vmatprep.subr.bf16.mxu0 0
        %2019 = vmatpush1.bf16.msra.mxu0 %v1995
        %2020 = vmatprep.subr.bf16.mxu0 0
        %2021 = vmatpush1.bf16.msra.mxu0 0
        %2022 = vmatprep.subr.bf16.mxu0 0
        %2023 = vmatpush1.bf16.msra.mxu0 0
        %2024 = vmatprep.subr.bf16.mxu0 0
        %2025 = vmatpush1.bf16.msra.mxu0 0
        %2026 = vmatprep.subr.bf16.mxu0 0
        %2027 = vmatpush1.bf16.msra.mxu0 0
        %2028 = vmatprep.subr.bf16.mxu0 0
        %2029 = vmatpush1.bf16.msra.mxu0 0
        %2030 = vmatprep.subr.bf16.mxu0 0
        %2031 = vmatpush1.bf16.msra.mxu0 0
        %2032 = vmatprep.subr.bf16.mxu0 0
        %2033 = vmatpush1.bf16.msra.mxu0 0
        %2034 = vmatprep.subr.bf16.mxu0 0
        %2035 = vmatpush1.bf16.msra.mxu0 0
        %2036 = vmatprep.mubr.bf16.mxu0 0
        %2037 = vmatmul.mubr.bf16.gmra.mrb[0].mxu0 %v1932
        %v2038 = vpop.f32.mrb[0].mxu0
        %v2039 = vadd.f32 %v1954, %v2038
        %v2040 = vpop.f32.mrb[0].mxu0
        %v2041 = vpop.f32.mrb[0].mxu0
        %v2042 = vpop.f32.mrb[0].mxu0
        %2043 = vdwg.mxu0
        %v2045 = vcombine.high %v2039, %v2039
        %v2047 = vadd.f32 %v1854, %v2039
        %v2048 = vadd.f32 %v1855, %v2045
        %v2049 = vld [vmem:[%s11] sm:$0x1]
        %v2050 = vld [vmem:[%s12] sm:$0x1]
        %v2053 = vcombine.low %v2047, %v2048
        %v2055 = vsel %vm572, %v2053, 0.0
        %2056 = vadd.xlane.f32.xlu0 %v2055
        %v2057 = vpop.xlane.xlu0 %2056
        %v2058 = vmul.f32 %v2057, %v1784
        %v2061 = vunpack.c.l.s4 839922192
        %v2062 = vunpack.c.0.s8 %v2061
        %v2063 = vlaneseq
        %v2064 = vshrl.u32 %v2063, 7
        %v2065 = vsub.s32 %v2062, %v2064
        %v2066 = vrot.slane %v2058, %v2065
        %v2068 = vunpack.c.l.s4 1985246804
        %v2069 = vunpack.c.0.s8 %v2068
        %v2070 = vlaneseq
        %v2071 = vshrl.u32 %v2070, 7
        %v2072 = vsub.s32 %v2069, %v2071
        %v2073 = vrot.slane %v2058, %v2072
        %v2076 = vsub.f32 %v2047, %v2066
        %v2077 = vsub.f32 %v2048, %v2073
        %v2078 = vmul.f32 %v2076, %v2076
        %v2079 = vmul.f32 %v2077, %v2077
        %v2082 = vcombine.low %v2078, %v2079
        %v2084 = vsel %vm572, %v2082, 0.0
        %2085 = vadd.xlane.f32.xlu0 %v2084
        %v2086 = vpop.xlane.xlu0 %2085
        %v2087 = vmul.f32 %v2086, %v1784
        %v2088 = vadd.f32 %v2087, 1e-05
        %v2089 = vrsqrt.pop %v2088
        %v2092 = vunpack.c.l.s4 839922192
        %v2093 = vunpack.c.0.s8 %v2092
        %v2094 = vlaneseq
        %v2095 = vshrl.u32 %v2094, 7
        %v2096 = vsub.s32 %v2093, %v2095
        %v2097 = vrot.slane %v2089, %v2096
        %v2099 = vunpack.c.l.s4 1985246804
        %v2100 = vunpack.c.0.s8 %v2099
        %v2101 = vlaneseq
        %v2102 = vshrl.u32 %v2101, 7
        %v2103 = vsub.s32 %v2100, %v2102
        %v2104 = vrot.slane %v2089, %v2103
        %v2107 = vmul.f32 %v2076, %v2097
        %v2108 = vmul.f32 %v2077, %v2104
        %v2110 = vlaneseq
        %v2111 = vshrl.u32 %v2110, 7
        %v2112 = vsub.s32 0, %v2111
        %v2113 = vrot.slane %v2049, %v2112
        %v2115 = vcombine.high %v2113, %v2113
        %v2117 = vmul.f32 %v2107, %v2113
        %v2118 = vmul.f32 %v2108, %v2115
        %v2120 = vlaneseq
        %v2121 = vshrl.u32 %v2120, 7
        %v2122 = vsub.s32 0, %v2121
        %v2123 = vrot.slane %v2050, %v2122
        %v2125 = vcombine.high %v2123, %v2123
        %v2127 = vadd.f32 %v2117, %v2123
        %v2129 = vunpack.c.l.s4 1983009808
        %v2130 = vunpack.c.0.s8 %v2129
        %v2131 = vlaneseq
        %v2132 = vshrl.u32 %v2131, 7
        %v2133 = vsub.s32 %v2130, %v2132
        %v2134 = vrot.slane %v2127, %v2133
        %v2135 = vadd.f32 %v2118, %v2125
        %v2137 = vunpack.c.l.s4 1983009808
        %v2138 = vunpack.c.0.s8 %v2137
        %v2139 = vlaneseq
        %v2140 = vshrl.u32 %v2139, 7
        %v2141 = vsub.s32 %v2138, %v2140
        %v2142 = vrot.slane %v2135, %v2141
        %v2143 = vcombine.low %v2134, %v2142
        %v2144 = vcombine.high %v2134, %v2142
        %v2146 = vunpack.c.l.s4 1934713408
        %v2147 = vunpack.c.0.s8 %v2146
        %v2148 = vlaneseq
        %v2149 = vshrl.u32 %v2148, 7
        %v2150 = vsub.s32 %v2147, %v2149
        %v2151 = vrot.slane %v2143, %v2150
        %v2153 = vunpack.c.l.s4 1934713408
        %v2154 = vunpack.c.0.s8 %v2153
        %v2155 = vlaneseq
        %v2156 = vshrl.u32 %v2155, 7
        %v2157 = vsub.s32 %v2154, %v2156
        %v2158 = vrot.slane %v2144, %v2157
        %v2159 = vcombine.high %v2151, 0.0
        %v2160 = vcombine.high %v2158, 0.0
        %vm2161 = vcmask 254976
        %2162 = vst.msk [vmem:[%s445] sm:$0x3] %vm2161, %v2151
        %2163 = vst.msk [vmem:[%s445 + $0x2] sm:$0x3] %vm2161, %v2159
        %2164 = vst.msk [vmem:[%s445 + $0x4] sm:$0x3] %vm2161, %v2158
        %2165 = vst.msk [vmem:[%s445 + $0x6] sm:$0x3] %vm2161, %v2160
        %s2166 = sand.u32 %s327, 1
        %s2167 = scalar_lea.sflag [#allocation6], %s2166
        %s2168 = sand.u32 %s327, 1
        %s2169 = smul.addr %s2168, 8
        %s2170 = scalar_lea.vmem [#allocation5], %s2169
        // Predicated region
        $region73: #{tpu_custom_call.1} parent=71 // pred_check
          %p2171 = pneg %p337
        $region74: #{tpu_custom_call.1} parent=71 // pred_check_branch
          %2173 = sbr.rel (%p2171) target = $region76
        $region75: #{tpu_custom_call.1} parent=71 // pred_region
          %s2174 = smul.u32 4, %s32
          %s2176 = ssub.s32 128, 128
          %2177 = vsyncadd %s2167, %s2176
          %s2178 = sadd.s32 %s31, %s2174
          %s2179 = smul.addr %s2178, 32
          %s2180 = scalar_lea.hbm %s13, %s2179
          %s2181 = sshll.u32 %s2170, 4
          %s2182 = int_to_ptr.vmem [resolvable:$true] %s2181
          %2187 = dma.vmem_to_hbm [thread:$0]  %s2182, 128, %s2180, %s2167, 32, 32, 2
        $region76: #{tpu_custom_call.1} parent=71 // pred_fallthru
          _
      $region72: #{tpu_custom_call.1} parent=5 // pred_fallthru
        _
      %p2188 = scmp.le.s32.totalorder 2, %s22
      // Predicated region
      $region77: #{tpu_custom_call.1} parent=5 // pred_check
        %p2189 = pneg %p2188
      $region78: #{tpu_custom_call.1} parent=5 // pred_check_branch
        %2191 = sbr.rel (%p2189) target = $region80
      $region79: #{tpu_custom_call.1} parent=5 // pred_region
        %s2192 = ssub.s32 %s22, 2
        // Predicated region
        $region81: #{tpu_custom_call.1} parent=79 // pred_check
          %p2193 = pneg %p343
        $region82: #{tpu_custom_call.1} parent=79 // pred_check_branch
          %2195 = sbr.rel (%p2193) target = $region84
        $region83: #{tpu_custom_call.1} parent=79 // pred_region
          %s2196 = sand.u32 %s328, 1
          %s2197 = scalar_lea.sflag [#allocation6], %s2196
          %s2198 = sand.u32 %s328, 1
          %s2199 = smul.addr %s2198, 8
          %s2200 = scalar_lea.vmem [#allocation5], %s2199
          %2201 = dma.done %s2197, 128
        $region84: #{tpu_custom_call.1} parent=79 // pred_fallthru
          _
      $region80: #{tpu_custom_call.1} parent=5 // pred_fallthru
        _
    $region6: #{tpu_custom_call.1} parent=1 // loop_footer
      %s26 = sadd.s32 1, %s22
    $region7: #{tpu_custom_call.1} parent=1 // loop_footer_branch
      %21 = sbr.rel target = $region3
    $region8: #{tpu_custom_call.1} parent=1 // loop_exit
      _
    %2202 = vsyncpa [#allocation6], 1
    %s2203 = scalar_lea.sflag [#allocation6], 1
    %2204 = vsyncpa %s2203, 1

</llo_original>
